<compile_context>
chip_gen: v6e
topology: v6e:2x2x1
jax: 0.10.0
libtpu: 0.0.40
codegen_flags: <defaults>
</compile_context>

<pallas_src>
import functools

import jax
import jax.numpy as jnp
import numpy as np
from jax import lax
from jax.experimental import pallas as pl
from jax.experimental.pallas import tpu as pltpu

BOTTLENECK = 120          # self.bottleneck_dim
LANE = 128                # lane-padded bottleneck
PAD = LANE - BOTTLENECK
HID = 16                  # LSTM hidden size per direction
GATE3 = 6 * HID           # 96 packed gate columns: [i_f,i_r | g_f,g_r | o_f,o_r]
LRELU = 0.05              # LeakyReLU negative slope
LN_EPS = 1e-5             # nn.LayerNorm default eps
N_LAYERS = 6              # hidden-state layers per bank


def _round_up(x, m):
    return ((x + m - 1) // m) * m


def _choose_time_tile(T, D):
    """Large time tiles (HBM-bound kernel), bounded so double-buffered blocks
    stay well inside v7x's 64 MiB VMEM (v5e/v6e have more)."""
    row_bytes = (2 * N_LAYERS * D + BOTTLENECK) * 4      # f32 stream per time row
    cap = max(8, ((16 * 1024 * 1024) // row_bytes) // 8 * 8)   # <=16 MiB per buffer
    cap = min(cap, 1024)
    if T <= cap:
        return max(8, _round_up(T, 8))
    return cap


# --------------------------------------------------------------------------
# Fused kernel: adapters (x2 banks) + weighted layer combine + LSTM head.
# --------------------------------------------------------------------------
def fused_kernel(ssl_ref, asr_ref, mel_ref,
                 ssl_w_ref, asr_w_ref, ssl_gb_ref, asr_gb_ref,
                 w0a_ref, w0m_ref, w0s_ref, b0_ref, w1_ref, b1_ref, w2_ref,
                 o_ref, *, tT, T):
    t = pl.program_id(0)

    def adapters(h_ref, w_ref, gb_ref):
        # gb_ref rows: [bias | coef*gamma | coef*beta], lanes 120:128 are zero.
        acc = jnp.zeros((tT, LANE), jnp.float32)
        for l in range(N_LAYERS):                       # unrolled, static
            x = h_ref[l].astype(jnp.bfloat16)           # (tT, D)  cast in-register
            y = jnp.dot(x, w_ref[l], preferred_element_type=jnp.float32)
            y = y + gb_ref[l, 0:1, :]                   # (tT, 128); padded cols == 0
            y = jnp.where(y >= 0, y, LRELU * y)         # LeakyReLU(0.05)
            # LayerNorm over the 120 real lanes (two-pass, pad-corrected).
            mu = jnp.sum(y, axis=-1, keepdims=True) * (1.0 / BOTTLENECK)
            d = y - mu
            var = (jnp.sum(d * d, axis=-1, keepdims=True)
                   - PAD * mu * mu) * (1.0 / BOTTLENECK)
            yn = d * lax.rsqrt(var + LN_EPS)
            acc = acc + yn * gb_ref[l, 1:2, :] + gb_ref[l, 2:3, :]
        return acc                                       # (tT, 128), padded cols == 0

    ssl_x = adapters(ssl_ref, ssl_w_ref, ssl_gb_ref)
    asr_x = adapters(asr_ref, asr_w_ref, asr_gb_ref)

    # Single-step (zero-state) bi-LSTM layer 0: forget gate dropped (c0 = 0).
    gates0 = (jnp.dot(asr_x, w0a_ref[...])
              + jnp.dot(mel_ref[...], w0m_ref[...])
              + jnp.dot(ssl_x, w0s_ref[...])
              + b0_ref[...])                             # (tT, 96)
    i0 = jax.nn.sigmoid(gates0[:, 0:2 * HID])
    g0 = jnp.tanh(gates0[:, 2 * HID:4 * HID])
    o0 = jax.nn.sigmoid(gates0[:, 4 * HID:6 * HID])
    h0 = o0 * jnp.tanh(i0 * g0)                          # (tT, 32) = [fwd | rev]

    gates1 = jnp.dot(h0, w1_ref[...]) + b1_ref[...]      # (tT, 96)
    i1 = jax.nn.sigmoid(gates1[:, 0:2 * HID])
    g1 = jnp.tanh(gates1[:, 2 * HID:4 * HID])
    o1 = jax.nn.sigmoid(gates1[:, 4 * HID:6 * HID])
    h1 = o1 * jnp.tanh(i1 * g1)                          # (tT, 32)

    contrib = h1 * w2_ref[...]                           # Linear(32,1,bias=False)
    row = t * tT + lax.broadcasted_iota(jnp.int32, (tT, 1), 0)
    contrib = jnp.where(row < T, contrib, 0.0)           # mask padded time rows
    o_ref[...] = jnp.sum(contrib).reshape(1, 1, 1)       # per-tile partial sum


def fused_forward_call(ssl_hidden, asr_hidden, mel, ssl_w, asr_w, ssl_gb, asr_gb,
                       w0a, w0m, w0s, b0, w1, b1, w2, *, tT, T):
    _, T_pad, D = ssl_hidden.shape
    n_tiles = T_pad // tT

    hidden_spec = pl.BlockSpec((N_LAYERS, tT, D), lambda t: (0, t, 0))
    const3 = lambda t: (0, 0, 0)
    const2 = lambda t: (0, 0)

    block_bytes = 2 * N_LAYERS * tT * D * 4 + tT * BOTTLENECK * 4
    weight_bytes = (2 * N_LAYERS * D * LANE * 2          # adapter W banks (bf16)
                    + 2 * N_LAYERS * 3 * LANE * 4        # bias/gamma/beta banks
                    + (2 * LANE + BOTTLENECK + 2 * HID + 2) * GATE3 * 4
                    + 2 * HID * 4)
    vmem_limit = int(min(56 * 2 ** 20,
                         max(32 * 2 ** 20, 2 * (block_bytes + weight_bytes) + (8 << 20))))

    kern = functools.partial(fused_kernel, tT=tT, T=T)
    return pl.pallas_call(
        kern,
        out_shape=jax.ShapeDtypeStruct((n_tiles, 1, 1), jnp.float32),
        grid=(n_tiles,),
        in_specs=[
            hidden_spec,                                      # ssl hidden (6,tT,D) f32
            hidden_spec,                                      # asr hidden (6,tT,D) f32
            pl.BlockSpec((tT, BOTTLENECK), lambda t: (t, 0)),  # mel (tT,120) f32
            pl.BlockSpec((N_LAYERS, D, LANE), const3),         # ssl adapter W (bf16)
            pl.BlockSpec((N_LAYERS, D, LANE), const3),         # asr adapter W (bf16)
            pl.BlockSpec((N_LAYERS, 3, LANE), const3),         # ssl [b|c*g|c*beta]
            pl.BlockSpec((N_LAYERS, 3, LANE), const3),         # asr [b|c*g|c*beta]
            pl.BlockSpec((LANE, GATE3), const2),               # W0 asr rows (padded)
            pl.BlockSpec((BOTTLENECK, GATE3), const2),         # W0 mel rows
            pl.BlockSpec((LANE, GATE3), const2),               # W0 ssl rows (padded)
            pl.BlockSpec((1, GATE3), const2),                  # b0
            pl.BlockSpec((2 * HID, GATE3), const2),            # W1
            pl.BlockSpec((1, GATE3), const2),                  # b1
            pl.BlockSpec((1, 2 * HID), const2),                # w2
        ],
        out_specs=pl.BlockSpec((1, 1, 1), lambda t: (t, 0, 0)),
        compiler_params=pltpu.CompilerParams(
            dimension_semantics=("parallel",),
            vmem_limit_bytes=vmem_limit),
    )(ssl_hidden, asr_hidden, mel, ssl_w, asr_w, ssl_gb, asr_gb,
      w0a, w0m, w0s, b0, w1, b1, w2)


# --------------------------------------------------------------------------
# Wrapper glue (parameter repacking in plain JAX, hot path in Pallas).
# --------------------------------------------------------------------------
def _group_gates_igo(wf, wr):
    """(in,64)+(in,64) with per-direction gate order (i,f,g,o) ->
    (in,96) packed [i_f,i_r | g_f,g_r | o_f,o_r]; forget gate dropped (c0=0)."""
    parts = []
    for gidx in (0, 2, 3):
        parts.append(wf[:, gidx * HID:(gidx + 1) * HID])
        parts.append(wr[:, gidx * HID:(gidx + 1) * HID])
    return jnp.concatenate(parts, axis=-1)


def grbas_forward(ssl_hidden, asr_hidden, mel_features, p):
    mel = mel_features.reshape(-1, BOTTLENECK).astype(jnp.float32)   # (T, 120)
    T = mel.shape[0]
    D = ssl_hidden.shape[-1]
    tT = _choose_time_tile(T, D)
    T_pad = _round_up(T, tT)

    ssl_coef = jax.nn.softmax(p["ssl_weight"])
    asr_coef = jax.nn.softmax(p["asr_weight"])

    def prep_bank(W, b, g, bt, coef):
        c = coef[:, None, None]
        Wp = jnp.pad(W, ((0, 0), (0, 0), (0, PAD))).astype(jnp.bfloat16)
        gb = jnp.concatenate([b, g * c, bt * c], axis=1)              # (6,3,120)
        gb = jnp.pad(gb, ((0, 0), (0, 0), (0, PAD))).astype(jnp.float32)
        return Wp, gb

    def prep_hidden(h):
        h = h[:, :T, :].astype(jnp.float32)   # adapters/combine are row-wise: slice first
        if T_pad > T:
            h = jnp.pad(h, ((0, 0), (0, T_pad - T), (0, 0)))
        return h

    ssl_w, ssl_gb = prep_bank(p["ssl_W"], p["ssl_b"], p["ssl_g"], p["ssl_beta"], ssl_coef)
    asr_w, asr_gb = prep_bank(p["asr_W"], p["asr_b"], p["asr_g"], p["asr_beta"], asr_coef)

    mel_p = jnp.pad(mel, ((0, T_pad - T), (0, 0)))                    # (T_pad, 120)

    W0 = _group_gates_igo(p["w_ih_l0_f"], p["w_ih_l0_r"])             # (360, 96)
    b0 = _group_gates_igo(p["b_l0_f"], p["b_l0_r"])                   # (1, 96)
    W1 = _group_gates_igo(p["w_ih_l1_f"], p["w_ih_l1_r"])             # (32, 96)
    b1 = _group_gates_igo(p["b_l1_f"], p["b_l1_r"])                   # (1, 96)
    w0a = jnp.pad(W0[0:BOTTLENECK], ((0, PAD), (0, 0)))               # (128, 96)
    w0m = W0[BOTTLENECK:2 * BOTTLENECK]                               # (120, 96)
    w0s = jnp.pad(W0[2 * BOTTLENECK:3 * BOTTLENECK], ((0, PAD), (0, 0)))

    partials = fused_forward_call(prep_hidden(ssl_hidden), prep_hidden(asr_hidden),
                                  mel_p, ssl_w, asr_w, ssl_gb, asr_gb,
                                  w0a, w0m, w0s, b0, W1, b1, p["w2"],
                                  tT=tT, T=T)                          # (n_tiles,1,1)
    out = jnp.sum(partials) / jnp.float32(T)                           # mean over time
    return out.reshape(1)                                              # torch .squeeze(1)


# --------------------------------------------------------------------------
# Pure-JAX f32 reference (correctness check for the Pallas path).
# --------------------------------------------------------------------------
def grbas_reference(ssl_hidden, asr_hidden, mel_features, p):
    def adapter(x, w, b, g, bt):
        y = x @ w + b
        y = jnp.where(y >= 0, y, LRELU * y)
        mu = y.mean(-1, keepdims=True)
        var = ((y - mu) ** 2).mean(-1, keepdims=True)
        return ((y - mu) / jnp.sqrt(var + LN_EPS)) * g + bt

    def combine(hidden, W, b, g, bt, wts):
        c = jax.nn.softmax(wts)
        outs = [adapter(hidden[i], W[i], b[i][0], g[i][0], bt[i][0]) for i in range(6)]
        return sum(c[i] * outs[i] for i in range(6))

    def lstm_step(x, w, b):                       # zero initial state, 1 time step
        gates = x @ w + b
        i_g = jax.nn.sigmoid(gates[:, :HID])
        g_g = jnp.tanh(gates[:, 2 * HID:3 * HID])
        o_g = jax.nn.sigmoid(gates[:, 3 * HID:4 * HID])
        return o_g * jnp.tanh(i_g * g_g)

    mel = mel_features.reshape(1, -1, 120)[0]
    T = mel.shape[0]
    ssl_x = combine(ssl_hidden, p["ssl_W"], p["ssl_b"], p["ssl_g"], p["ssl_beta"], p["ssl_weight"])
    asr_x = combine(asr_hidden, p["asr_W"], p["asr_b"], p["asr_g"], p["asr_beta"], p["asr_weight"])
    f = jnp.concatenate([asr_x[:T], mel, ssl_x], axis=-1)
    h0 = jnp.concatenate([lstm_step(f, p["w_ih_l0_f"], p["b_l0_f"][0]),
                          lstm_step(f, p["w_ih_l0_r"], p["b_l0_r"][0])], axis=-1)
    h1 = jnp.concatenate([lstm_step(h0, p["w_ih_l1_f"], p["b_l1_f"][0]),
                          lstm_step(h0, p["w_ih_l1_r"], p["b_l1_r"][0])], axis=-1)
    y = jnp.sum(h1 * p["w2"], axis=-1, keepdims=True)
    return jnp.mean(y, axis=0)


# --------------------------------------------------------------------------
# Deterministic parameter / input construction.
# --------------------------------------------------------------------------
def make_params(key, ssl_out_dim):
    ks = jax.random.split(key, 24)
    D = ssl_out_dim

    def bank(k0, k1, k2, k3):
        W = jax.random.normal(k0, (6, D, BOTTLENECK), jnp.float32) * (1.0 / np.sqrt(D))
        b = jax.random.normal(k1, (6, 1, BOTTLENECK), jnp.float32) * 0.1
        g = 1.0 + 0.1 * jax.random.normal(k2, (6, 1, BOTTLENECK), jnp.float32)
        bt = 0.1 * jax.random.normal(k3, (6, 1, BOTTLENECK), jnp.float32)
        return W, b, g, bt

    ssl_W, ssl_b, ssl_g, ssl_beta = bank(*ks[0:4])
    asr_W, asr_b, asr_g, asr_beta = bank(*ks[4:8])

    def lstm_w(k, in_dim):   # columns in gate order (i, f, g, o) per direction
        return jax.random.normal(k, (in_dim, 4 * HID), jnp.float32) * (1.0 / np.sqrt(HID))

    def lstm_b(k):           # b_ih + b_hh combined
        return jax.random.normal(k, (1, 4 * HID), jnp.float32) * 0.1

    return dict(
        ssl_W=ssl_W, ssl_b=ssl_b, ssl_g=ssl_g, ssl_beta=ssl_beta,
        asr_W=asr_W, asr_b=asr_b, asr_g=asr_g, asr_beta=asr_beta,
        ssl_weight=jax.random.uniform(ks[8], (6,), jnp.float32),
        asr_weight=jax.random.uniform(ks[9], (6,), jnp.float32),
        w_ih_l0_f=lstm_w(ks[10], 360), b_l0_f=lstm_b(ks[11]),
        w_ih_l0_r=lstm_w(ks[12], 360), b_l0_r=lstm_b(ks[13]),
        w_ih_l1_f=lstm_w(ks[14], 2 * HID), b_l1_f=lstm_b(ks[15]),
        w_ih_l1_r=lstm_w(ks[16], 2 * HID), b_l1_r=lstm_b(ks[17]),
        w2=jax.random.normal(ks[18], (1, 2 * HID), jnp.float32) * (1.0 / np.sqrt(2 * HID)),
    )


if __name__ == "__main__":
    # TODO(synk): ssl_model / asr_model (HuggingFace backbones, decoder_input_ids)
    # have no Pallas equivalent; their last-6 hidden states are synthesized here.
    key = jax.random.PRNGKey(0)
    k_p, k_ssl, k_asr, k_mel = jax.random.split(key, 4)

    SSL_OUT_DIM = 32    # ssl_out_dim (small synthetic value)
    T_SSL = 16          # SSL / mel time steps
    T_ASR = 24          # ASR encoder time steps (>= T_SSL; sliced to T in forward)

    params = make_params(k_p, SSL_OUT_DIM)
    ssl_hidden = jax.random.normal(k_ssl, (6, T_SSL, SSL_OUT_DIM), jnp.float32)
    asr_hidden = jax.random.normal(k_asr, (6, T_ASR, SSL_OUT_DIM), jnp.float32)
    mel_features = jax.random.normal(k_mel, (1, T_SSL * 120), jnp.float32)

    out = jax.block_until_ready(grbas_forward(ssl_hidden, asr_hidden, mel_features, params))
    ref = jax.block_until_ready(grbas_reference(ssl_hidden, asr_hidden, mel_features, params))

    assert out.shape == (1,)
    # bf16 adapter-weight/activation matmul on the MXU loosens the match slightly.
    np.testing.assert_allclose(np.asarray(out), np.asarray(ref), rtol=2e-2, atol=2e-2)
    print("KERNEL_OK")
</pallas_src>

<mosaic_0001>
module attributes {stable_mosaic.version = 11 : i64} {
  func.func @fused_kernel(%arg0: i32, %arg1: memref<6x16x32xf32, #tpu.memory_space<vmem>>, %arg2: memref<6x16x32xf32, #tpu.memory_space<vmem>>, %arg3: memref<16x120xf32, #tpu.memory_space<vmem>>, %arg4: memref<6x32x128xbf16, #tpu.memory_space<vmem>>, %arg5: memref<6x32x128xbf16, #tpu.memory_space<vmem>>, %arg6: memref<6x3x128xf32, #tpu.memory_space<vmem>>, %arg7: memref<6x3x128xf32, #tpu.memory_space<vmem>>, %arg8: memref<128x96xf32, #tpu.memory_space<vmem>>, %arg9: memref<120x96xf32, #tpu.memory_space<vmem>>, %arg10: memref<128x96xf32, #tpu.memory_space<vmem>>, %arg11: memref<1x96xf32, #tpu.memory_space<vmem>>, %arg12: memref<32x96xf32, #tpu.memory_space<vmem>>, %arg13: memref<1x96xf32, #tpu.memory_space<vmem>>, %arg14: memref<1x32xf32, #tpu.memory_space<vmem>>, %arg15: memref<1x1x1xf32, #tpu.memory_space<vmem>>) attributes {dimension_semantics = [#tpu.dimension_semantics<parallel>], iteration_bounds = array<i64: 1>, scalar_prefetch = 0 : i64, scratch_operands = 0 : i64, tpu.core_type = #tpu.core_type<tc>, window_params = [{transform_indices = @transform_0, window_bounds = array<i64: 6, 16, 32>}, {transform_indices = @transform_1, window_bounds = array<i64: 6, 16, 32>}, {transform_indices = @transform_2, window_bounds = array<i64: 16, 120>}, {pipeline_mode = #tpu.pipeline_mode<synchronous>, transform_indices = @transform_3, window_bounds = array<i64: 6, 32, 128>}, {pipeline_mode = #tpu.pipeline_mode<synchronous>, transform_indices = @transform_4, window_bounds = array<i64: 6, 32, 128>}, {pipeline_mode = #tpu.pipeline_mode<synchronous>, transform_indices = @transform_5, window_bounds = array<i64: 6, 3, 128>}, {pipeline_mode = #tpu.pipeline_mode<synchronous>, transform_indices = @transform_6, window_bounds = array<i64: 6, 3, 128>}, {pipeline_mode = #tpu.pipeline_mode<synchronous>, transform_indices = @transform_7, window_bounds = array<i64: 128, 96>}, {pipeline_mode = #tpu.pipeline_mode<synchronous>, transform_indices = @transform_8, window_bounds = array<i64: 120, 96>}, {pipeline_mode = #tpu.pipeline_mode<synchronous>, transform_indices = @transform_9, window_bounds = array<i64: 128, 96>}, {pipeline_mode = #tpu.pipeline_mode<synchronous>, transform_indices = @transform_10, window_bounds = array<i64: 1, 96>}, {pipeline_mode = #tpu.pipeline_mode<synchronous>, transform_indices = @transform_11, window_bounds = array<i64: 32, 96>}, {pipeline_mode = #tpu.pipeline_mode<synchronous>, transform_indices = @transform_12, window_bounds = array<i64: 1, 96>}, {pipeline_mode = #tpu.pipeline_mode<synchronous>, transform_indices = @transform_13, window_bounds = array<i64: 1, 32>}, {transform_indices = @transform_14, window_bounds = array<i64: 1, 1, 1>}]} {
    %cst = arith.constant 0.000000e+00 : f32
    %0 = vector.broadcast %cst : f32 to vector<16x128xf32>
    %c0 = arith.constant 0 : index
    %c0_0 = arith.constant 0 : index
    %c0_1 = arith.constant 0 : index
    %1 = vector.load %arg1[%c0, %c0_0, %c0_1] : memref<6x16x32xf32, #tpu.memory_space<vmem>>, vector<1x16x32xf32>
    %2 = vector.shape_cast %1 : vector<1x16x32xf32> to vector<16x32xf32>
    %3 = arith.truncf %2 : vector<16x32xf32> to vector<16x32xbf16>
    %c0_2 = arith.constant 0 : index
    %c0_3 = arith.constant 0 : index
    %c0_4 = arith.constant 0 : index
    %4 = vector.load %arg4[%c0_2, %c0_3, %c0_4] : memref<6x32x128xbf16, #tpu.memory_space<vmem>>, vector<1x32x128xbf16>
    %5 = vector.shape_cast %4 : vector<1x32x128xbf16> to vector<32x128xbf16>
    %cst_5 = arith.constant dense<0.000000e+00> : vector<16x128xf32>
    %6 = tpu.matmul %3, %5, %cst_5 {dimension_numbers = #tpu.dot_dimension_numbers<[1], [0], [0], [1], [0, 0, 1, 1], [], []>} : vector<16x32xbf16>, vector<32x128xbf16>, vector<16x128xf32> -> vector<16x128xf32>
    %c0_6 = arith.constant 0 : index
    %c0_7 = arith.constant 0 : index
    %c0_8 = arith.constant 0 : index
    %7 = vector.load %arg6[%c0_6, %c0_7, %c0_8] : memref<6x3x128xf32, #tpu.memory_space<vmem>>, vector<1x1x128xf32>
    %8 = vector.shape_cast %7 : vector<1x1x128xf32> to vector<1x128xf32>
    %9 = vector.broadcast %8 : vector<1x128xf32> to vector<16x128xf32>
    %10 = arith.addf %6, %9 : vector<16x128xf32>
    %cst_9 = arith.constant 0.000000e+00 : f32
    %11 = vector.broadcast %cst_9 : f32 to vector<16x128xf32>
    %12 = arith.cmpf oge, %10, %11 : vector<16x128xf32>
    %cst_10 = arith.constant 5.000000e-02 : f32
    %13 = vector.broadcast %cst_10 : f32 to vector<16x128xf32>
    %14 = arith.mulf %13, %10 : vector<16x128xf32>
    %15 = arith.select %12, %10, %14 : vector<16x128xi1>, vector<16x128xf32>
    %cst_11 = arith.constant dense<0.000000e+00> : vector<16xf32>
    %16 = vector.multi_reduction <add>, %15, %cst_11 [1] : vector<16x128xf32> to vector<16xf32>
    %17 = vector.shape_cast %16 : vector<16xf32> to vector<16x1xf32>
    %cst_12 = arith.constant 0.00833333377 : f32
    %18 = vector.broadcast %cst_12 : f32 to vector<16x1xf32>
    %19 = arith.mulf %17, %18 : vector<16x1xf32>
    %20 = vector.broadcast %19 : vector<16x1xf32> to vector<16x128xf32>
    %21 = arith.subf %15, %20 : vector<16x128xf32>
    %22 = arith.mulf %21, %21 : vector<16x128xf32>
    %cst_13 = arith.constant dense<0.000000e+00> : vector<16xf32>
    %23 = vector.multi_reduction <add>, %22, %cst_13 [1] : vector<16x128xf32> to vector<16xf32>
    %24 = vector.shape_cast %23 : vector<16xf32> to vector<16x1xf32>
    %cst_14 = arith.constant 8.000000e+00 : f32
    %25 = vector.broadcast %cst_14 : f32 to vector<16x1xf32>
    %26 = arith.mulf %25, %19 : vector<16x1xf32>
    %27 = arith.mulf %26, %19 : vector<16x1xf32>
    %28 = arith.subf %24, %27 : vector<16x1xf32>
    %cst_15 = arith.constant 0.00833333377 : f32
    %29 = vector.broadcast %cst_15 : f32 to vector<16x1xf32>
    %30 = arith.mulf %28, %29 : vector<16x1xf32>
    %cst_16 = arith.constant 9.99999974E-6 : f32
    %31 = vector.broadcast %cst_16 : f32 to vector<16x1xf32>
    %32 = arith.addf %30, %31 : vector<16x1xf32>
    %33 = math.rsqrt %32 : vector<16x1xf32>
    %34 = vector.broadcast %33 : vector<16x1xf32> to vector<16x128xf32>
    %35 = arith.mulf %21, %34 : vector<16x128xf32>
    %c0_17 = arith.constant 0 : index
    %c1 = arith.constant 1 : index
    %c0_18 = arith.constant 0 : index
    %36 = vector.load %arg6[%c0_17, %c1, %c0_18] : memref<6x3x128xf32, #tpu.memory_space<vmem>>, vector<1x1x128xf32>
    %37 = vector.shape_cast %36 : vector<1x1x128xf32> to vector<1x128xf32>
    %38 = vector.broadcast %37 : vector<1x128xf32> to vector<16x128xf32>
    %39 = arith.mulf %35, %38 : vector<16x128xf32>
    %40 = arith.addf %0, %39 : vector<16x128xf32>
    %c0_19 = arith.constant 0 : index
    %c2 = arith.constant 2 : index
    %c0_20 = arith.constant 0 : index
    %41 = vector.load %arg6[%c0_19, %c2, %c0_20] : memref<6x3x128xf32, #tpu.memory_space<vmem>>, vector<1x1x128xf32>
    %42 = vector.shape_cast %41 : vector<1x1x128xf32> to vector<1x128xf32>
    %43 = vector.broadcast %42 : vector<1x128xf32> to vector<16x128xf32>
    %44 = arith.addf %40, %43 : vector<16x128xf32>
    %c1_21 = arith.constant 1 : index
    %c0_22 = arith.constant 0 : index
    %c0_23 = arith.constant 0 : index
    %45 = vector.load %arg1[%c1_21, %c0_22, %c0_23] : memref<6x16x32xf32, #tpu.memory_space<vmem>>, vector<1x16x32xf32>
    %46 = vector.shape_cast %45 : vector<1x16x32xf32> to vector<16x32xf32>
    %47 = arith.truncf %46 : vector<16x32xf32> to vector<16x32xbf16>
    %c1_24 = arith.constant 1 : index
    %c0_25 = arith.constant 0 : index
    %c0_26 = arith.constant 0 : index
    %48 = vector.load %arg4[%c1_24, %c0_25, %c0_26] : memref<6x32x128xbf16, #tpu.memory_space<vmem>>, vector<1x32x128xbf16>
    %49 = vector.shape_cast %48 : vector<1x32x128xbf16> to vector<32x128xbf16>
    %cst_27 = arith.constant dense<0.000000e+00> : vector<16x128xf32>
    %50 = tpu.matmul %47, %49, %cst_27 {dimension_numbers = #tpu.dot_dimension_numbers<[1], [0], [0], [1], [0, 0, 1, 1], [], []>} : vector<16x32xbf16>, vector<32x128xbf16>, vector<16x128xf32> -> vector<16x128xf32>
    %c1_28 = arith.constant 1 : index
    %c0_29 = arith.constant 0 : index
    %c0_30 = arith.constant 0 : index
    %51 = vector.load %arg6[%c1_28, %c0_29, %c0_30] : memref<6x3x128xf32, #tpu.memory_space<vmem>>, vector<1x1x128xf32>
    %52 = vector.shape_cast %51 : vector<1x1x128xf32> to vector<1x128xf32>
    %53 = vector.broadcast %52 : vector<1x128xf32> to vector<16x128xf32>
    %54 = arith.addf %50, %53 : vector<16x128xf32>
    %cst_31 = arith.constant 0.000000e+00 : f32
    %55 = vector.broadcast %cst_31 : f32 to vector<16x128xf32>
    %56 = arith.cmpf oge, %54, %55 : vector<16x128xf32>
    %cst_32 = arith.constant 5.000000e-02 : f32
    %57 = vector.broadcast %cst_32 : f32 to vector<16x128xf32>
    %58 = arith.mulf %57, %54 : vector<16x128xf32>
    %59 = arith.select %56, %54, %58 : vector<16x128xi1>, vector<16x128xf32>
    %cst_33 = arith.constant dense<0.000000e+00> : vector<16xf32>
    %60 = vector.multi_reduction <add>, %59, %cst_33 [1] : vector<16x128xf32> to vector<16xf32>
    %61 = vector.shape_cast %60 : vector<16xf32> to vector<16x1xf32>
    %cst_34 = arith.constant 0.00833333377 : f32
    %62 = vector.broadcast %cst_34 : f32 to vector<16x1xf32>
    %63 = arith.mulf %61, %62 : vector<16x1xf32>
    %64 = vector.broadcast %63 : vector<16x1xf32> to vector<16x128xf32>
    %65 = arith.subf %59, %64 : vector<16x128xf32>
    %66 = arith.mulf %65, %65 : vector<16x128xf32>
    %cst_35 = arith.constant dense<0.000000e+00> : vector<16xf32>
    %67 = vector.multi_reduction <add>, %66, %cst_35 [1] : vector<16x128xf32> to vector<16xf32>
    %68 = vector.shape_cast %67 : vector<16xf32> to vector<16x1xf32>
    %cst_36 = arith.constant 8.000000e+00 : f32
    %69 = vector.broadcast %cst_36 : f32 to vector<16x1xf32>
    %70 = arith.mulf %69, %63 : vector<16x1xf32>
    %71 = arith.mulf %70, %63 : vector<16x1xf32>
    %72 = arith.subf %68, %71 : vector<16x1xf32>
    %cst_37 = arith.constant 0.00833333377 : f32
    %73 = vector.broadcast %cst_37 : f32 to vector<16x1xf32>
    %74 = arith.mulf %72, %73 : vector<16x1xf32>
    %cst_38 = arith.constant 9.99999974E-6 : f32
    %75 = vector.broadcast %cst_38 : f32 to vector<16x1xf32>
    %76 = arith.addf %74, %75 : vector<16x1xf32>
    %77 = math.rsqrt %76 : vector<16x1xf32>
    %78 = vector.broadcast %77 : vector<16x1xf32> to vector<16x128xf32>
    %79 = arith.mulf %65, %78 : vector<16x128xf32>
    %c1_39 = arith.constant 1 : index
    %c1_40 = arith.constant 1 : index
    %c0_41 = arith.constant 0 : index
    %80 = vector.load %arg6[%c1_39, %c1_40, %c0_41] : memref<6x3x128xf32, #tpu.memory_space<vmem>>, vector<1x1x128xf32>
    %81 = vector.shape_cast %80 : vector<1x1x128xf32> to vector<1x128xf32>
    %82 = vector.broadcast %81 : vector<1x128xf32> to vector<16x128xf32>
    %83 = arith.mulf %79, %82 : vector<16x128xf32>
    %84 = arith.addf %44, %83 : vector<16x128xf32>
    %c1_42 = arith.constant 1 : index
    %c2_43 = arith.constant 2 : index
    %c0_44 = arith.constant 0 : index
    %85 = vector.load %arg6[%c1_42, %c2_43, %c0_44] : memref<6x3x128xf32, #tpu.memory_space<vmem>>, vector<1x1x128xf32>
    %86 = vector.shape_cast %85 : vector<1x1x128xf32> to vector<1x128xf32>
    %87 = vector.broadcast %86 : vector<1x128xf32> to vector<16x128xf32>
    %88 = arith.addf %84, %87 : vector<16x128xf32>
    %c2_45 = arith.constant 2 : index
    %c0_46 = arith.constant 0 : index
    %c0_47 = arith.constant 0 : index
    %89 = vector.load %arg1[%c2_45, %c0_46, %c0_47] : memref<6x16x32xf32, #tpu.memory_space<vmem>>, vector<1x16x32xf32>
    %90 = vector.shape_cast %89 : vector<1x16x32xf32> to vector<16x32xf32>
    %91 = arith.truncf %90 : vector<16x32xf32> to vector<16x32xbf16>
    %c2_48 = arith.constant 2 : index
    %c0_49 = arith.constant 0 : index
    %c0_50 = arith.constant 0 : index
    %92 = vector.load %arg4[%c2_48, %c0_49, %c0_50] : memref<6x32x128xbf16, #tpu.memory_space<vmem>>, vector<1x32x128xbf16>
    %93 = vector.shape_cast %92 : vector<1x32x128xbf16> to vector<32x128xbf16>
    %cst_51 = arith.constant dense<0.000000e+00> : vector<16x128xf32>
    %94 = tpu.matmul %91, %93, %cst_51 {dimension_numbers = #tpu.dot_dimension_numbers<[1], [0], [0], [1], [0, 0, 1, 1], [], []>} : vector<16x32xbf16>, vector<32x128xbf16>, vector<16x128xf32> -> vector<16x128xf32>
    %c2_52 = arith.constant 2 : index
    %c0_53 = arith.constant 0 : index
    %c0_54 = arith.constant 0 : index
    %95 = vector.load %arg6[%c2_52, %c0_53, %c0_54] : memref<6x3x128xf32, #tpu.memory_space<vmem>>, vector<1x1x128xf32>
    %96 = vector.shape_cast %95 : vector<1x1x128xf32> to vector<1x128xf32>
    %97 = vector.broadcast %96 : vector<1x128xf32> to vector<16x128xf32>
    %98 = arith.addf %94, %97 : vector<16x128xf32>
    %cst_55 = arith.constant 0.000000e+00 : f32
    %99 = vector.broadcast %cst_55 : f32 to vector<16x128xf32>
    %100 = arith.cmpf oge, %98, %99 : vector<16x128xf32>
    %cst_56 = arith.constant 5.000000e-02 : f32
    %101 = vector.broadcast %cst_56 : f32 to vector<16x128xf32>
    %102 = arith.mulf %101, %98 : vector<16x128xf32>
    %103 = arith.select %100, %98, %102 : vector<16x128xi1>, vector<16x128xf32>
    %cst_57 = arith.constant dense<0.000000e+00> : vector<16xf32>
    %104 = vector.multi_reduction <add>, %103, %cst_57 [1] : vector<16x128xf32> to vector<16xf32>
    %105 = vector.shape_cast %104 : vector<16xf32> to vector<16x1xf32>
    %cst_58 = arith.constant 0.00833333377 : f32
    %106 = vector.broadcast %cst_58 : f32 to vector<16x1xf32>
    %107 = arith.mulf %105, %106 : vector<16x1xf32>
    %108 = vector.broadcast %107 : vector<16x1xf32> to vector<16x128xf32>
    %109 = arith.subf %103, %108 : vector<16x128xf32>
    %110 = arith.mulf %109, %109 : vector<16x128xf32>
    %cst_59 = arith.constant dense<0.000000e+00> : vector<16xf32>
    %111 = vector.multi_reduction <add>, %110, %cst_59 [1] : vector<16x128xf32> to vector<16xf32>
    %112 = vector.shape_cast %111 : vector<16xf32> to vector<16x1xf32>
    %cst_60 = arith.constant 8.000000e+00 : f32
    %113 = vector.broadcast %cst_60 : f32 to vector<16x1xf32>
    %114 = arith.mulf %113, %107 : vector<16x1xf32>
    %115 = arith.mulf %114, %107 : vector<16x1xf32>
    %116 = arith.subf %112, %115 : vector<16x1xf32>
    %cst_61 = arith.constant 0.00833333377 : f32
    %117 = vector.broadcast %cst_61 : f32 to vector<16x1xf32>
    %118 = arith.mulf %116, %117 : vector<16x1xf32>
    %cst_62 = arith.constant 9.99999974E-6 : f32
    %119 = vector.broadcast %cst_62 : f32 to vector<16x1xf32>
    %120 = arith.addf %118, %119 : vector<16x1xf32>
    %121 = math.rsqrt %120 : vector<16x1xf32>
    %122 = vector.broadcast %121 : vector<16x1xf32> to vector<16x128xf32>
    %123 = arith.mulf %109, %122 : vector<16x128xf32>
    %c2_63 = arith.constant 2 : index
    %c1_64 = arith.constant 1 : index
    %c0_65 = arith.constant 0 : index
    %124 = vector.load %arg6[%c2_63, %c1_64, %c0_65] : memref<6x3x128xf32, #tpu.memory_space<vmem>>, vector<1x1x128xf32>
    %125 = vector.shape_cast %124 : vector<1x1x128xf32> to vector<1x128xf32>
    %126 = vector.broadcast %125 : vector<1x128xf32> to vector<16x128xf32>
    %127 = arith.mulf %123, %126 : vector<16x128xf32>
    %128 = arith.addf %88, %127 : vector<16x128xf32>
    %c2_66 = arith.constant 2 : index
    %c2_67 = arith.constant 2 : index
    %c0_68 = arith.constant 0 : index
    %129 = vector.load %arg6[%c2_66, %c2_67, %c0_68] : memref<6x3x128xf32, #tpu.memory_space<vmem>>, vector<1x1x128xf32>
    %130 = vector.shape_cast %129 : vector<1x1x128xf32> to vector<1x128xf32>
    %131 = vector.broadcast %130 : vector<1x128xf32> to vector<16x128xf32>
    %132 = arith.addf %128, %131 : vector<16x128xf32>
    %c3 = arith.constant 3 : index
    %c0_69 = arith.constant 0 : index
    %c0_70 = arith.constant 0 : index
    %133 = vector.load %arg1[%c3, %c0_69, %c0_70] : memref<6x16x32xf32, #tpu.memory_space<vmem>>, vector<1x16x32xf32>
    %134 = vector.shape_cast %133 : vector<1x16x32xf32> to vector<16x32xf32>
    %135 = arith.truncf %134 : vector<16x32xf32> to vector<16x32xbf16>
    %c3_71 = arith.constant 3 : index
    %c0_72 = arith.constant 0 : index
    %c0_73 = arith.constant 0 : index
    %136 = vector.load %arg4[%c3_71, %c0_72, %c0_73] : memref<6x32x128xbf16, #tpu.memory_space<vmem>>, vector<1x32x128xbf16>
    %137 = vector.shape_cast %136 : vector<1x32x128xbf16> to vector<32x128xbf16>
    %cst_74 = arith.constant dense<0.000000e+00> : vector<16x128xf32>
    %138 = tpu.matmul %135, %137, %cst_74 {dimension_numbers = #tpu.dot_dimension_numbers<[1], [0], [0], [1], [0, 0, 1, 1], [], []>} : vector<16x32xbf16>, vector<32x128xbf16>, vector<16x128xf32> -> vector<16x128xf32>
    %c3_75 = arith.constant 3 : index
    %c0_76 = arith.constant 0 : index
    %c0_77 = arith.constant 0 : index
    %139 = vector.load %arg6[%c3_75, %c0_76, %c0_77] : memref<6x3x128xf32, #tpu.memory_space<vmem>>, vector<1x1x128xf32>
    %140 = vector.shape_cast %139 : vector<1x1x128xf32> to vector<1x128xf32>
    %141 = vector.broadcast %140 : vector<1x128xf32> to vector<16x128xf32>
    %142 = arith.addf %138, %141 : vector<16x128xf32>
    %cst_78 = arith.constant 0.000000e+00 : f32
    %143 = vector.broadcast %cst_78 : f32 to vector<16x128xf32>
    %144 = arith.cmpf oge, %142, %143 : vector<16x128xf32>
    %cst_79 = arith.constant 5.000000e-02 : f32
    %145 = vector.broadcast %cst_79 : f32 to vector<16x128xf32>
    %146 = arith.mulf %145, %142 : vector<16x128xf32>
    %147 = arith.select %144, %142, %146 : vector<16x128xi1>, vector<16x128xf32>
    %cst_80 = arith.constant dense<0.000000e+00> : vector<16xf32>
    %148 = vector.multi_reduction <add>, %147, %cst_80 [1] : vector<16x128xf32> to vector<16xf32>
    %149 = vector.shape_cast %148 : vector<16xf32> to vector<16x1xf32>
    %cst_81 = arith.constant 0.00833333377 : f32
    %150 = vector.broadcast %cst_81 : f32 to vector<16x1xf32>
    %151 = arith.mulf %149, %150 : vector<16x1xf32>
    %152 = vector.broadcast %151 : vector<16x1xf32> to vector<16x128xf32>
    %153 = arith.subf %147, %152 : vector<16x128xf32>
    %154 = arith.mulf %153, %153 : vector<16x128xf32>
    %cst_82 = arith.constant dense<0.000000e+00> : vector<16xf32>
    %155 = vector.multi_reduction <add>, %154, %cst_82 [1] : vector<16x128xf32> to vector<16xf32>
    %156 = vector.shape_cast %155 : vector<16xf32> to vector<16x1xf32>
    %cst_83 = arith.constant 8.000000e+00 : f32
    %157 = vector.broadcast %cst_83 : f32 to vector<16x1xf32>
    %158 = arith.mulf %157, %151 : vector<16x1xf32>
    %159 = arith.mulf %158, %151 : vector<16x1xf32>
    %160 = arith.subf %156, %159 : vector<16x1xf32>
    %cst_84 = arith.constant 0.00833333377 : f32
    %161 = vector.broadcast %cst_84 : f32 to vector<16x1xf32>
    %162 = arith.mulf %160, %161 : vector<16x1xf32>
    %cst_85 = arith.constant 9.99999974E-6 : f32
    %163 = vector.broadcast %cst_85 : f32 to vector<16x1xf32>
    %164 = arith.addf %162, %163 : vector<16x1xf32>
    %165 = math.rsqrt %164 : vector<16x1xf32>
    %166 = vector.broadcast %165 : vector<16x1xf32> to vector<16x128xf32>
    %167 = arith.mulf %153, %166 : vector<16x128xf32>
    %c3_86 = arith.constant 3 : index
    %c1_87 = arith.constant 1 : index
    %c0_88 = arith.constant 0 : index
    %168 = vector.load %arg6[%c3_86, %c1_87, %c0_88] : memref<6x3x128xf32, #tpu.memory_space<vmem>>, vector<1x1x128xf32>
    %169 = vector.shape_cast %168 : vector<1x1x128xf32> to vector<1x128xf32>
    %170 = vector.broadcast %169 : vector<1x128xf32> to vector<16x128xf32>
    %171 = arith.mulf %167, %170 : vector<16x128xf32>
    %172 = arith.addf %132, %171 : vector<16x128xf32>
    %c3_89 = arith.constant 3 : index
    %c2_90 = arith.constant 2 : index
    %c0_91 = arith.constant 0 : index
    %173 = vector.load %arg6[%c3_89, %c2_90, %c0_91] : memref<6x3x128xf32, #tpu.memory_space<vmem>>, vector<1x1x128xf32>
    %174 = vector.shape_cast %173 : vector<1x1x128xf32> to vector<1x128xf32>
    %175 = vector.broadcast %174 : vector<1x128xf32> to vector<16x128xf32>
    %176 = arith.addf %172, %175 : vector<16x128xf32>
    %c4 = arith.constant 4 : index
    %c0_92 = arith.constant 0 : index
    %c0_93 = arith.constant 0 : index
    %177 = vector.load %arg1[%c4, %c0_92, %c0_93] : memref<6x16x32xf32, #tpu.memory_space<vmem>>, vector<1x16x32xf32>
    %178 = vector.shape_cast %177 : vector<1x16x32xf32> to vector<16x32xf32>
    %179 = arith.truncf %178 : vector<16x32xf32> to vector<16x32xbf16>
    %c4_94 = arith.constant 4 : index
    %c0_95 = arith.constant 0 : index
    %c0_96 = arith.constant 0 : index
    %180 = vector.load %arg4[%c4_94, %c0_95, %c0_96] : memref<6x32x128xbf16, #tpu.memory_space<vmem>>, vector<1x32x128xbf16>
    %181 = vector.shape_cast %180 : vector<1x32x128xbf16> to vector<32x128xbf16>
    %cst_97 = arith.constant dense<0.000000e+00> : vector<16x128xf32>
    %182 = tpu.matmul %179, %181, %cst_97 {dimension_numbers = #tpu.dot_dimension_numbers<[1], [0], [0], [1], [0, 0, 1, 1], [], []>} : vector<16x32xbf16>, vector<32x128xbf16>, vector<16x128xf32> -> vector<16x128xf32>
    %c4_98 = arith.constant 4 : index
    %c0_99 = arith.constant 0 : index
    %c0_100 = arith.constant 0 : index
    %183 = vector.load %arg6[%c4_98, %c0_99, %c0_100] : memref<6x3x128xf32, #tpu.memory_space<vmem>>, vector<1x1x128xf32>
    %184 = vector.shape_cast %183 : vector<1x1x128xf32> to vector<1x128xf32>
    %185 = vector.broadcast %184 : vector<1x128xf32> to vector<16x128xf32>
    %186 = arith.addf %182, %185 : vector<16x128xf32>
    %cst_101 = arith.constant 0.000000e+00 : f32
    %187 = vector.broadcast %cst_101 : f32 to vector<16x128xf32>
    %188 = arith.cmpf oge, %186, %187 : vector<16x128xf32>
    %cst_102 = arith.constant 5.000000e-02 : f32
    %189 = vector.broadcast %cst_102 : f32 to vector<16x128xf32>
    %190 = arith.mulf %189, %186 : vector<16x128xf32>
    %191 = arith.select %188, %186, %190 : vector<16x128xi1>, vector<16x128xf32>
    %cst_103 = arith.constant dense<0.000000e+00> : vector<16xf32>
    %192 = vector.multi_reduction <add>, %191, %cst_103 [1] : vector<16x128xf32> to vector<16xf32>
    %193 = vector.shape_cast %192 : vector<16xf32> to vector<16x1xf32>
    %cst_104 = arith.constant 0.00833333377 : f32
    %194 = vector.broadcast %cst_104 : f32 to vector<16x1xf32>
    %195 = arith.mulf %193, %194 : vector<16x1xf32>
    %196 = vector.broadcast %195 : vector<16x1xf32> to vector<16x128xf32>
    %197 = arith.subf %191, %196 : vector<16x128xf32>
    %198 = arith.mulf %197, %197 : vector<16x128xf32>
    %cst_105 = arith.constant dense<0.000000e+00> : vector<16xf32>
    %199 = vector.multi_reduction <add>, %198, %cst_105 [1] : vector<16x128xf32> to vector<16xf32>
    %200 = vector.shape_cast %199 : vector<16xf32> to vector<16x1xf32>
    %cst_106 = arith.constant 8.000000e+00 : f32
    %201 = vector.broadcast %cst_106 : f32 to vector<16x1xf32>
    %202 = arith.mulf %201, %195 : vector<16x1xf32>
    %203 = arith.mulf %202, %195 : vector<16x1xf32>
    %204 = arith.subf %200, %203 : vector<16x1xf32>
    %cst_107 = arith.constant 0.00833333377 : f32
    %205 = vector.broadcast %cst_107 : f32 to vector<16x1xf32>
    %206 = arith.mulf %204, %205 : vector<16x1xf32>
    %cst_108 = arith.constant 9.99999974E-6 : f32
    %207 = vector.broadcast %cst_108 : f32 to vector<16x1xf32>
    %208 = arith.addf %206, %207 : vector<16x1xf32>
    %209 = math.rsqrt %208 : vector<16x1xf32>
    %210 = vector.broadcast %209 : vector<16x1xf32> to vector<16x128xf32>
    %211 = arith.mulf %197, %210 : vector<16x128xf32>
    %c4_109 = arith.constant 4 : index
    %c1_110 = arith.constant 1 : index
    %c0_111 = arith.constant 0 : index
    %212 = vector.load %arg6[%c4_109, %c1_110, %c0_111] : memref<6x3x128xf32, #tpu.memory_space<vmem>>, vector<1x1x128xf32>
    %213 = vector.shape_cast %212 : vector<1x1x128xf32> to vector<1x128xf32>
    %214 = vector.broadcast %213 : vector<1x128xf32> to vector<16x128xf32>
    %215 = arith.mulf %211, %214 : vector<16x128xf32>
    %216 = arith.addf %176, %215 : vector<16x128xf32>
    %c4_112 = arith.constant 4 : index
    %c2_113 = arith.constant 2 : index
    %c0_114 = arith.constant 0 : index
    %217 = vector.load %arg6[%c4_112, %c2_113, %c0_114] : memref<6x3x128xf32, #tpu.memory_space<vmem>>, vector<1x1x128xf32>
    %218 = vector.shape_cast %217 : vector<1x1x128xf32> to vector<1x128xf32>
    %219 = vector.broadcast %218 : vector<1x128xf32> to vector<16x128xf32>
    %220 = arith.addf %216, %219 : vector<16x128xf32>
    %c5 = arith.constant 5 : index
    %c0_115 = arith.constant 0 : index
    %c0_116 = arith.constant 0 : index
    %221 = vector.load %arg1[%c5, %c0_115, %c0_116] : memref<6x16x32xf32, #tpu.memory_space<vmem>>, vector<1x16x32xf32>
    %222 = vector.shape_cast %221 : vector<1x16x32xf32> to vector<16x32xf32>
    %223 = arith.truncf %222 : vector<16x32xf32> to vector<16x32xbf16>
    %c5_117 = arith.constant 5 : index
    %c0_118 = arith.constant 0 : index
    %c0_119 = arith.constant 0 : index
    %224 = vector.load %arg4[%c5_117, %c0_118, %c0_119] : memref<6x32x128xbf16, #tpu.memory_space<vmem>>, vector<1x32x128xbf16>
    %225 = vector.shape_cast %224 : vector<1x32x128xbf16> to vector<32x128xbf16>
    %cst_120 = arith.constant dense<0.000000e+00> : vector<16x128xf32>
    %226 = tpu.matmul %223, %225, %cst_120 {dimension_numbers = #tpu.dot_dimension_numbers<[1], [0], [0], [1], [0, 0, 1, 1], [], []>} : vector<16x32xbf16>, vector<32x128xbf16>, vector<16x128xf32> -> vector<16x128xf32>
    %c5_121 = arith.constant 5 : index
    %c0_122 = arith.constant 0 : index
    %c0_123 = arith.constant 0 : index
    %227 = vector.load %arg6[%c5_121, %c0_122, %c0_123] : memref<6x3x128xf32, #tpu.memory_space<vmem>>, vector<1x1x128xf32>
    %228 = vector.shape_cast %227 : vector<1x1x128xf32> to vector<1x128xf32>
    %229 = vector.broadcast %228 : vector<1x128xf32> to vector<16x128xf32>
    %230 = arith.addf %226, %229 : vector<16x128xf32>
    %cst_124 = arith.constant 0.000000e+00 : f32
    %231 = vector.broadcast %cst_124 : f32 to vector<16x128xf32>
    %232 = arith.cmpf oge, %230, %231 : vector<16x128xf32>
    %cst_125 = arith.constant 5.000000e-02 : f32
    %233 = vector.broadcast %cst_125 : f32 to vector<16x128xf32>
    %234 = arith.mulf %233, %230 : vector<16x128xf32>
    %235 = arith.select %232, %230, %234 : vector<16x128xi1>, vector<16x128xf32>
    %cst_126 = arith.constant dense<0.000000e+00> : vector<16xf32>
    %236 = vector.multi_reduction <add>, %235, %cst_126 [1] : vector<16x128xf32> to vector<16xf32>
    %237 = vector.shape_cast %236 : vector<16xf32> to vector<16x1xf32>
    %cst_127 = arith.constant 0.00833333377 : f32
    %238 = vector.broadcast %cst_127 : f32 to vector<16x1xf32>
    %239 = arith.mulf %237, %238 : vector<16x1xf32>
    %240 = vector.broadcast %239 : vector<16x1xf32> to vector<16x128xf32>
    %241 = arith.subf %235, %240 : vector<16x128xf32>
    %242 = arith.mulf %241, %241 : vector<16x128xf32>
    %cst_128 = arith.constant dense<0.000000e+00> : vector<16xf32>
    %243 = vector.multi_reduction <add>, %242, %cst_128 [1] : vector<16x128xf32> to vector<16xf32>
    %244 = vector.shape_cast %243 : vector<16xf32> to vector<16x1xf32>
    %cst_129 = arith.constant 8.000000e+00 : f32
    %245 = vector.broadcast %cst_129 : f32 to vector<16x1xf32>
    %246 = arith.mulf %245, %239 : vector<16x1xf32>
    %247 = arith.mulf %246, %239 : vector<16x1xf32>
    %248 = arith.subf %244, %247 : vector<16x1xf32>
    %cst_130 = arith.constant 0.00833333377 : f32
    %249 = vector.broadcast %cst_130 : f32 to vector<16x1xf32>
    %250 = arith.mulf %248, %249 : vector<16x1xf32>
    %cst_131 = arith.constant 9.99999974E-6 : f32
    %251 = vector.broadcast %cst_131 : f32 to vector<16x1xf32>
    %252 = arith.addf %250, %251 : vector<16x1xf32>
    %253 = math.rsqrt %252 : vector<16x1xf32>
    %254 = vector.broadcast %253 : vector<16x1xf32> to vector<16x128xf32>
    %255 = arith.mulf %241, %254 : vector<16x128xf32>
    %c5_132 = arith.constant 5 : index
    %c1_133 = arith.constant 1 : index
    %c0_134 = arith.constant 0 : index
    %256 = vector.load %arg6[%c5_132, %c1_133, %c0_134] : memref<6x3x128xf32, #tpu.memory_space<vmem>>, vector<1x1x128xf32>
    %257 = vector.shape_cast %256 : vector<1x1x128xf32> to vector<1x128xf32>
    %258 = vector.broadcast %257 : vector<1x128xf32> to vector<16x128xf32>
    %259 = arith.mulf %255, %258 : vector<16x128xf32>
    %260 = arith.addf %220, %259 : vector<16x128xf32>
    %c5_135 = arith.constant 5 : index
    %c2_136 = arith.constant 2 : index
    %c0_137 = arith.constant 0 : index
    %261 = vector.load %arg6[%c5_135, %c2_136, %c0_137] : memref<6x3x128xf32, #tpu.memory_space<vmem>>, vector<1x1x128xf32>
    %262 = vector.shape_cast %261 : vector<1x1x128xf32> to vector<1x128xf32>
    %263 = vector.broadcast %262 : vector<1x128xf32> to vector<16x128xf32>
    %264 = arith.addf %260, %263 : vector<16x128xf32>
    %cst_138 = arith.constant 0.000000e+00 : f32
    %265 = vector.broadcast %cst_138 : f32 to vector<16x128xf32>
    %c0_139 = arith.constant 0 : index
    %c0_140 = arith.constant 0 : index
    %c0_141 = arith.constant 0 : index
    %266 = vector.load %arg2[%c0_139, %c0_140, %c0_141] : memref<6x16x32xf32, #tpu.memory_space<vmem>>, vector<1x16x32xf32>
    %267 = vector.shape_cast %266 : vector<1x16x32xf32> to vector<16x32xf32>
    %268 = arith.truncf %267 : vector<16x32xf32> to vector<16x32xbf16>
    %c0_142 = arith.constant 0 : index
    %c0_143 = arith.constant 0 : index
    %c0_144 = arith.constant 0 : index
    %269 = vector.load %arg5[%c0_142, %c0_143, %c0_144] : memref<6x32x128xbf16, #tpu.memory_space<vmem>>, vector<1x32x128xbf16>
    %270 = vector.shape_cast %269 : vector<1x32x128xbf16> to vector<32x128xbf16>
    %cst_145 = arith.constant dense<0.000000e+00> : vector<16x128xf32>
    %271 = tpu.matmul %268, %270, %cst_145 {dimension_numbers = #tpu.dot_dimension_numbers<[1], [0], [0], [1], [0, 0, 1, 1], [], []>} : vector<16x32xbf16>, vector<32x128xbf16>, vector<16x128xf32> -> vector<16x128xf32>
    %c0_146 = arith.constant 0 : index
    %c0_147 = arith.constant 0 : index
    %c0_148 = arith.constant 0 : index
    %272 = vector.load %arg7[%c0_146, %c0_147, %c0_148] : memref<6x3x128xf32, #tpu.memory_space<vmem>>, vector<1x1x128xf32>
    %273 = vector.shape_cast %272 : vector<1x1x128xf32> to vector<1x128xf32>
    %274 = vector.broadcast %273 : vector<1x128xf32> to vector<16x128xf32>
    %275 = arith.addf %271, %274 : vector<16x128xf32>
    %cst_149 = arith.constant 0.000000e+00 : f32
    %276 = vector.broadcast %cst_149 : f32 to vector<16x128xf32>
    %277 = arith.cmpf oge, %275, %276 : vector<16x128xf32>
    %cst_150 = arith.constant 5.000000e-02 : f32
    %278 = vector.broadcast %cst_150 : f32 to vector<16x128xf32>
    %279 = arith.mulf %278, %275 : vector<16x128xf32>
    %280 = arith.select %277, %275, %279 : vector<16x128xi1>, vector<16x128xf32>
    %cst_151 = arith.constant dense<0.000000e+00> : vector<16xf32>
    %281 = vector.multi_reduction <add>, %280, %cst_151 [1] : vector<16x128xf32> to vector<16xf32>
    %282 = vector.shape_cast %281 : vector<16xf32> to vector<16x1xf32>
    %cst_152 = arith.constant 0.00833333377 : f32
    %283 = vector.broadcast %cst_152 : f32 to vector<16x1xf32>
    %284 = arith.mulf %282, %283 : vector<16x1xf32>
    %285 = vector.broadcast %284 : vector<16x1xf32> to vector<16x128xf32>
    %286 = arith.subf %280, %285 : vector<16x128xf32>
    %287 = arith.mulf %286, %286 : vector<16x128xf32>
    %cst_153 = arith.constant dense<0.000000e+00> : vector<16xf32>
    %288 = vector.multi_reduction <add>, %287, %cst_153 [1] : vector<16x128xf32> to vector<16xf32>
    %289 = vector.shape_cast %288 : vector<16xf32> to vector<16x1xf32>
    %cst_154 = arith.constant 8.000000e+00 : f32
    %290 = vector.broadcast %cst_154 : f32 to vector<16x1xf32>
    %291 = arith.mulf %290, %284 : vector<16x1xf32>
    %292 = arith.mulf %291, %284 : vector<16x1xf32>
    %293 = arith.subf %289, %292 : vector<16x1xf32>
    %cst_155 = arith.constant 0.00833333377 : f32
    %294 = vector.broadcast %cst_155 : f32 to vector<16x1xf32>
    %295 = arith.mulf %293, %294 : vector<16x1xf32>
    %cst_156 = arith.constant 9.99999974E-6 : f32
    %296 = vector.broadcast %cst_156 : f32 to vector<16x1xf32>
    %297 = arith.addf %295, %296 : vector<16x1xf32>
    %298 = math.rsqrt %297 : vector<16x1xf32>
    %299 = vector.broadcast %298 : vector<16x1xf32> to vector<16x128xf32>
    %300 = arith.mulf %286, %299 : vector<16x128xf32>
    %c0_157 = arith.constant 0 : index
    %c1_158 = arith.constant 1 : index
    %c0_159 = arith.constant 0 : index
    %301 = vector.load %arg7[%c0_157, %c1_158, %c0_159] : memref<6x3x128xf32, #tpu.memory_space<vmem>>, vector<1x1x128xf32>
    %302 = vector.shape_cast %301 : vector<1x1x128xf32> to vector<1x128xf32>
    %303 = vector.broadcast %302 : vector<1x128xf32> to vector<16x128xf32>
    %304 = arith.mulf %300, %303 : vector<16x128xf32>
    %305 = arith.addf %265, %304 : vector<16x128xf32>
    %c0_160 = arith.constant 0 : index
    %c2_161 = arith.constant 2 : index
    %c0_162 = arith.constant 0 : index
    %306 = vector.load %arg7[%c0_160, %c2_161, %c0_162] : memref<6x3x128xf32, #tpu.memory_space<vmem>>, vector<1x1x128xf32>
    %307 = vector.shape_cast %306 : vector<1x1x128xf32> to vector<1x128xf32>
    %308 = vector.broadcast %307 : vector<1x128xf32> to vector<16x128xf32>
    %309 = arith.addf %305, %308 : vector<16x128xf32>
    %c1_163 = arith.constant 1 : index
    %c0_164 = arith.constant 0 : index
    %c0_165 = arith.constant 0 : index
    %310 = vector.load %arg2[%c1_163, %c0_164, %c0_165] : memref<6x16x32xf32, #tpu.memory_space<vmem>>, vector<1x16x32xf32>
    %311 = vector.shape_cast %310 : vector<1x16x32xf32> to vector<16x32xf32>
    %312 = arith.truncf %311 : vector<16x32xf32> to vector<16x32xbf16>
    %c1_166 = arith.constant 1 : index
    %c0_167 = arith.constant 0 : index
    %c0_168 = arith.constant 0 : index
    %313 = vector.load %arg5[%c1_166, %c0_167, %c0_168] : memref<6x32x128xbf16, #tpu.memory_space<vmem>>, vector<1x32x128xbf16>
    %314 = vector.shape_cast %313 : vector<1x32x128xbf16> to vector<32x128xbf16>
    %cst_169 = arith.constant dense<0.000000e+00> : vector<16x128xf32>
    %315 = tpu.matmul %312, %314, %cst_169 {dimension_numbers = #tpu.dot_dimension_numbers<[1], [0], [0], [1], [0, 0, 1, 1], [], []>} : vector<16x32xbf16>, vector<32x128xbf16>, vector<16x128xf32> -> vector<16x128xf32>
    %c1_170 = arith.constant 1 : index
    %c0_171 = arith.constant 0 : index
    %c0_172 = arith.constant 0 : index
    %316 = vector.load %arg7[%c1_170, %c0_171, %c0_172] : memref<6x3x128xf32, #tpu.memory_space<vmem>>, vector<1x1x128xf32>
    %317 = vector.shape_cast %316 : vector<1x1x128xf32> to vector<1x128xf32>
    %318 = vector.broadcast %317 : vector<1x128xf32> to vector<16x128xf32>
    %319 = arith.addf %315, %318 : vector<16x128xf32>
    %cst_173 = arith.constant 0.000000e+00 : f32
    %320 = vector.broadcast %cst_173 : f32 to vector<16x128xf32>
    %321 = arith.cmpf oge, %319, %320 : vector<16x128xf32>
    %cst_174 = arith.constant 5.000000e-02 : f32
    %322 = vector.broadcast %cst_174 : f32 to vector<16x128xf32>
    %323 = arith.mulf %322, %319 : vector<16x128xf32>
    %324 = arith.select %321, %319, %323 : vector<16x128xi1>, vector<16x128xf32>
    %cst_175 = arith.constant dense<0.000000e+00> : vector<16xf32>
    %325 = vector.multi_reduction <add>, %324, %cst_175 [1] : vector<16x128xf32> to vector<16xf32>
    %326 = vector.shape_cast %325 : vector<16xf32> to vector<16x1xf32>
    %cst_176 = arith.constant 0.00833333377 : f32
    %327 = vector.broadcast %cst_176 : f32 to vector<16x1xf32>
    %328 = arith.mulf %326, %327 : vector<16x1xf32>
    %329 = vector.broadcast %328 : vector<16x1xf32> to vector<16x128xf32>
    %330 = arith.subf %324, %329 : vector<16x128xf32>
    %331 = arith.mulf %330, %330 : vector<16x128xf32>
    %cst_177 = arith.constant dense<0.000000e+00> : vector<16xf32>
    %332 = vector.multi_reduction <add>, %331, %cst_177 [1] : vector<16x128xf32> to vector<16xf32>
    %333 = vector.shape_cast %332 : vector<16xf32> to vector<16x1xf32>
    %cst_178 = arith.constant 8.000000e+00 : f32
    %334 = vector.broadcast %cst_178 : f32 to vector<16x1xf32>
    %335 = arith.mulf %334, %328 : vector<16x1xf32>
    %336 = arith.mulf %335, %328 : vector<16x1xf32>
    %337 = arith.subf %333, %336 : vector<16x1xf32>
    %cst_179 = arith.constant 0.00833333377 : f32
    %338 = vector.broadcast %cst_179 : f32 to vector<16x1xf32>
    %339 = arith.mulf %337, %338 : vector<16x1xf32>
    %cst_180 = arith.constant 9.99999974E-6 : f32
    %340 = vector.broadcast %cst_180 : f32 to vector<16x1xf32>
    %341 = arith.addf %339, %340 : vector<16x1xf32>
    %342 = math.rsqrt %341 : vector<16x1xf32>
    %343 = vector.broadcast %342 : vector<16x1xf32> to vector<16x128xf32>
    %344 = arith.mulf %330, %343 : vector<16x128xf32>
    %c1_181 = arith.constant 1 : index
    %c1_182 = arith.constant 1 : index
    %c0_183 = arith.constant 0 : index
    %345 = vector.load %arg7[%c1_181, %c1_182, %c0_183] : memref<6x3x128xf32, #tpu.memory_space<vmem>>, vector<1x1x128xf32>
    %346 = vector.shape_cast %345 : vector<1x1x128xf32> to vector<1x128xf32>
    %347 = vector.broadcast %346 : vector<1x128xf32> to vector<16x128xf32>
    %348 = arith.mulf %344, %347 : vector<16x128xf32>
    %349 = arith.addf %309, %348 : vector<16x128xf32>
    %c1_184 = arith.constant 1 : index
    %c2_185 = arith.constant 2 : index
    %c0_186 = arith.constant 0 : index
    %350 = vector.load %arg7[%c1_184, %c2_185, %c0_186] : memref<6x3x128xf32, #tpu.memory_space<vmem>>, vector<1x1x128xf32>
    %351 = vector.shape_cast %350 : vector<1x1x128xf32> to vector<1x128xf32>
    %352 = vector.broadcast %351 : vector<1x128xf32> to vector<16x128xf32>
    %353 = arith.addf %349, %352 : vector<16x128xf32>
    %c2_187 = arith.constant 2 : index
    %c0_188 = arith.constant 0 : index
    %c0_189 = arith.constant 0 : index
    %354 = vector.load %arg2[%c2_187, %c0_188, %c0_189] : memref<6x16x32xf32, #tpu.memory_space<vmem>>, vector<1x16x32xf32>
    %355 = vector.shape_cast %354 : vector<1x16x32xf32> to vector<16x32xf32>
    %356 = arith.truncf %355 : vector<16x32xf32> to vector<16x32xbf16>
    %c2_190 = arith.constant 2 : index
    %c0_191 = arith.constant 0 : index
    %c0_192 = arith.constant 0 : index
    %357 = vector.load %arg5[%c2_190, %c0_191, %c0_192] : memref<6x32x128xbf16, #tpu.memory_space<vmem>>, vector<1x32x128xbf16>
    %358 = vector.shape_cast %357 : vector<1x32x128xbf16> to vector<32x128xbf16>
    %cst_193 = arith.constant dense<0.000000e+00> : vector<16x128xf32>
    %359 = tpu.matmul %356, %358, %cst_193 {dimension_numbers = #tpu.dot_dimension_numbers<[1], [0], [0], [1], [0, 0, 1, 1], [], []>} : vector<16x32xbf16>, vector<32x128xbf16>, vector<16x128xf32> -> vector<16x128xf32>
    %c2_194 = arith.constant 2 : index
    %c0_195 = arith.constant 0 : index
    %c0_196 = arith.constant 0 : index
    %360 = vector.load %arg7[%c2_194, %c0_195, %c0_196] : memref<6x3x128xf32, #tpu.memory_space<vmem>>, vector<1x1x128xf32>
    %361 = vector.shape_cast %360 : vector<1x1x128xf32> to vector<1x128xf32>
    %362 = vector.broadcast %361 : vector<1x128xf32> to vector<16x128xf32>
    %363 = arith.addf %359, %362 : vector<16x128xf32>
    %cst_197 = arith.constant 0.000000e+00 : f32
    %364 = vector.broadcast %cst_197 : f32 to vector<16x128xf32>
    %365 = arith.cmpf oge, %363, %364 : vector<16x128xf32>
    %cst_198 = arith.constant 5.000000e-02 : f32
    %366 = vector.broadcast %cst_198 : f32 to vector<16x128xf32>
    %367 = arith.mulf %366, %363 : vector<16x128xf32>
    %368 = arith.select %365, %363, %367 : vector<16x128xi1>, vector<16x128xf32>
    %cst_199 = arith.constant dense<0.000000e+00> : vector<16xf32>
    %369 = vector.multi_reduction <add>, %368, %cst_199 [1] : vector<16x128xf32> to vector<16xf32>
    %370 = vector.shape_cast %369 : vector<16xf32> to vector<16x1xf32>
    %cst_200 = arith.constant 0.00833333377 : f32
    %371 = vector.broadcast %cst_200 : f32 to vector<16x1xf32>
    %372 = arith.mulf %370, %371 : vector<16x1xf32>
    %373 = vector.broadcast %372 : vector<16x1xf32> to vector<16x128xf32>
    %374 = arith.subf %368, %373 : vector<16x128xf32>
    %375 = arith.mulf %374, %374 : vector<16x128xf32>
    %cst_201 = arith.constant dense<0.000000e+00> : vector<16xf32>
    %376 = vector.multi_reduction <add>, %375, %cst_201 [1] : vector<16x128xf32> to vector<16xf32>
    %377 = vector.shape_cast %376 : vector<16xf32> to vector<16x1xf32>
    %cst_202 = arith.constant 8.000000e+00 : f32
    %378 = vector.broadcast %cst_202 : f32 to vector<16x1xf32>
    %379 = arith.mulf %378, %372 : vector<16x1xf32>
    %380 = arith.mulf %379, %372 : vector<16x1xf32>
    %381 = arith.subf %377, %380 : vector<16x1xf32>
    %cst_203 = arith.constant 0.00833333377 : f32
    %382 = vector.broadcast %cst_203 : f32 to vector<16x1xf32>
    %383 = arith.mulf %381, %382 : vector<16x1xf32>
    %cst_204 = arith.constant 9.99999974E-6 : f32
    %384 = vector.broadcast %cst_204 : f32 to vector<16x1xf32>
    %385 = arith.addf %383, %384 : vector<16x1xf32>
    %386 = math.rsqrt %385 : vector<16x1xf32>
    %387 = vector.broadcast %386 : vector<16x1xf32> to vector<16x128xf32>
    %388 = arith.mulf %374, %387 : vector<16x128xf32>
    %c2_205 = arith.constant 2 : index
    %c1_206 = arith.constant 1 : index
    %c0_207 = arith.constant 0 : index
    %389 = vector.load %arg7[%c2_205, %c1_206, %c0_207] : memref<6x3x128xf32, #tpu.memory_space<vmem>>, vector<1x1x128xf32>
    %390 = vector.shape_cast %389 : vector<1x1x128xf32> to vector<1x128xf32>
    %391 = vector.broadcast %390 : vector<1x128xf32> to vector<16x128xf32>
    %392 = arith.mulf %388, %391 : vector<16x128xf32>
    %393 = arith.addf %353, %392 : vector<16x128xf32>
    %c2_208 = arith.constant 2 : index
    %c2_209 = arith.constant 2 : index
    %c0_210 = arith.constant 0 : index
    %394 = vector.load %arg7[%c2_208, %c2_209, %c0_210] : memref<6x3x128xf32, #tpu.memory_space<vmem>>, vector<1x1x128xf32>
    %395 = vector.shape_cast %394 : vector<1x1x128xf32> to vector<1x128xf32>
    %396 = vector.broadcast %395 : vector<1x128xf32> to vector<16x128xf32>
    %397 = arith.addf %393, %396 : vector<16x128xf32>
    %c3_211 = arith.constant 3 : index
    %c0_212 = arith.constant 0 : index
    %c0_213 = arith.constant 0 : index
    %398 = vector.load %arg2[%c3_211, %c0_212, %c0_213] : memref<6x16x32xf32, #tpu.memory_space<vmem>>, vector<1x16x32xf32>
    %399 = vector.shape_cast %398 : vector<1x16x32xf32> to vector<16x32xf32>
    %400 = arith.truncf %399 : vector<16x32xf32> to vector<16x32xbf16>
    %c3_214 = arith.constant 3 : index
    %c0_215 = arith.constant 0 : index
    %c0_216 = arith.constant 0 : index
    %401 = vector.load %arg5[%c3_214, %c0_215, %c0_216] : memref<6x32x128xbf16, #tpu.memory_space<vmem>>, vector<1x32x128xbf16>
    %402 = vector.shape_cast %401 : vector<1x32x128xbf16> to vector<32x128xbf16>
    %cst_217 = arith.constant dense<0.000000e+00> : vector<16x128xf32>
    %403 = tpu.matmul %400, %402, %cst_217 {dimension_numbers = #tpu.dot_dimension_numbers<[1], [0], [0], [1], [0, 0, 1, 1], [], []>} : vector<16x32xbf16>, vector<32x128xbf16>, vector<16x128xf32> -> vector<16x128xf32>
    %c3_218 = arith.constant 3 : index
    %c0_219 = arith.constant 0 : index
    %c0_220 = arith.constant 0 : index
    %404 = vector.load %arg7[%c3_218, %c0_219, %c0_220] : memref<6x3x128xf32, #tpu.memory_space<vmem>>, vector<1x1x128xf32>
    %405 = vector.shape_cast %404 : vector<1x1x128xf32> to vector<1x128xf32>
    %406 = vector.broadcast %405 : vector<1x128xf32> to vector<16x128xf32>
    %407 = arith.addf %403, %406 : vector<16x128xf32>
    %cst_221 = arith.constant 0.000000e+00 : f32
    %408 = vector.broadcast %cst_221 : f32 to vector<16x128xf32>
    %409 = arith.cmpf oge, %407, %408 : vector<16x128xf32>
    %cst_222 = arith.constant 5.000000e-02 : f32
    %410 = vector.broadcast %cst_222 : f32 to vector<16x128xf32>
    %411 = arith.mulf %410, %407 : vector<16x128xf32>
    %412 = arith.select %409, %407, %411 : vector<16x128xi1>, vector<16x128xf32>
    %cst_223 = arith.constant dense<0.000000e+00> : vector<16xf32>
    %413 = vector.multi_reduction <add>, %412, %cst_223 [1] : vector<16x128xf32> to vector<16xf32>
    %414 = vector.shape_cast %413 : vector<16xf32> to vector<16x1xf32>
    %cst_224 = arith.constant 0.00833333377 : f32
    %415 = vector.broadcast %cst_224 : f32 to vector<16x1xf32>
    %416 = arith.mulf %414, %415 : vector<16x1xf32>
    %417 = vector.broadcast %416 : vector<16x1xf32> to vector<16x128xf32>
    %418 = arith.subf %412, %417 : vector<16x128xf32>
    %419 = arith.mulf %418, %418 : vector<16x128xf32>
    %cst_225 = arith.constant dense<0.000000e+00> : vector<16xf32>
    %420 = vector.multi_reduction <add>, %419, %cst_225 [1] : vector<16x128xf32> to vector<16xf32>
    %421 = vector.shape_cast %420 : vector<16xf32> to vector<16x1xf32>
    %cst_226 = arith.constant 8.000000e+00 : f32
    %422 = vector.broadcast %cst_226 : f32 to vector<16x1xf32>
    %423 = arith.mulf %422, %416 : vector<16x1xf32>
    %424 = arith.mulf %423, %416 : vector<16x1xf32>
    %425 = arith.subf %421, %424 : vector<16x1xf32>
    %cst_227 = arith.constant 0.00833333377 : f32
    %426 = vector.broadcast %cst_227 : f32 to vector<16x1xf32>
    %427 = arith.mulf %425, %426 : vector<16x1xf32>
    %cst_228 = arith.constant 9.99999974E-6 : f32
    %428 = vector.broadcast %cst_228 : f32 to vector<16x1xf32>
    %429 = arith.addf %427, %428 : vector<16x1xf32>
    %430 = math.rsqrt %429 : vector<16x1xf32>
    %431 = vector.broadcast %430 : vector<16x1xf32> to vector<16x128xf32>
    %432 = arith.mulf %418, %431 : vector<16x128xf32>
    %c3_229 = arith.constant 3 : index
    %c1_230 = arith.constant 1 : index
    %c0_231 = arith.constant 0 : index
    %433 = vector.load %arg7[%c3_229, %c1_230, %c0_231] : memref<6x3x128xf32, #tpu.memory_space<vmem>>, vector<1x1x128xf32>
    %434 = vector.shape_cast %433 : vector<1x1x128xf32> to vector<1x128xf32>
    %435 = vector.broadcast %434 : vector<1x128xf32> to vector<16x128xf32>
    %436 = arith.mulf %432, %435 : vector<16x128xf32>
    %437 = arith.addf %397, %436 : vector<16x128xf32>
    %c3_232 = arith.constant 3 : index
    %c2_233 = arith.constant 2 : index
    %c0_234 = arith.constant 0 : index
    %438 = vector.load %arg7[%c3_232, %c2_233, %c0_234] : memref<6x3x128xf32, #tpu.memory_space<vmem>>, vector<1x1x128xf32>
    %439 = vector.shape_cast %438 : vector<1x1x128xf32> to vector<1x128xf32>
    %440 = vector.broadcast %439 : vector<1x128xf32> to vector<16x128xf32>
    %441 = arith.addf %437, %440 : vector<16x128xf32>
    %c4_235 = arith.constant 4 : index
    %c0_236 = arith.constant 0 : index
    %c0_237 = arith.constant 0 : index
    %442 = vector.load %arg2[%c4_235, %c0_236, %c0_237] : memref<6x16x32xf32, #tpu.memory_space<vmem>>, vector<1x16x32xf32>
    %443 = vector.shape_cast %442 : vector<1x16x32xf32> to vector<16x32xf32>
    %444 = arith.truncf %443 : vector<16x32xf32> to vector<16x32xbf16>
    %c4_238 = arith.constant 4 : index
    %c0_239 = arith.constant 0 : index
    %c0_240 = arith.constant 0 : index
    %445 = vector.load %arg5[%c4_238, %c0_239, %c0_240] : memref<6x32x128xbf16, #tpu.memory_space<vmem>>, vector<1x32x128xbf16>
    %446 = vector.shape_cast %445 : vector<1x32x128xbf16> to vector<32x128xbf16>
    %cst_241 = arith.constant dense<0.000000e+00> : vector<16x128xf32>
    %447 = tpu.matmul %444, %446, %cst_241 {dimension_numbers = #tpu.dot_dimension_numbers<[1], [0], [0], [1], [0, 0, 1, 1], [], []>} : vector<16x32xbf16>, vector<32x128xbf16>, vector<16x128xf32> -> vector<16x128xf32>
    %c4_242 = arith.constant 4 : index
    %c0_243 = arith.constant 0 : index
    %c0_244 = arith.constant 0 : index
    %448 = vector.load %arg7[%c4_242, %c0_243, %c0_244] : memref<6x3x128xf32, #tpu.memory_space<vmem>>, vector<1x1x128xf32>
    %449 = vector.shape_cast %448 : vector<1x1x128xf32> to vector<1x128xf32>
    %450 = vector.broadcast %449 : vector<1x128xf32> to vector<16x128xf32>
    %451 = arith.addf %447, %450 : vector<16x128xf32>
    %cst_245 = arith.constant 0.000000e+00 : f32
    %452 = vector.broadcast %cst_245 : f32 to vector<16x128xf32>
    %453 = arith.cmpf oge, %451, %452 : vector<16x128xf32>
    %cst_246 = arith.constant 5.000000e-02 : f32
    %454 = vector.broadcast %cst_246 : f32 to vector<16x128xf32>
    %455 = arith.mulf %454, %451 : vector<16x128xf32>
    %456 = arith.select %453, %451, %455 : vector<16x128xi1>, vector<16x128xf32>
    %cst_247 = arith.constant dense<0.000000e+00> : vector<16xf32>
    %457 = vector.multi_reduction <add>, %456, %cst_247 [1] : vector<16x128xf32> to vector<16xf32>
    %458 = vector.shape_cast %457 : vector<16xf32> to vector<16x1xf32>
    %cst_248 = arith.constant 0.00833333377 : f32
    %459 = vector.broadcast %cst_248 : f32 to vector<16x1xf32>
    %460 = arith.mulf %458, %459 : vector<16x1xf32>
    %461 = vector.broadcast %460 : vector<16x1xf32> to vector<16x128xf32>
    %462 = arith.subf %456, %461 : vector<16x128xf32>
    %463 = arith.mulf %462, %462 : vector<16x128xf32>
    %cst_249 = arith.constant dense<0.000000e+00> : vector<16xf32>
    %464 = vector.multi_reduction <add>, %463, %cst_249 [1] : vector<16x128xf32> to vector<16xf32>
    %465 = vector.shape_cast %464 : vector<16xf32> to vector<16x1xf32>
    %cst_250 = arith.constant 8.000000e+00 : f32
    %466 = vector.broadcast %cst_250 : f32 to vector<16x1xf32>
    %467 = arith.mulf %466, %460 : vector<16x1xf32>
    %468 = arith.mulf %467, %460 : vector<16x1xf32>
    %469 = arith.subf %465, %468 : vector<16x1xf32>
    %cst_251 = arith.constant 0.00833333377 : f32
    %470 = vector.broadcast %cst_251 : f32 to vector<16x1xf32>
    %471 = arith.mulf %469, %470 : vector<16x1xf32>
    %cst_252 = arith.constant 9.99999974E-6 : f32
    %472 = vector.broadcast %cst_252 : f32 to vector<16x1xf32>
    %473 = arith.addf %471, %472 : vector<16x1xf32>
    %474 = math.rsqrt %473 : vector<16x1xf32>
    %475 = vector.broadcast %474 : vector<16x1xf32> to vector<16x128xf32>
    %476 = arith.mulf %462, %475 : vector<16x128xf32>
    %c4_253 = arith.constant 4 : index
    %c1_254 = arith.constant 1 : index
    %c0_255 = arith.constant 0 : index
    %477 = vector.load %arg7[%c4_253, %c1_254, %c0_255] : memref<6x3x128xf32, #tpu.memory_space<vmem>>, vector<1x1x128xf32>
    %478 = vector.shape_cast %477 : vector<1x1x128xf32> to vector<1x128xf32>
    %479 = vector.broadcast %478 : vector<1x128xf32> to vector<16x128xf32>
    %480 = arith.mulf %476, %479 : vector<16x128xf32>
    %481 = arith.addf %441, %480 : vector<16x128xf32>
    %c4_256 = arith.constant 4 : index
    %c2_257 = arith.constant 2 : index
    %c0_258 = arith.constant 0 : index
    %482 = vector.load %arg7[%c4_256, %c2_257, %c0_258] : memref<6x3x128xf32, #tpu.memory_space<vmem>>, vector<1x1x128xf32>
    %483 = vector.shape_cast %482 : vector<1x1x128xf32> to vector<1x128xf32>
    %484 = vector.broadcast %483 : vector<1x128xf32> to vector<16x128xf32>
    %485 = arith.addf %481, %484 : vector<16x128xf32>
    %c5_259 = arith.constant 5 : index
    %c0_260 = arith.constant 0 : index
    %c0_261 = arith.constant 0 : index
    %486 = vector.load %arg2[%c5_259, %c0_260, %c0_261] : memref<6x16x32xf32, #tpu.memory_space<vmem>>, vector<1x16x32xf32>
    %487 = vector.shape_cast %486 : vector<1x16x32xf32> to vector<16x32xf32>
    %488 = arith.truncf %487 : vector<16x32xf32> to vector<16x32xbf16>
    %c5_262 = arith.constant 5 : index
    %c0_263 = arith.constant 0 : index
    %c0_264 = arith.constant 0 : index
    %489 = vector.load %arg5[%c5_262, %c0_263, %c0_264] : memref<6x32x128xbf16, #tpu.memory_space<vmem>>, vector<1x32x128xbf16>
    %490 = vector.shape_cast %489 : vector<1x32x128xbf16> to vector<32x128xbf16>
    %cst_265 = arith.constant dense<0.000000e+00> : vector<16x128xf32>
    %491 = tpu.matmul %488, %490, %cst_265 {dimension_numbers = #tpu.dot_dimension_numbers<[1], [0], [0], [1], [0, 0, 1, 1], [], []>} : vector<16x32xbf16>, vector<32x128xbf16>, vector<16x128xf32> -> vector<16x128xf32>
    %c5_266 = arith.constant 5 : index
    %c0_267 = arith.constant 0 : index
    %c0_268 = arith.constant 0 : index
    %492 = vector.load %arg7[%c5_266, %c0_267, %c0_268] : memref<6x3x128xf32, #tpu.memory_space<vmem>>, vector<1x1x128xf32>
    %493 = vector.shape_cast %492 : vector<1x1x128xf32> to vector<1x128xf32>
    %494 = vector.broadcast %493 : vector<1x128xf32> to vector<16x128xf32>
    %495 = arith.addf %491, %494 : vector<16x128xf32>
    %cst_269 = arith.constant 0.000000e+00 : f32
    %496 = vector.broadcast %cst_269 : f32 to vector<16x128xf32>
    %497 = arith.cmpf oge, %495, %496 : vector<16x128xf32>
    %cst_270 = arith.constant 5.000000e-02 : f32
    %498 = vector.broadcast %cst_270 : f32 to vector<16x128xf32>
    %499 = arith.mulf %498, %495 : vector<16x128xf32>
    %500 = arith.select %497, %495, %499 : vector<16x128xi1>, vector<16x128xf32>
    %cst_271 = arith.constant dense<0.000000e+00> : vector<16xf32>
    %501 = vector.multi_reduction <add>, %500, %cst_271 [1] : vector<16x128xf32> to vector<16xf32>
    %502 = vector.shape_cast %501 : vector<16xf32> to vector<16x1xf32>
    %cst_272 = arith.constant 0.00833333377 : f32
    %503 = vector.broadcast %cst_272 : f32 to vector<16x1xf32>
    %504 = arith.mulf %502, %503 : vector<16x1xf32>
    %505 = vector.broadcast %504 : vector<16x1xf32> to vector<16x128xf32>
    %506 = arith.subf %500, %505 : vector<16x128xf32>
    %507 = arith.mulf %506, %506 : vector<16x128xf32>
    %cst_273 = arith.constant dense<0.000000e+00> : vector<16xf32>
    %508 = vector.multi_reduction <add>, %507, %cst_273 [1] : vector<16x128xf32> to vector<16xf32>
    %509 = vector.shape_cast %508 : vector<16xf32> to vector<16x1xf32>
    %cst_274 = arith.constant 8.000000e+00 : f32
    %510 = vector.broadcast %cst_274 : f32 to vector<16x1xf32>
    %511 = arith.mulf %510, %504 : vector<16x1xf32>
    %512 = arith.mulf %511, %504 : vector<16x1xf32>
    %513 = arith.subf %509, %512 : vector<16x1xf32>
    %cst_275 = arith.constant 0.00833333377 : f32
    %514 = vector.broadcast %cst_275 : f32 to vector<16x1xf32>
    %515 = arith.mulf %513, %514 : vector<16x1xf32>
    %cst_276 = arith.constant 9.99999974E-6 : f32
    %516 = vector.broadcast %cst_276 : f32 to vector<16x1xf32>
    %517 = arith.addf %515, %516 : vector<16x1xf32>
    %518 = math.rsqrt %517 : vector<16x1xf32>
    %519 = vector.broadcast %518 : vector<16x1xf32> to vector<16x128xf32>
    %520 = arith.mulf %506, %519 : vector<16x128xf32>
    %c5_277 = arith.constant 5 : index
    %c1_278 = arith.constant 1 : index
    %c0_279 = arith.constant 0 : index
    %521 = vector.load %arg7[%c5_277, %c1_278, %c0_279] : memref<6x3x128xf32, #tpu.memory_space<vmem>>, vector<1x1x128xf32>
    %522 = vector.shape_cast %521 : vector<1x1x128xf32> to vector<1x128xf32>
    %523 = vector.broadcast %522 : vector<1x128xf32> to vector<16x128xf32>
    %524 = arith.mulf %520, %523 : vector<16x128xf32>
    %525 = arith.addf %485, %524 : vector<16x128xf32>
    %c5_280 = arith.constant 5 : index
    %c2_281 = arith.constant 2 : index
    %c0_282 = arith.constant 0 : index
    %526 = vector.load %arg7[%c5_280, %c2_281, %c0_282] : memref<6x3x128xf32, #tpu.memory_space<vmem>>, vector<1x1x128xf32>
    %527 = vector.shape_cast %526 : vector<1x1x128xf32> to vector<1x128xf32>
    %528 = vector.broadcast %527 : vector<1x128xf32> to vector<16x128xf32>
    %529 = arith.addf %525, %528 : vector<16x128xf32>
    %c0_283 = arith.constant 0 : index
    %c0_284 = arith.constant 0 : index
    %530 = vector.load %arg8[%c0_283, %c0_284] : memref<128x96xf32, #tpu.memory_space<vmem>>, vector<128x96xf32>
    %cst_285 = arith.constant dense<0.000000e+00> : vector<16x96xf32>
    %531 = tpu.matmul %529, %530, %cst_285 {dimension_numbers = #tpu.dot_dimension_numbers<[1], [0], [0], [1], [0, 0, 1, 1], [], []>} : vector<16x128xf32>, vector<128x96xf32>, vector<16x96xf32> -> vector<16x96xf32>
    %c0_286 = arith.constant 0 : index
    %c0_287 = arith.constant 0 : index
    %532 = vector.load %arg3[%c0_286, %c0_287] : memref<16x120xf32, #tpu.memory_space<vmem>>, vector<16x120xf32>
    %c0_288 = arith.constant 0 : index
    %c0_289 = arith.constant 0 : index
    %533 = vector.load %arg9[%c0_288, %c0_289] : memref<120x96xf32, #tpu.memory_space<vmem>>, vector<120x96xf32>
    %cst_290 = arith.constant dense<0.000000e+00> : vector<16x96xf32>
    %534 = tpu.matmul %532, %533, %cst_290 {dimension_numbers = #tpu.dot_dimension_numbers<[1], [0], [0], [1], [0, 0, 1, 1], [], []>} : vector<16x120xf32>, vector<120x96xf32>, vector<16x96xf32> -> vector<16x96xf32>
    %535 = arith.addf %531, %534 : vector<16x96xf32>
    %c0_291 = arith.constant 0 : index
    %c0_292 = arith.constant 0 : index
    %536 = vector.load %arg10[%c0_291, %c0_292] : memref<128x96xf32, #tpu.memory_space<vmem>>, vector<128x96xf32>
    %cst_293 = arith.constant dense<0.000000e+00> : vector<16x96xf32>
    %537 = tpu.matmul %264, %536, %cst_293 {dimension_numbers = #tpu.dot_dimension_numbers<[1], [0], [0], [1], [0, 0, 1, 1], [], []>} : vector<16x128xf32>, vector<128x96xf32>, vector<16x96xf32> -> vector<16x96xf32>
    %538 = arith.addf %535, %537 : vector<16x96xf32>
    %c0_294 = arith.constant 0 : index
    %c0_295 = arith.constant 0 : index
    %539 = vector.load %arg11[%c0_294, %c0_295] : memref<1x96xf32, #tpu.memory_space<vmem>>, vector<1x96xf32>
    %540 = vector.broadcast %539 : vector<1x96xf32> to vector<16x96xf32>
    %541 = arith.addf %538, %540 : vector<16x96xf32>
    %542 = vector.extract_strided_slice %541 {offsets = [0, 0], sizes = [16, 32], strides = [1, 1]} : vector<16x96xf32> to vector<16x32xf32>
    %543 = arith.negf %542 : vector<16x32xf32>
    %544 = math.exp %543 : vector<16x32xf32>
    %cst_296 = arith.constant 1.000000e+00 : f32
    %545 = vector.broadcast %cst_296 : f32 to vector<16x32xf32>
    %546 = arith.addf %545, %544 : vector<16x32xf32>
    %547 = arith.divf %545, %546 : vector<16x32xf32>
    %548 = vector.extract_strided_slice %541 {offsets = [0, 32], sizes = [16, 32], strides = [1, 1]} : vector<16x96xf32> to vector<16x32xf32>
    %549 = math.tanh %548 : vector<16x32xf32>
    %550 = vector.extract_strided_slice %541 {offsets = [0, 64], sizes = [16, 32], strides = [1, 1]} : vector<16x96xf32> to vector<16x32xf32>
    %551 = arith.negf %550 : vector<16x32xf32>
    %552 = math.exp %551 : vector<16x32xf32>
    %cst_297 = arith.constant 1.000000e+00 : f32
    %553 = vector.broadcast %cst_297 : f32 to vector<16x32xf32>
    %554 = arith.addf %553, %552 : vector<16x32xf32>
    %555 = arith.divf %553, %554 : vector<16x32xf32>
    %556 = arith.mulf %547, %549 : vector<16x32xf32>
    %557 = math.tanh %556 : vector<16x32xf32>
    %558 = arith.mulf %555, %557 : vector<16x32xf32>
    %c0_298 = arith.constant 0 : index
    %c0_299 = arith.constant 0 : index
    %559 = vector.load %arg12[%c0_298, %c0_299] : memref<32x96xf32, #tpu.memory_space<vmem>>, vector<32x96xf32>
    %cst_300 = arith.constant dense<0.000000e+00> : vector<16x96xf32>
    %560 = tpu.matmul %558, %559, %cst_300 {dimension_numbers = #tpu.dot_dimension_numbers<[1], [0], [0], [1], [0, 0, 1, 1], [], []>} : vector<16x32xf32>, vector<32x96xf32>, vector<16x96xf32> -> vector<16x96xf32>
    %c0_301 = arith.constant 0 : index
    %c0_302 = arith.constant 0 : index
    %561 = vector.load %arg13[%c0_301, %c0_302] : memref<1x96xf32, #tpu.memory_space<vmem>>, vector<1x96xf32>
    %562 = vector.broadcast %561 : vector<1x96xf32> to vector<16x96xf32>
    %563 = arith.addf %560, %562 : vector<16x96xf32>
    %564 = vector.extract_strided_slice %563 {offsets = [0, 0], sizes = [16, 32], strides = [1, 1]} : vector<16x96xf32> to vector<16x32xf32>
    %565 = arith.negf %564 : vector<16x32xf32>
    %566 = math.exp %565 : vector<16x32xf32>
    %cst_303 = arith.constant 1.000000e+00 : f32
    %567 = vector.broadcast %cst_303 : f32 to vector<16x32xf32>
    %568 = arith.addf %567, %566 : vector<16x32xf32>
    %569 = arith.divf %567, %568 : vector<16x32xf32>
    %570 = vector.extract_strided_slice %563 {offsets = [0, 32], sizes = [16, 32], strides = [1, 1]} : vector<16x96xf32> to vector<16x32xf32>
    %571 = math.tanh %570 : vector<16x32xf32>
    %572 = vector.extract_strided_slice %563 {offsets = [0, 64], sizes = [16, 32], strides = [1, 1]} : vector<16x96xf32> to vector<16x32xf32>
    %573 = arith.negf %572 : vector<16x32xf32>
    %574 = math.exp %573 : vector<16x32xf32>
    %cst_304 = arith.constant 1.000000e+00 : f32
    %575 = vector.broadcast %cst_304 : f32 to vector<16x32xf32>
    %576 = arith.addf %575, %574 : vector<16x32xf32>
    %577 = arith.divf %575, %576 : vector<16x32xf32>
    %578 = arith.mulf %569, %571 : vector<16x32xf32>
    %579 = math.tanh %578 : vector<16x32xf32>
    %580 = arith.mulf %577, %579 : vector<16x32xf32>
    %c0_305 = arith.constant 0 : index
    %c0_306 = arith.constant 0 : index
    %581 = vector.load %arg14[%c0_305, %c0_306] : memref<1x32xf32, #tpu.memory_space<vmem>>, vector<1x32xf32>
    %582 = vector.broadcast %581 : vector<1x32xf32> to vector<16x32xf32>
    %583 = arith.mulf %580, %582 : vector<16x32xf32>
    %c16_i32 = arith.constant 16 : i32
    %584 = arith.muli %arg0, %c16_i32 : i32
    %585 = tpu.iota {dimensions = array<i32: 0>} : vector<16x1xi32>
    %586 = vector.broadcast %584 : i32 to vector<16x1xi32>
    %587 = arith.addi %586, %585 : vector<16x1xi32>
    %c16_i32_307 = arith.constant 16 : i32
    %588 = vector.broadcast %c16_i32_307 : i32 to vector<16x1xi32>
    %589 = arith.cmpi slt, %587, %588 : vector<16x1xi32>
    %cst_308 = arith.constant 0.000000e+00 : f32
    %590 = vector.shape_cast %589 : vector<16x1xi1> to vector<16x1xi1>
    %591 = vector.broadcast %590 : vector<16x1xi1> to vector<16x32xi1>
    %592 = vector.broadcast %cst_308 : f32 to vector<16x32xf32>
    %593 = arith.select %591, %583, %592 : vector<16x32xi1>, vector<16x32xf32>
    %594 = vector.shape_cast %593 : vector<16x32xf32> to vector<1x16x32xf32>
    %cst_309 = arith.constant dense<0.000000e+00> : vector<1xf32>
    %595 = vector.multi_reduction <add>, %594, %cst_309 [1, 2] : vector<1x16x32xf32> to vector<1xf32>
    %596 = vector.shape_cast %595 : vector<1xf32> to vector<1x1x1xf32>
    %597 = vector.extract %596[0, 0, 0] : f32 from vector<1x1x1xf32>
    %598 = vector.broadcast %597 : f32 to vector<1x1x1xf32>
    %c0_310 = arith.constant 0 : index
    %c0_311 = arith.constant 0 : index
    %c0_312 = arith.constant 0 : index
    %599 = vector.load %arg15[%c0_310, %c0_311, %c0_312] : memref<1x1x1xf32, #tpu.memory_space<vmem>>, vector<1x1x1xf32>
    tpu.vector_store %arg15[%c0_310, %c0_311, %c0_312], %598 {strides = array<i32>} : memref<1x1x1xf32, #tpu.memory_space<vmem>>, vector<1x1x1xf32>,
    return
  }
  func.func @transform_0(%arg0: i32) -> (i32, i32, i32) {
    %c0_i32 = arith.constant 0 : i32
    %c0_i32_0 = arith.constant 0 : i32
    %c0_i32_1 = arith.constant 0 : i32
    return %c0_i32, %arg0, %c0_i32_0 : i32, i32, i32
  }
  func.func @transform_1(%arg0: i32) -> (i32, i32, i32) {
    %c0_i32 = arith.constant 0 : i32
    %c0_i32_0 = arith.constant 0 : i32
    %c0_i32_1 = arith.constant 0 : i32
    return %c0_i32, %arg0, %c0_i32_0 : i32, i32, i32
  }
  func.func @transform_2(%arg0: i32) -> (i32, i32) {
    %c0_i32 = arith.constant 0 : i32
    %c0_i32_0 = arith.constant 0 : i32
    return %arg0, %c0_i32 : i32, i32
  }
  func.func @transform_3(%arg0: i32) -> (i32, i32, i32) {
    %c0_i32 = arith.constant 0 : i32
    %c0_i32_0 = arith.constant 0 : i32
    %c0_i32_1 = arith.constant 0 : i32
    %c0_i32_2 = arith.constant 0 : i32
    return %c0_i32, %c0_i32_0, %c0_i32_1 : i32, i32, i32
  }
  func.func @transform_4(%arg0: i32) -> (i32, i32, i32) {
    %c0_i32 = arith.constant 0 : i32
    %c0_i32_0 = arith.constant 0 : i32
    %c0_i32_1 = arith.constant 0 : i32
    %c0_i32_2 = arith.constant 0 : i32
    return %c0_i32, %c0_i32_0, %c0_i32_1 : i32, i32, i32
  }
  func.func @transform_5(%arg0: i32) -> (i32, i32, i32) {
    %c0_i32 = arith.constant 0 : i32
    %c0_i32_0 = arith.constant 0 : i32
    %c0_i32_1 = arith.constant 0 : i32
    %c0_i32_2 = arith.constant 0 : i32
    return %c0_i32, %c0_i32_0, %c0_i32_1 : i32, i32, i32
  }
  func.func @transform_6(%arg0: i32) -> (i32, i32, i32) {
    %c0_i32 = arith.constant 0 : i32
    %c0_i32_0 = arith.constant 0 : i32
    %c0_i32_1 = arith.constant 0 : i32
    %c0_i32_2 = arith.constant 0 : i32
    return %c0_i32, %c0_i32_0, %c0_i32_1 : i32, i32, i32
  }
  func.func @transform_7(%arg0: i32) -> (i32, i32) {
    %c0_i32 = arith.constant 0 : i32
    %c0_i32_0 = arith.constant 0 : i32
    %c0_i32_1 = arith.constant 0 : i32
    return %c0_i32, %c0_i32_0 : i32, i32
  }
  func.func @transform_8(%arg0: i32) -> (i32, i32) {
    %c0_i32 = arith.constant 0 : i32
    %c0_i32_0 = arith.constant 0 : i32
    %c0_i32_1 = arith.constant 0 : i32
    return %c0_i32, %c0_i32_0 : i32, i32
  }
  func.func @transform_9(%arg0: i32) -> (i32, i32) {
    %c0_i32 = arith.constant 0 : i32
    %c0_i32_0 = arith.constant 0 : i32
    %c0_i32_1 = arith.constant 0 : i32
    return %c0_i32, %c0_i32_0 : i32, i32
  }
  func.func @transform_10(%arg0: i32) -> (i32, i32) {
    %c0_i32 = arith.constant 0 : i32
    %c0_i32_0 = arith.constant 0 : i32
    %c0_i32_1 = arith.constant 0 : i32
    return %c0_i32, %c0_i32_0 : i32, i32
  }
  func.func @transform_11(%arg0: i32) -> (i32, i32) {
    %c0_i32 = arith.constant 0 : i32
    %c0_i32_0 = arith.constant 0 : i32
    %c0_i32_1 = arith.constant 0 : i32
    return %c0_i32, %c0_i32_0 : i32, i32
  }
  func.func @transform_12(%arg0: i32) -> (i32, i32) {
    %c0_i32 = arith.constant 0 : i32
    %c0_i32_0 = arith.constant 0 : i32
    %c0_i32_1 = arith.constant 0 : i32
    return %c0_i32, %c0_i32_0 : i32, i32
  }
  func.func @transform_13(%arg0: i32) -> (i32, i32) {
    %c0_i32 = arith.constant 0 : i32
    %c0_i32_0 = arith.constant 0 : i32
    %c0_i32_1 = arith.constant 0 : i32
    return %c0_i32, %c0_i32_0 : i32, i32
  }
  func.func @transform_14(%arg0: i32) -> (i32, i32, i32) {
    %c0_i32 = arith.constant 0 : i32
    %c0_i32_0 = arith.constant 0 : i32
    %c0_i32_1 = arith.constant 0 : i32
    return %arg0, %c0_i32, %c0_i32_0 : i32, i32, i32
  }
}

</mosaic_0001>

<llo_original>
// kernel: tpu_custom_call.1
$region0: #{tpu_custom_call.1}
  #allocation0 [shape = 'u32[]', space=smem, size = 0x4, offset = 0x4, fixed_abs, tag = 'smem constant byte address 0x4 - core index']
  #allocation1 [shape = 'u32[144,128]{1,0:T(1,128)}', space=vmem, size = 0x12000, scoped, tag = 'internal scratch']
  %s0 = inlined_call_operand.vmem [shape: f32[6,16,32], index: 0, kind: input, shape index: {}]
  %s1 = inlined_call_operand.vmem [shape: f32[6,16,32], index: 1, kind: input, shape index: {}]
  %s2 = inlined_call_operand.hbm [shape: f32[16,120], index: 2, kind: input, shape index: {}]
  %s3 = inlined_call_operand.vmem [shape: bf16[6,32,128], index: 3, kind: input, shape index: {}]
  %s4 = inlined_call_operand.vmem [shape: bf16[6,32,128], index: 4, kind: input, shape index: {}]
  %s5 = inlined_call_operand.vmem [shape: f32[6,3,128], index: 5, kind: input, shape index: {}]
  %s6 = inlined_call_operand.vmem [shape: f32[6,3,128], index: 6, kind: input, shape index: {}]
  %s7 = inlined_call_operand.vmem [shape: f32[128,96], index: 7, kind: input, shape index: {}]
  %s8 = inlined_call_operand.vmem [shape: f32[120,96], index: 8, kind: input, shape index: {}]
  %s9 = inlined_call_operand.vmem [shape: f32[128,96], index: 9, kind: input, shape index: {}]
  %s10 = inlined_call_operand.vmem [shape: f32[1,96], index: 10, kind: input, shape index: {}]
  %s11 = inlined_call_operand.vmem [shape: f32[32,96], index: 11, kind: input, shape index: {}]
  %s12 = inlined_call_operand.vmem [shape: f32[1,96], index: 12, kind: input, shape index: {}]
  %s13 = inlined_call_operand.vmem [shape: f32[1,32], index: 13, kind: input, shape index: {}]
  %s14 = inlined_call_operand.hbm [shape: f32[1,1,1], index: 14, kind: output, shape index: {}]
  %s15 = sld [smem:[#allocation0]]
  $region70: #{tpu_custom_call.1} parent=0
    _
  %s17 = ssub.s32 1, %s15
  %s18 = scalar_select 0, %s17, %s15
  $region1: #{tpu_custom_call.1} parent=0
    #allocation2 [shape = 'u8[8192]{0}', space=vmem, size = 0x2000, scoped, tag = 'input window, operand 2, single buffered']
    #allocation3 [shape = 's32[1]{0}', space=sflag, size = 0x4, scoped, tag = 'scoped memory for tpu_custom_call.1']
    #allocation4 [shape = 's32[1]{0}', space=sflag, size = 0x4, scoped, tag = 'scoped memory for tpu_custom_call.1']
    #allocation5 [shape = 'u8[512]{0}', space=vmem, size = 0x400, scoped, tag = 'output window, operand 0, single buffered']
    %19 = vsyncpa [#allocation3], 0
    %20 = vsyncpa [#allocation4], 0
    // Predicated region
    $region2: #{tpu_custom_call.1} parent=1 // pred_check
      _
    $region3: #{tpu_custom_call.1} parent=1 // pred_check_branch
      %22 = sbr.rel (0) target = $region5
    $region4: #{tpu_custom_call.1} parent=1 // pred_region
      _
    $region5: #{tpu_custom_call.1} parent=1 // pred_fallthru
      _
    // Predicated region
    $region6: #{tpu_custom_call.1} parent=1 // pred_check
      _
    $region7: #{tpu_custom_call.1} parent=1 // pred_check_branch
      %24 = sbr.rel (0) target = $region9
    $region8: #{tpu_custom_call.1} parent=1 // pred_region
      _
    $region9: #{tpu_custom_call.1} parent=1 // pred_fallthru
      _
    // Predicated region
    $region10: #{tpu_custom_call.1} parent=1 // pred_check
      _
    $region11: #{tpu_custom_call.1} parent=1 // pred_check_branch
      %26 = sbr.rel (0) target = $region13
    $region12: #{tpu_custom_call.1} parent=1 // pred_region
      %s28 = ssub.s32 256, 256
      %29 = vsyncadd [#allocation3], %s28
      %s30 = sshll.u32 [#allocation2], 4
      %s31 = int_to_ptr.vmem [resolvable:$true] %s30
      %36 = dma.hbm_to_vmem [thread:$0]  %s2, 256, %s31, [#allocation3], 128, 128, 8
    $region13: #{tpu_custom_call.1} parent=1 // pred_fallthru
      _
    // Predicated region
    $region14: #{tpu_custom_call.1} parent=1 // pred_check
      _
    $region15: #{tpu_custom_call.1} parent=1 // pred_check_branch
      %38 = sbr.rel (0) target = $region17
    $region16: #{tpu_custom_call.1} parent=1 // pred_region
      _
    $region17: #{tpu_custom_call.1} parent=1 // pred_fallthru
      _
    // Predicated region
    $region18: #{tpu_custom_call.1} parent=1 // pred_check
      _
    $region19: #{tpu_custom_call.1} parent=1 // pred_check_branch
      %40 = sbr.rel (0) target = $region21
    $region20: #{tpu_custom_call.1} parent=1 // pred_region
      _
    $region21: #{tpu_custom_call.1} parent=1 // pred_fallthru
      _
    // Predicated region
    $region22: #{tpu_custom_call.1} parent=1 // pred_check
      _
    $region23: #{tpu_custom_call.1} parent=1 // pred_check_branch
      %42 = sbr.rel (0) target = $region25
    $region24: #{tpu_custom_call.1} parent=1 // pred_region
      _
    $region25: #{tpu_custom_call.1} parent=1 // pred_fallthru
      _
    // Predicated region
    $region26: #{tpu_custom_call.1} parent=1 // pred_check
      _
    $region27: #{tpu_custom_call.1} parent=1 // pred_check_branch
      %44 = sbr.rel (0) target = $region29
    $region28: #{tpu_custom_call.1} parent=1 // pred_region
      _
    $region29: #{tpu_custom_call.1} parent=1 // pred_fallthru
      _
    // Predicated region
    $region30: #{tpu_custom_call.1} parent=1 // pred_check
      _
    $region31: #{tpu_custom_call.1} parent=1 // pred_check_branch
      %46 = sbr.rel (0) target = $region33
    $region32: #{tpu_custom_call.1} parent=1 // pred_region
      _
    $region33: #{tpu_custom_call.1} parent=1 // pred_fallthru
      _
    // Predicated region
    $region34: #{tpu_custom_call.1} parent=1 // pred_check
      _
    $region35: #{tpu_custom_call.1} parent=1 // pred_check_branch
      %48 = sbr.rel (0) target = $region37
    $region36: #{tpu_custom_call.1} parent=1 // pred_region
      _
    $region37: #{tpu_custom_call.1} parent=1 // pred_fallthru
      _
    // Predicated region
    $region38: #{tpu_custom_call.1} parent=1 // pred_check
      _
    $region39: #{tpu_custom_call.1} parent=1 // pred_check_branch
      %50 = sbr.rel (0) target = $region41
    $region40: #{tpu_custom_call.1} parent=1 // pred_region
      _
    $region41: #{tpu_custom_call.1} parent=1 // pred_fallthru
      _
    // Predicated region
    $region42: #{tpu_custom_call.1} parent=1 // pred_check
      _
    $region43: #{tpu_custom_call.1} parent=1 // pred_check_branch
      %52 = sbr.rel (0) target = $region45
    $region44: #{tpu_custom_call.1} parent=1 // pred_region
      _
    $region45: #{tpu_custom_call.1} parent=1 // pred_fallthru
      _
    // Predicated region
    $region46: #{tpu_custom_call.1} parent=1 // pred_check
      _
    $region47: #{tpu_custom_call.1} parent=1 // pred_check_branch
      %54 = sbr.rel (0) target = $region49
    $region48: #{tpu_custom_call.1} parent=1 // pred_region
      _
    $region49: #{tpu_custom_call.1} parent=1 // pred_fallthru
      _
    // Predicated region
    $region50: #{tpu_custom_call.1} parent=1 // pred_check
      _
    $region51: #{tpu_custom_call.1} parent=1 // pred_check_branch
      %56 = sbr.rel (0) target = $region53
    $region52: #{tpu_custom_call.1} parent=1 // pred_region
      _
    $region53: #{tpu_custom_call.1} parent=1 // pred_fallthru
      _
    // Predicated region
    $region54: #{tpu_custom_call.1} parent=1 // pred_check
      _
    $region55: #{tpu_custom_call.1} parent=1 // pred_check_branch
      %58 = sbr.rel (0) target = $region57
    $region56: #{tpu_custom_call.1} parent=1 // pred_region
      _
    $region57: #{tpu_custom_call.1} parent=1 // pred_fallthru
      _
    // Predicated region
    $region58: #{tpu_custom_call.1} parent=1 // pred_check
      _
    $region59: #{tpu_custom_call.1} parent=1 // pred_check_branch
      %60 = sbr.rel (0) target = $region61
    $region60: #{tpu_custom_call.1} parent=1 // pred_region
      %61 = dma.done [#allocation3], 256
    $region61: #{tpu_custom_call.1} parent=1 // pred_fallthru
      _
    %v63 = vld [vmem:[%s0] sm:$0xff]
    %v64 = vld [vmem:[%s0 + $0x8] sm:$0xff]
    %v65 = vpack.c.bf16 %v64, %v63
    %v66 = vld [vmem:[%s3] sm:$0xf]
    %v67 = vld [vmem:[%s3 + $0x4] sm:$0xf]
    %v68 = vld [vmem:[%s3 + $0x8] sm:$0xf]
    %v69 = vld [vmem:[%s3 + $0xc] sm:$0xf]
    %v70 = vld [vmem:[%s5] sm:$0x1]
    %v71 = vlaneseq
    %v72 = vshrl.u32 %v71, 7
    %v73 = vsub.s32 0, %v72
    %v74 = vrot.slane %v70, %v73
    %v79 = vunpack.c.l.b16 %v66
    %v80 = vunpack.c.l.b16 %v67
    %v81 = vunpack.c.l.b16 %v68
    %v82 = vunpack.c.l.b16 %v69
    %v83 = vpack.c.b16 %v80, %v79
    %v84 = vpack.c.b16 %v82, %v81
    %vm87 = vcmask 261120
    %v89 = vsel %vm87, %v65, 0
    %91 = vmatprep.subr.bf16.mxu0 0
    %92 = vmatpush1.bf16.msra.mxu0 0
    %93 = vmatprep.subr.bf16.mxu0 0
    %94 = vmatpush1.bf16.msra.mxu0 0
    %95 = vmatprep.subr.bf16.mxu0 0
    %96 = vmatpush1.bf16.msra.mxu0 0
    %97 = vmatprep.subr.bf16.mxu0 0
    %98 = vmatpush1.bf16.msra.mxu0 0
    %99 = vmatprep.subr.bf16.mxu0 0
    %100 = vmatpush1.bf16.msra.mxu0 0
    %101 = vmatprep.subr.bf16.mxu0 0
    %102 = vmatpush1.bf16.msra.mxu0 0
    %103 = vmatprep.subr.bf16.mxu0 0
    %104 = vmatpush1.bf16.msra.mxu0 %v84
    %105 = vmatprep.subr.bf16.mxu0 0
    %106 = vmatpush1.bf16.msra.mxu0 %v83
    %107 = vmatprep.subr.bf16.mxu0 0
    %108 = vmatpush2.bf16.msra.mxu0 0
    %109 = vmatprep.subr.bf16.mxu0 0
    %110 = vmatpush2.bf16.msra.mxu0 0
    %111 = vmatprep.subr.bf16.mxu0 0
    %112 = vmatpush2.bf16.msra.mxu0 0
    %113 = vmatprep.subr.bf16.mxu0 0
    %114 = vmatpush2.bf16.msra.mxu0 0
    %115 = vmatprep.subr.bf16.mxu0 0
    %116 = vmatpush2.bf16.msra.mxu0 0
    %117 = vmatprep.subr.bf16.mxu0 0
    %118 = vmatpush2.bf16.msra.mxu0 0
    %119 = vmatprep.subr.bf16.mxu0 0
    %120 = vmatpush2.bf16.msra.mxu0 0
    %121 = vmatprep.subr.bf16.mxu0 0
    %122 = vmatpush2.bf16.msra.mxu0 0
    %123 = vmatprep.mubr.bf16.mxu0 0
    %124 = vmatmul.mubr.bf16.gmra.mxu0 %v89
    %v125 = vpop.f32.mrf.mxu0
    %v126 = vadd.f32 %v74, %v125
    %v127 = vpop.f32.mrf.mxu0
    %v128 = vpop.f32.mrf.mxu0
    %v129 = vadd.f32 %v74, %v128
    %v130 = vpop.f32.mrf.mxu0
    %131 = vdwg.mxu0
    %vm132 = vcmp.ge.f32.partialorder %v126, 0.0
    %vm133 = vcmp.ge.f32.partialorder %v129, 0.0
    %v134 = vmul.f32 %v126, 0.05
    %v135 = vmul.f32 %v129, 0.05
    %v136 = vsel %vm132, %v126, %v134
    %v137 = vsel %vm133, %v129, %v135
    %138 = vadd.xlane.f32.xlu0 %v136
    %v139 = vpop.xlane.xlu0 %138
    %140 = vadd.xlane.f32.xlu0 %v137
    %v141 = vpop.xlane.xlu0 %140
    %v142 = vmul.f32 %v139, 0.008333334
    %v143 = vmul.f32 %v141, 0.008333334
    %v144 = vsub.f32 %v136, %v142
    %v145 = vsub.f32 %v137, %v143
    %v146 = vmul.f32 %v144, %v144
    %v147 = vmul.f32 %v145, %v145
    %148 = vadd.xlane.f32.xlu0 %v146
    %v149 = vpop.xlane.xlu0 %148
    %150 = vadd.xlane.f32.xlu0 %v147
    %v151 = vpop.xlane.xlu0 %150
    %v152 = vmul.f32 %v142, 8.0
    %v153 = vmul.f32 %v143, 8.0
    %v154 = vmul.f32 %v152, %v142
    %v155 = vmul.f32 %v153, %v143
    %v156 = vsub.f32 %v149, %v154
    %v157 = vsub.f32 %v151, %v155
    %v158 = vmul.f32 %v156, 0.008333334
    %v159 = vmul.f32 %v157, 0.008333334
    %v160 = vadd.f32 %v158, 1e-05
    %v161 = vadd.f32 %v159, 1e-05
    %v162 = vrsqrt.pop %v160
    %v163 = vrsqrt.pop %v161
    %v164 = vmul.f32 %v144, %v162
    %v165 = vmul.f32 %v145, %v163
    %v166 = vld [vmem:[%s5 + $0x1] sm:$0x1]
    %v167 = vlaneseq
    %v168 = vshrl.u32 %v167, 7
    %v169 = vsub.s32 0, %v168
    %v170 = vrot.slane %v166, %v169
    %v171 = vmul.f32 %v164, %v170
    %v172 = vmul.f32 %v165, %v170
    %v173 = vadd.f32 %v171, 0.0
    %v174 = vadd.f32 %v172, 0.0
    %v175 = vld [vmem:[%s5 + $0x2] sm:$0x1]
    %v176 = vlaneseq
    %v177 = vshrl.u32 %v176, 7
    %v178 = vsub.s32 0, %v177
    %v179 = vrot.slane %v175, %v178
    %v180 = vadd.f32 %v173, %v179
    %v181 = vadd.f32 %v174, %v179
    %s182 = scalar_lea.vmem %s0, 16
    %v183 = vld [vmem:[%s182] sm:$0xff]
    %v184 = vld [vmem:[%s182 + $0x8] sm:$0xff]
    %v185 = vpack.c.bf16 %v184, %v183
    %s186 = scalar_lea.vmem %s3, 16
    %v187 = vld [vmem:[%s186] sm:$0xf]
    %v188 = vld [vmem:[%s186 + $0x4] sm:$0xf]
    %v189 = vld [vmem:[%s186 + $0x8] sm:$0xf]
    %v190 = vld [vmem:[%s186 + $0xc] sm:$0xf]
    %s191 = scalar_lea.vmem %s5, 4
    %v192 = vld [vmem:[%s191] sm:$0x1]
    %v193 = vlaneseq
    %v194 = vshrl.u32 %v193, 7
    %v195 = vsub.s32 0, %v194
    %v196 = vrot.slane %v192, %v195
    %v201 = vunpack.c.l.b16 %v187
    %v202 = vunpack.c.l.b16 %v188
    %v203 = vunpack.c.l.b16 %v189
    %v204 = vunpack.c.l.b16 %v190
    %v205 = vpack.c.b16 %v202, %v201
    %v206 = vpack.c.b16 %v204, %v203
    %v210 = vsel %vm87, %v185, 0
    %212 = vmatprep.subr.bf16.mxu0 0
    %213 = vmatpush1.bf16.msra.mxu0 0
    %214 = vmatprep.subr.bf16.mxu0 0
    %215 = vmatpush1.bf16.msra.mxu0 0
    %216 = vmatprep.subr.bf16.mxu0 0
    %217 = vmatpush1.bf16.msra.mxu0 0
    %218 = vmatprep.subr.bf16.mxu0 0
    %219 = vmatpush1.bf16.msra.mxu0 0
    %220 = vmatprep.subr.bf16.mxu0 0
    %221 = vmatpush1.bf16.msra.mxu0 0
    %222 = vmatprep.subr.bf16.mxu0 0
    %223 = vmatpush1.bf16.msra.mxu0 0
    %224 = vmatprep.subr.bf16.mxu0 0
    %225 = vmatpush1.bf16.msra.mxu0 %v206
    %226 = vmatprep.subr.bf16.mxu0 0
    %227 = vmatpush1.bf16.msra.mxu0 %v205
    %228 = vmatprep.subr.bf16.mxu0 0
    %229 = vmatpush2.bf16.msra.mxu0 0
    %230 = vmatprep.subr.bf16.mxu0 0
    %231 = vmatpush2.bf16.msra.mxu0 0
    %232 = vmatprep.subr.bf16.mxu0 0
    %233 = vmatpush2.bf16.msra.mxu0 0
    %234 = vmatprep.subr.bf16.mxu0 0
    %235 = vmatpush2.bf16.msra.mxu0 0
    %236 = vmatprep.subr.bf16.mxu0 0
    %237 = vmatpush2.bf16.msra.mxu0 0
    %238 = vmatprep.subr.bf16.mxu0 0
    %239 = vmatpush2.bf16.msra.mxu0 0
    %240 = vmatprep.subr.bf16.mxu0 0
    %241 = vmatpush2.bf16.msra.mxu0 0
    %242 = vmatprep.subr.bf16.mxu0 0
    %243 = vmatpush2.bf16.msra.mxu0 0
    %244 = vmatprep.mubr.bf16.mxu0 0
    %245 = vmatmul.mubr.bf16.gmra.mxu0 %v210
    %v246 = vpop.f32.mrf.mxu0
    %v247 = vadd.f32 %v196, %v246
    %v248 = vpop.f32.mrf.mxu0
    %v249 = vpop.f32.mrf.mxu0
    %v250 = vadd.f32 %v196, %v249
    %v251 = vpop.f32.mrf.mxu0
    %252 = vdwg.mxu0
    %vm253 = vcmp.ge.f32.partialorder %v247, 0.0
    %vm254 = vcmp.ge.f32.partialorder %v250, 0.0
    %v255 = vmul.f32 %v247, 0.05
    %v256 = vmul.f32 %v250, 0.05
    %v257 = vsel %vm253, %v247, %v255
    %v258 = vsel %vm254, %v250, %v256
    %259 = vadd.xlane.f32.xlu0 %v257
    %v260 = vpop.xlane.xlu0 %259
    %261 = vadd.xlane.f32.xlu0 %v258
    %v262 = vpop.xlane.xlu0 %261
    %v263 = vmul.f32 %v260, 0.008333334
    %v264 = vmul.f32 %v262, 0.008333334
    %v265 = vsub.f32 %v257, %v263
    %v266 = vsub.f32 %v258, %v264
    %v267 = vmul.f32 %v265, %v265
    %v268 = vmul.f32 %v266, %v266
    %269 = vadd.xlane.f32.xlu0 %v267
    %v270 = vpop.xlane.xlu0 %269
    %271 = vadd.xlane.f32.xlu0 %v268
    %v272 = vpop.xlane.xlu0 %271
    %v273 = vmul.f32 %v263, 8.0
    %v274 = vmul.f32 %v264, 8.0
    %v275 = vmul.f32 %v273, %v263
    %v276 = vmul.f32 %v274, %v264
    %v277 = vsub.f32 %v270, %v275
    %v278 = vsub.f32 %v272, %v276
    %v279 = vmul.f32 %v277, 0.008333334
    %v280 = vmul.f32 %v278, 0.008333334
    %v281 = vadd.f32 %v279, 1e-05
    %v282 = vadd.f32 %v280, 1e-05
    %v283 = vrsqrt.pop %v281
    %v284 = vrsqrt.pop %v282
    %v285 = vmul.f32 %v265, %v283
    %v286 = vmul.f32 %v266, %v284
    %v287 = vld [vmem:[%s191 + $0x1] sm:$0x1]
    %v288 = vlaneseq
    %v289 = vshrl.u32 %v288, 7
    %v290 = vsub.s32 0, %v289
    %v291 = vrot.slane %v287, %v290
    %v292 = vmul.f32 %v285, %v291
    %v293 = vmul.f32 %v286, %v291
    %v294 = vadd.f32 %v180, %v292
    %v295 = vadd.f32 %v181, %v293
    %v296 = vld [vmem:[%s191 + $0x2] sm:$0x1]
    %v297 = vlaneseq
    %v298 = vshrl.u32 %v297, 7
    %v299 = vsub.s32 0, %v298
    %v300 = vrot.slane %v296, %v299
    %v301 = vadd.f32 %v294, %v300
    %v302 = vadd.f32 %v295, %v300
    %s303 = scalar_lea.vmem %s0, 32
    %v304 = vld [vmem:[%s303] sm:$0xff]
    %v305 = vld [vmem:[%s303 + $0x8] sm:$0xff]
    %v306 = vpack.c.bf16 %v305, %v304
    %s307 = scalar_lea.vmem %s3, 32
    %v308 = vld [vmem:[%s307] sm:$0xf]
    %v309 = vld [vmem:[%s307 + $0x4] sm:$0xf]
    %v310 = vld [vmem:[%s307 + $0x8] sm:$0xf]
    %v311 = vld [vmem:[%s307 + $0xc] sm:$0xf]
    %s312 = scalar_lea.vmem %s5, 8
    %v313 = vld [vmem:[%s312] sm:$0x1]
    %v314 = vlaneseq
    %v315 = vshrl.u32 %v314, 7
    %v316 = vsub.s32 0, %v315
    %v317 = vrot.slane %v313, %v316
    %v322 = vunpack.c.l.b16 %v308
    %v323 = vunpack.c.l.b16 %v309
    %v324 = vunpack.c.l.b16 %v310
    %v325 = vunpack.c.l.b16 %v311
    %v326 = vpack.c.b16 %v323, %v322
    %v327 = vpack.c.b16 %v325, %v324
    %v331 = vsel %vm87, %v306, 0
    %333 = vmatprep.subr.bf16.mxu0 0
    %334 = vmatpush1.bf16.msra.mxu0 0
    %335 = vmatprep.subr.bf16.mxu0 0
    %336 = vmatpush1.bf16.msra.mxu0 0
    %337 = vmatprep.subr.bf16.mxu0 0
    %338 = vmatpush1.bf16.msra.mxu0 0
    %339 = vmatprep.subr.bf16.mxu0 0
    %340 = vmatpush1.bf16.msra.mxu0 0
    %341 = vmatprep.subr.bf16.mxu0 0
    %342 = vmatpush1.bf16.msra.mxu0 0
    %343 = vmatprep.subr.bf16.mxu0 0
    %344 = vmatpush1.bf16.msra.mxu0 0
    %345 = vmatprep.subr.bf16.mxu0 0
    %346 = vmatpush1.bf16.msra.mxu0 %v327
    %347 = vmatprep.subr.bf16.mxu0 0
    %348 = vmatpush1.bf16.msra.mxu0 %v326
    %349 = vmatprep.subr.bf16.mxu0 0
    %350 = vmatpush2.bf16.msra.mxu0 0
    %351 = vmatprep.subr.bf16.mxu0 0
    %352 = vmatpush2.bf16.msra.mxu0 0
    %353 = vmatprep.subr.bf16.mxu0 0
    %354 = vmatpush2.bf16.msra.mxu0 0
    %355 = vmatprep.subr.bf16.mxu0 0
    %356 = vmatpush2.bf16.msra.mxu0 0
    %357 = vmatprep.subr.bf16.mxu0 0
    %358 = vmatpush2.bf16.msra.mxu0 0
    %359 = vmatprep.subr.bf16.mxu0 0
    %360 = vmatpush2.bf16.msra.mxu0 0
    %361 = vmatprep.subr.bf16.mxu0 0
    %362 = vmatpush2.bf16.msra.mxu0 0
    %363 = vmatprep.subr.bf16.mxu0 0
    %364 = vmatpush2.bf16.msra.mxu0 0
    %365 = vmatprep.mubr.bf16.mxu0 0
    %366 = vmatmul.mubr.bf16.gmra.mxu0 %v331
    %v367 = vpop.f32.mrf.mxu0
    %v368 = vadd.f32 %v317, %v367
    %v369 = vpop.f32.mrf.mxu0
    %v370 = vpop.f32.mrf.mxu0
    %v371 = vadd.f32 %v317, %v370
    %v372 = vpop.f32.mrf.mxu0
    %373 = vdwg.mxu0
    %vm374 = vcmp.ge.f32.partialorder %v368, 0.0
    %vm375 = vcmp.ge.f32.partialorder %v371, 0.0
    %v376 = vmul.f32 %v368, 0.05
    %v377 = vmul.f32 %v371, 0.05
    %v378 = vsel %vm374, %v368, %v376
    %v379 = vsel %vm375, %v371, %v377
    %380 = vadd.xlane.f32.xlu0 %v378
    %v381 = vpop.xlane.xlu0 %380
    %382 = vadd.xlane.f32.xlu0 %v379
    %v383 = vpop.xlane.xlu0 %382
    %v384 = vmul.f32 %v381, 0.008333334
    %v385 = vmul.f32 %v383, 0.008333334
    %v386 = vsub.f32 %v378, %v384
    %v387 = vsub.f32 %v379, %v385
    %v388 = vmul.f32 %v386, %v386
    %v389 = vmul.f32 %v387, %v387
    %390 = vadd.xlane.f32.xlu0 %v388
    %v391 = vpop.xlane.xlu0 %390
    %392 = vadd.xlane.f32.xlu0 %v389
    %v393 = vpop.xlane.xlu0 %392
    %v394 = vmul.f32 %v384, 8.0
    %v395 = vmul.f32 %v385, 8.0
    %v396 = vmul.f32 %v394, %v384
    %v397 = vmul.f32 %v395, %v385
    %v398 = vsub.f32 %v391, %v396
    %v399 = vsub.f32 %v393, %v397
    %v400 = vmul.f32 %v398, 0.008333334
    %v401 = vmul.f32 %v399, 0.008333334
    %v402 = vadd.f32 %v400, 1e-05
    %v403 = vadd.f32 %v401, 1e-05
    %v404 = vrsqrt.pop %v402
    %v405 = vrsqrt.pop %v403
    %v406 = vmul.f32 %v386, %v404
    %v407 = vmul.f32 %v387, %v405
    %v408 = vld [vmem:[%s312 + $0x1] sm:$0x1]
    %v409 = vlaneseq
    %v410 = vshrl.u32 %v409, 7
    %v411 = vsub.s32 0, %v410
    %v412 = vrot.slane %v408, %v411
    %v413 = vmul.f32 %v406, %v412
    %v414 = vmul.f32 %v407, %v412
    %v415 = vadd.f32 %v301, %v413
    %v416 = vadd.f32 %v302, %v414
    %v417 = vld [vmem:[%s312 + $0x2] sm:$0x1]
    %v418 = vlaneseq
    %v419 = vshrl.u32 %v418, 7
    %v420 = vsub.s32 0, %v419
    %v421 = vrot.slane %v417, %v420
    %v422 = vadd.f32 %v415, %v421
    %v423 = vadd.f32 %v416, %v421
    %s424 = scalar_lea.vmem %s0, 48
    %v425 = vld [vmem:[%s424] sm:$0xff]
    %v426 = vld [vmem:[%s424 + $0x8] sm:$0xff]
    %v427 = vpack.c.bf16 %v426, %v425
    %s428 = scalar_lea.vmem %s3, 48
    %v429 = vld [vmem:[%s428] sm:$0xf]
    %v430 = vld [vmem:[%s428 + $0x4] sm:$0xf]
    %v431 = vld [vmem:[%s428 + $0x8] sm:$0xf]
    %v432 = vld [vmem:[%s428 + $0xc] sm:$0xf]
    %s433 = scalar_lea.vmem %s5, 12
    %v434 = vld [vmem:[%s433] sm:$0x1]
    %v435 = vlaneseq
    %v436 = vshrl.u32 %v435, 7
    %v437 = vsub.s32 0, %v436
    %v438 = vrot.slane %v434, %v437
    %v443 = vunpack.c.l.b16 %v429
    %v444 = vunpack.c.l.b16 %v430
    %v445 = vunpack.c.l.b16 %v431
    %v446 = vunpack.c.l.b16 %v432
    %v447 = vpack.c.b16 %v444, %v443
    %v448 = vpack.c.b16 %v446, %v445
    %v452 = vsel %vm87, %v427, 0
    %454 = vmatprep.subr.bf16.mxu0 0
    %455 = vmatpush1.bf16.msra.mxu0 0
    %456 = vmatprep.subr.bf16.mxu0 0
    %457 = vmatpush1.bf16.msra.mxu0 0
    %458 = vmatprep.subr.bf16.mxu0 0
    %459 = vmatpush1.bf16.msra.mxu0 0
    %460 = vmatprep.subr.bf16.mxu0 0
    %461 = vmatpush1.bf16.msra.mxu0 0
    %462 = vmatprep.subr.bf16.mxu0 0
    %463 = vmatpush1.bf16.msra.mxu0 0
    %464 = vmatprep.subr.bf16.mxu0 0
    %465 = vmatpush1.bf16.msra.mxu0 0
    %466 = vmatprep.subr.bf16.mxu0 0
    %467 = vmatpush1.bf16.msra.mxu0 %v448
    %468 = vmatprep.subr.bf16.mxu0 0
    %469 = vmatpush1.bf16.msra.mxu0 %v447
    %470 = vmatprep.subr.bf16.mxu0 0
    %471 = vmatpush2.bf16.msra.mxu0 0
    %472 = vmatprep.subr.bf16.mxu0 0
    %473 = vmatpush2.bf16.msra.mxu0 0
    %474 = vmatprep.subr.bf16.mxu0 0
    %475 = vmatpush2.bf16.msra.mxu0 0
    %476 = vmatprep.subr.bf16.mxu0 0
    %477 = vmatpush2.bf16.msra.mxu0 0
    %478 = vmatprep.subr.bf16.mxu0 0
    %479 = vmatpush2.bf16.msra.mxu0 0
    %480 = vmatprep.subr.bf16.mxu0 0
    %481 = vmatpush2.bf16.msra.mxu0 0
    %482 = vmatprep.subr.bf16.mxu0 0
    %483 = vmatpush2.bf16.msra.mxu0 0
    %484 = vmatprep.subr.bf16.mxu0 0
    %485 = vmatpush2.bf16.msra.mxu0 0
    %486 = vmatprep.mubr.bf16.mxu0 0
    %487 = vmatmul.mubr.bf16.gmra.mxu0 %v452
    %v488 = vpop.f32.mrf.mxu0
    %v489 = vadd.f32 %v438, %v488
    %v490 = vpop.f32.mrf.mxu0
    %v491 = vpop.f32.mrf.mxu0
    %v492 = vadd.f32 %v438, %v491
    %v493 = vpop.f32.mrf.mxu0
    %494 = vdwg.mxu0
    %vm495 = vcmp.ge.f32.partialorder %v489, 0.0
    %vm496 = vcmp.ge.f32.partialorder %v492, 0.0
    %v497 = vmul.f32 %v489, 0.05
    %v498 = vmul.f32 %v492, 0.05
    %v499 = vsel %vm495, %v489, %v497
    %v500 = vsel %vm496, %v492, %v498
    %501 = vadd.xlane.f32.xlu0 %v499
    %v502 = vpop.xlane.xlu0 %501
    %503 = vadd.xlane.f32.xlu0 %v500
    %v504 = vpop.xlane.xlu0 %503
    %v505 = vmul.f32 %v502, 0.008333334
    %v506 = vmul.f32 %v504, 0.008333334
    %v507 = vsub.f32 %v499, %v505
    %v508 = vsub.f32 %v500, %v506
    %v509 = vmul.f32 %v507, %v507
    %v510 = vmul.f32 %v508, %v508
    %511 = vadd.xlane.f32.xlu0 %v509
    %v512 = vpop.xlane.xlu0 %511
    %513 = vadd.xlane.f32.xlu0 %v510
    %v514 = vpop.xlane.xlu0 %513
    %v515 = vmul.f32 %v505, 8.0
    %v516 = vmul.f32 %v506, 8.0
    %v517 = vmul.f32 %v515, %v505
    %v518 = vmul.f32 %v516, %v506
    %v519 = vsub.f32 %v512, %v517
    %v520 = vsub.f32 %v514, %v518
    %v521 = vmul.f32 %v519, 0.008333334
    %v522 = vmul.f32 %v520, 0.008333334
    %v523 = vadd.f32 %v521, 1e-05
    %v524 = vadd.f32 %v522, 1e-05
    %v525 = vrsqrt.pop %v523
    %v526 = vrsqrt.pop %v524
    %v527 = vmul.f32 %v507, %v525
    %v528 = vmul.f32 %v508, %v526
    %v529 = vld [vmem:[%s433 + $0x1] sm:$0x1]
    %v530 = vlaneseq
    %v531 = vshrl.u32 %v530, 7
    %v532 = vsub.s32 0, %v531
    %v533 = vrot.slane %v529, %v532
    %v534 = vmul.f32 %v527, %v533
    %v535 = vmul.f32 %v528, %v533
    %v536 = vadd.f32 %v422, %v534
    %v537 = vadd.f32 %v423, %v535
    %v538 = vld [vmem:[%s433 + $0x2] sm:$0x1]
    %v539 = vlaneseq
    %v540 = vshrl.u32 %v539, 7
    %v541 = vsub.s32 0, %v540
    %v542 = vrot.slane %v538, %v541
    %v543 = vadd.f32 %v536, %v542
    %v544 = vadd.f32 %v537, %v542
    %s545 = scalar_lea.vmem %s0, 64
    %v546 = vld [vmem:[%s545] sm:$0xff]
    %v547 = vld [vmem:[%s545 + $0x8] sm:$0xff]
    %v548 = vpack.c.bf16 %v547, %v546
    %s549 = scalar_lea.vmem %s3, 64
    %v550 = vld [vmem:[%s549] sm:$0xf]
    %v551 = vld [vmem:[%s549 + $0x4] sm:$0xf]
    %v552 = vld [vmem:[%s549 + $0x8] sm:$0xf]
    %v553 = vld [vmem:[%s549 + $0xc] sm:$0xf]
    %s554 = scalar_lea.vmem %s5, 16
    %v555 = vld [vmem:[%s554] sm:$0x1]
    %v556 = vlaneseq
    %v557 = vshrl.u32 %v556, 7
    %v558 = vsub.s32 0, %v557
    %v559 = vrot.slane %v555, %v558
    %v564 = vunpack.c.l.b16 %v550
    %v565 = vunpack.c.l.b16 %v551
    %v566 = vunpack.c.l.b16 %v552
    %v567 = vunpack.c.l.b16 %v553
    %v568 = vpack.c.b16 %v565, %v564
    %v569 = vpack.c.b16 %v567, %v566
    %v573 = vsel %vm87, %v548, 0
    %575 = vmatprep.subr.bf16.mxu0 0
    %576 = vmatpush1.bf16.msra.mxu0 0
    %577 = vmatprep.subr.bf16.mxu0 0
    %578 = vmatpush1.bf16.msra.mxu0 0
    %579 = vmatprep.subr.bf16.mxu0 0
    %580 = vmatpush1.bf16.msra.mxu0 0
    %581 = vmatprep.subr.bf16.mxu0 0
    %582 = vmatpush1.bf16.msra.mxu0 0
    %583 = vmatprep.subr.bf16.mxu0 0
    %584 = vmatpush1.bf16.msra.mxu0 0
    %585 = vmatprep.subr.bf16.mxu0 0
    %586 = vmatpush1.bf16.msra.mxu0 0
    %587 = vmatprep.subr.bf16.mxu0 0
    %588 = vmatpush1.bf16.msra.mxu0 %v569
    %589 = vmatprep.subr.bf16.mxu0 0
    %590 = vmatpush1.bf16.msra.mxu0 %v568
    %591 = vmatprep.subr.bf16.mxu0 0
    %592 = vmatpush2.bf16.msra.mxu0 0
    %593 = vmatprep.subr.bf16.mxu0 0
    %594 = vmatpush2.bf16.msra.mxu0 0
    %595 = vmatprep.subr.bf16.mxu0 0
    %596 = vmatpush2.bf16.msra.mxu0 0
    %597 = vmatprep.subr.bf16.mxu0 0
    %598 = vmatpush2.bf16.msra.mxu0 0
    %599 = vmatprep.subr.bf16.mxu0 0
    %600 = vmatpush2.bf16.msra.mxu0 0
    %601 = vmatprep.subr.bf16.mxu0 0
    %602 = vmatpush2.bf16.msra.mxu0 0
    %603 = vmatprep.subr.bf16.mxu0 0
    %604 = vmatpush2.bf16.msra.mxu0 0
    %605 = vmatprep.subr.bf16.mxu0 0
    %606 = vmatpush2.bf16.msra.mxu0 0
    %607 = vmatprep.mubr.bf16.mxu0 0
    %608 = vmatmul.mubr.bf16.gmra.mxu0 %v573
    %v609 = vpop.f32.mrf.mxu0
    %v610 = vadd.f32 %v559, %v609
    %v611 = vpop.f32.mrf.mxu0
    %v612 = vpop.f32.mrf.mxu0
    %v613 = vadd.f32 %v559, %v612
    %v614 = vpop.f32.mrf.mxu0
    %615 = vdwg.mxu0
    %vm616 = vcmp.ge.f32.partialorder %v610, 0.0
    %vm617 = vcmp.ge.f32.partialorder %v613, 0.0
    %v618 = vmul.f32 %v610, 0.05
    %v619 = vmul.f32 %v613, 0.05
    %v620 = vsel %vm616, %v610, %v618
    %v621 = vsel %vm617, %v613, %v619
    %622 = vadd.xlane.f32.xlu0 %v620
    %v623 = vpop.xlane.xlu0 %622
    %624 = vadd.xlane.f32.xlu0 %v621
    %v625 = vpop.xlane.xlu0 %624
    %v626 = vmul.f32 %v623, 0.008333334
    %v627 = vmul.f32 %v625, 0.008333334
    %v628 = vsub.f32 %v620, %v626
    %v629 = vsub.f32 %v621, %v627
    %v630 = vmul.f32 %v628, %v628
    %v631 = vmul.f32 %v629, %v629
    %632 = vadd.xlane.f32.xlu0 %v630
    %v633 = vpop.xlane.xlu0 %632
    %634 = vadd.xlane.f32.xlu0 %v631
    %v635 = vpop.xlane.xlu0 %634
    %v636 = vmul.f32 %v626, 8.0
    %v637 = vmul.f32 %v627, 8.0
    %v638 = vmul.f32 %v636, %v626
    %v639 = vmul.f32 %v637, %v627
    %v640 = vsub.f32 %v633, %v638
    %v641 = vsub.f32 %v635, %v639
    %v642 = vmul.f32 %v640, 0.008333334
    %v643 = vmul.f32 %v641, 0.008333334
    %v644 = vadd.f32 %v642, 1e-05
    %v645 = vadd.f32 %v643, 1e-05
    %v646 = vrsqrt.pop %v644
    %v647 = vrsqrt.pop %v645
    %v648 = vmul.f32 %v628, %v646
    %v649 = vmul.f32 %v629, %v647
    %v650 = vld [vmem:[%s554 + $0x1] sm:$0x1]
    %v651 = vlaneseq
    %v652 = vshrl.u32 %v651, 7
    %v653 = vsub.s32 0, %v652
    %v654 = vrot.slane %v650, %v653
    %v655 = vmul.f32 %v648, %v654
    %v656 = vmul.f32 %v649, %v654
    %v657 = vadd.f32 %v543, %v655
    %v658 = vadd.f32 %v544, %v656
    %v659 = vld [vmem:[%s554 + $0x2] sm:$0x1]
    %v660 = vlaneseq
    %v661 = vshrl.u32 %v660, 7
    %v662 = vsub.s32 0, %v661
    %v663 = vrot.slane %v659, %v662
    %v664 = vadd.f32 %v657, %v663
    %v665 = vadd.f32 %v658, %v663
    %s666 = scalar_lea.vmem %s0, 80
    %v667 = vld [vmem:[%s666] sm:$0xff]
    %v668 = vld [vmem:[%s666 + $0x8] sm:$0xff]
    %v669 = vpack.c.bf16 %v668, %v667
    %s670 = scalar_lea.vmem %s3, 80
    %v671 = vld [vmem:[%s670] sm:$0xf]
    %v672 = vld [vmem:[%s670 + $0x4] sm:$0xf]
    %v673 = vld [vmem:[%s670 + $0x8] sm:$0xf]
    %v674 = vld [vmem:[%s670 + $0xc] sm:$0xf]
    %s675 = scalar_lea.vmem %s5, 20
    %v676 = vld [vmem:[%s675] sm:$0x1]
    %v677 = vlaneseq
    %v678 = vshrl.u32 %v677, 7
    %v679 = vsub.s32 0, %v678
    %v680 = vrot.slane %v676, %v679
    %v685 = vunpack.c.l.b16 %v671
    %v686 = vunpack.c.l.b16 %v672
    %v687 = vunpack.c.l.b16 %v673
    %v688 = vunpack.c.l.b16 %v674
    %v689 = vpack.c.b16 %v686, %v685
    %v690 = vpack.c.b16 %v688, %v687
    %v694 = vsel %vm87, %v669, 0
    %696 = vmatprep.subr.bf16.mxu0 0
    %697 = vmatpush1.bf16.msra.mxu0 0
    %698 = vmatprep.subr.bf16.mxu0 0
    %699 = vmatpush1.bf16.msra.mxu0 0
    %700 = vmatprep.subr.bf16.mxu0 0
    %701 = vmatpush1.bf16.msra.mxu0 0
    %702 = vmatprep.subr.bf16.mxu0 0
    %703 = vmatpush1.bf16.msra.mxu0 0
    %704 = vmatprep.subr.bf16.mxu0 0
    %705 = vmatpush1.bf16.msra.mxu0 0
    %706 = vmatprep.subr.bf16.mxu0 0
    %707 = vmatpush1.bf16.msra.mxu0 0
    %708 = vmatprep.subr.bf16.mxu0 0
    %709 = vmatpush1.bf16.msra.mxu0 %v690
    %710 = vmatprep.subr.bf16.mxu0 0
    %711 = vmatpush1.bf16.msra.mxu0 %v689
    %712 = vmatprep.subr.bf16.mxu0 0
    %713 = vmatpush2.bf16.msra.mxu0 0
    %714 = vmatprep.subr.bf16.mxu0 0
    %715 = vmatpush2.bf16.msra.mxu0 0
    %716 = vmatprep.subr.bf16.mxu0 0
    %717 = vmatpush2.bf16.msra.mxu0 0
    %718 = vmatprep.subr.bf16.mxu0 0
    %719 = vmatpush2.bf16.msra.mxu0 0
    %720 = vmatprep.subr.bf16.mxu0 0
    %721 = vmatpush2.bf16.msra.mxu0 0
    %722 = vmatprep.subr.bf16.mxu0 0
    %723 = vmatpush2.bf16.msra.mxu0 0
    %724 = vmatprep.subr.bf16.mxu0 0
    %725 = vmatpush2.bf16.msra.mxu0 0
    %726 = vmatprep.subr.bf16.mxu0 0
    %727 = vmatpush2.bf16.msra.mxu0 0
    %728 = vmatprep.mubr.bf16.mxu0 0
    %729 = vmatmul.mubr.bf16.gmra.mxu0 %v694
    %v730 = vpop.f32.mrf.mxu0
    %v731 = vadd.f32 %v680, %v730
    %v732 = vpop.f32.mrf.mxu0
    %v733 = vpop.f32.mrf.mxu0
    %v734 = vadd.f32 %v680, %v733
    %v735 = vpop.f32.mrf.mxu0
    %736 = vdwg.mxu0
    %vm737 = vcmp.ge.f32.partialorder %v731, 0.0
    %vm738 = vcmp.ge.f32.partialorder %v734, 0.0
    %v739 = vmul.f32 %v731, 0.05
    %v740 = vmul.f32 %v734, 0.05
    %v741 = vsel %vm737, %v731, %v739
    %v742 = vsel %vm738, %v734, %v740
    %743 = vadd.xlane.f32.xlu0 %v741
    %v744 = vpop.xlane.xlu0 %743
    %745 = vadd.xlane.f32.xlu0 %v742
    %v746 = vpop.xlane.xlu0 %745
    %v747 = vmul.f32 %v744, 0.008333334
    %v748 = vmul.f32 %v746, 0.008333334
    %v749 = vsub.f32 %v741, %v747
    %v750 = vsub.f32 %v742, %v748
    %v751 = vmul.f32 %v749, %v749
    %v752 = vmul.f32 %v750, %v750
    %753 = vadd.xlane.f32.xlu0 %v751
    %v754 = vpop.xlane.xlu0 %753
    %755 = vadd.xlane.f32.xlu0 %v752
    %v756 = vpop.xlane.xlu0 %755
    %v757 = vmul.f32 %v747, 8.0
    %v758 = vmul.f32 %v748, 8.0
    %v759 = vmul.f32 %v757, %v747
    %v760 = vmul.f32 %v758, %v748
    %v761 = vsub.f32 %v754, %v759
    %v762 = vsub.f32 %v756, %v760
    %v763 = vmul.f32 %v761, 0.008333334
    %v764 = vmul.f32 %v762, 0.008333334
    %v765 = vadd.f32 %v763, 1e-05
    %v766 = vadd.f32 %v764, 1e-05
    %v767 = vrsqrt.pop %v765
    %v768 = vrsqrt.pop %v766
    %v769 = vmul.f32 %v749, %v767
    %v770 = vmul.f32 %v750, %v768
    %v771 = vld [vmem:[%s675 + $0x1] sm:$0x1]
    %v772 = vlaneseq
    %v773 = vshrl.u32 %v772, 7
    %v774 = vsub.s32 0, %v773
    %v775 = vrot.slane %v771, %v774
    %v776 = vmul.f32 %v769, %v775
    %v777 = vmul.f32 %v770, %v775
    %v778 = vadd.f32 %v664, %v776
    %v779 = vadd.f32 %v665, %v777
    %v780 = vld [vmem:[%s675 + $0x2] sm:$0x1]
    %v781 = vlaneseq
    %v782 = vshrl.u32 %v781, 7
    %v783 = vsub.s32 0, %v782
    %v784 = vrot.slane %v780, %v783
    %v785 = vadd.f32 %v778, %v784
    %v786 = vadd.f32 %v779, %v784
    %v787 = vld [vmem:[%s1] sm:$0xff]
    %v788 = vld [vmem:[%s1 + $0x8] sm:$0xff]
    %v789 = vpack.c.bf16 %v788, %v787
    %v790 = vld [vmem:[%s4] sm:$0xf]
    %v791 = vld [vmem:[%s4 + $0x4] sm:$0xf]
    %v792 = vld [vmem:[%s4 + $0x8] sm:$0xf]
    %v793 = vld [vmem:[%s4 + $0xc] sm:$0xf]
    %v794 = vld [vmem:[%s6] sm:$0x1]
    %v795 = vlaneseq
    %v796 = vshrl.u32 %v795, 7
    %v797 = vsub.s32 0, %v796
    %v798 = vrot.slane %v794, %v797
    %v803 = vunpack.c.l.b16 %v790
    %v804 = vunpack.c.l.b16 %v791
    %v805 = vunpack.c.l.b16 %v792
    %v806 = vunpack.c.l.b16 %v793
    %v807 = vpack.c.b16 %v804, %v803
    %v808 = vpack.c.b16 %v806, %v805
    %v812 = vsel %vm87, %v789, 0
    %814 = vmatprep.subr.bf16.mxu0 0
    %815 = vmatpush1.bf16.msra.mxu0 0
    %816 = vmatprep.subr.bf16.mxu0 0
    %817 = vmatpush1.bf16.msra.mxu0 0
    %818 = vmatprep.subr.bf16.mxu0 0
    %819 = vmatpush1.bf16.msra.mxu0 0
    %820 = vmatprep.subr.bf16.mxu0 0
    %821 = vmatpush1.bf16.msra.mxu0 0
    %822 = vmatprep.subr.bf16.mxu0 0
    %823 = vmatpush1.bf16.msra.mxu0 0
    %824 = vmatprep.subr.bf16.mxu0 0
    %825 = vmatpush1.bf16.msra.mxu0 0
    %826 = vmatprep.subr.bf16.mxu0 0
    %827 = vmatpush1.bf16.msra.mxu0 %v808
    %828 = vmatprep.subr.bf16.mxu0 0
    %829 = vmatpush1.bf16.msra.mxu0 %v807
    %830 = vmatprep.subr.bf16.mxu0 0
    %831 = vmatpush2.bf16.msra.mxu0 0
    %832 = vmatprep.subr.bf16.mxu0 0
    %833 = vmatpush2.bf16.msra.mxu0 0
    %834 = vmatprep.subr.bf16.mxu0 0
    %835 = vmatpush2.bf16.msra.mxu0 0
    %836 = vmatprep.subr.bf16.mxu0 0
    %837 = vmatpush2.bf16.msra.mxu0 0
    %838 = vmatprep.subr.bf16.mxu0 0
    %839 = vmatpush2.bf16.msra.mxu0 0
    %840 = vmatprep.subr.bf16.mxu0 0
    %841 = vmatpush2.bf16.msra.mxu0 0
    %842 = vmatprep.subr.bf16.mxu0 0
    %843 = vmatpush2.bf16.msra.mxu0 0
    %844 = vmatprep.subr.bf16.mxu0 0
    %845 = vmatpush2.bf16.msra.mxu0 0
    %846 = vmatprep.mubr.bf16.mxu0 0
    %847 = vmatmul.mubr.bf16.gmra.mxu0 %v812
    %v848 = vpop.f32.mrf.mxu0
    %v849 = vadd.f32 %v798, %v848
    %v850 = vpop.f32.mrf.mxu0
    %v851 = vpop.f32.mrf.mxu0
    %v852 = vadd.f32 %v798, %v851
    %v853 = vpop.f32.mrf.mxu0
    %854 = vdwg.mxu0
    %vm855 = vcmp.ge.f32.partialorder %v849, 0.0
    %vm856 = vcmp.ge.f32.partialorder %v852, 0.0
    %v857 = vmul.f32 %v849, 0.05
    %v858 = vmul.f32 %v852, 0.05
    %v859 = vsel %vm855, %v849, %v857
    %v860 = vsel %vm856, %v852, %v858
    %861 = vadd.xlane.f32.xlu0 %v859
    %v862 = vpop.xlane.xlu0 %861
    %863 = vadd.xlane.f32.xlu0 %v860
    %v864 = vpop.xlane.xlu0 %863
    %v865 = vmul.f32 %v862, 0.008333334
    %v866 = vmul.f32 %v864, 0.008333334
    %v867 = vsub.f32 %v859, %v865
    %v868 = vsub.f32 %v860, %v866
    %v869 = vmul.f32 %v867, %v867
    %v870 = vmul.f32 %v868, %v868
    %871 = vadd.xlane.f32.xlu0 %v869
    %v872 = vpop.xlane.xlu0 %871
    %873 = vadd.xlane.f32.xlu0 %v870
    %v874 = vpop.xlane.xlu0 %873
    %v875 = vmul.f32 %v865, 8.0
    %v876 = vmul.f32 %v866, 8.0
    %v877 = vmul.f32 %v875, %v865
    %v878 = vmul.f32 %v876, %v866
    %v879 = vsub.f32 %v872, %v877
    %v880 = vsub.f32 %v874, %v878
    %v881 = vmul.f32 %v879, 0.008333334
    %v882 = vmul.f32 %v880, 0.008333334
    %v883 = vadd.f32 %v881, 1e-05
    %v884 = vadd.f32 %v882, 1e-05
    %v885 = vrsqrt.pop %v883
    %v886 = vrsqrt.pop %v884
    %v887 = vmul.f32 %v867, %v885
    %v888 = vmul.f32 %v868, %v886
    %v889 = vld [vmem:[%s6 + $0x1] sm:$0x1]
    %v890 = vlaneseq
    %v891 = vshrl.u32 %v890, 7
    %v892 = vsub.s32 0, %v891
    %v893 = vrot.slane %v889, %v892
    %v894 = vmul.f32 %v887, %v893
    %v895 = vmul.f32 %v888, %v893
    %v896 = vadd.f32 %v894, 0.0
    %v897 = vadd.f32 %v895, 0.0
    %v898 = vld [vmem:[%s6 + $0x2] sm:$0x1]
    %v899 = vlaneseq
    %v900 = vshrl.u32 %v899, 7
    %v901 = vsub.s32 0, %v900
    %v902 = vrot.slane %v898, %v901
    %v903 = vadd.f32 %v896, %v902
    %v904 = vadd.f32 %v897, %v902
    %s905 = scalar_lea.vmem %s1, 16
    %v906 = vld [vmem:[%s905] sm:$0xff]
    %v907 = vld [vmem:[%s905 + $0x8] sm:$0xff]
    %v908 = vpack.c.bf16 %v907, %v906
    %s909 = scalar_lea.vmem %s4, 16
    %v910 = vld [vmem:[%s909] sm:$0xf]
    %v911 = vld [vmem:[%s909 + $0x4] sm:$0xf]
    %v912 = vld [vmem:[%s909 + $0x8] sm:$0xf]
    %v913 = vld [vmem:[%s909 + $0xc] sm:$0xf]
    %s914 = scalar_lea.vmem %s6, 4
    %v915 = vld [vmem:[%s914] sm:$0x1]
    %v916 = vlaneseq
    %v917 = vshrl.u32 %v916, 7
    %v918 = vsub.s32 0, %v917
    %v919 = vrot.slane %v915, %v918
    %v924 = vunpack.c.l.b16 %v910
    %v925 = vunpack.c.l.b16 %v911
    %v926 = vunpack.c.l.b16 %v912
    %v927 = vunpack.c.l.b16 %v913
    %v928 = vpack.c.b16 %v925, %v924
    %v929 = vpack.c.b16 %v927, %v926
    %v933 = vsel %vm87, %v908, 0
    %935 = vmatprep.subr.bf16.mxu0 0
    %936 = vmatpush1.bf16.msra.mxu0 0
    %937 = vmatprep.subr.bf16.mxu0 0
    %938 = vmatpush1.bf16.msra.mxu0 0
    %939 = vmatprep.subr.bf16.mxu0 0
    %940 = vmatpush1.bf16.msra.mxu0 0
    %941 = vmatprep.subr.bf16.mxu0 0
    %942 = vmatpush1.bf16.msra.mxu0 0
    %943 = vmatprep.subr.bf16.mxu0 0
    %944 = vmatpush1.bf16.msra.mxu0 0
    %945 = vmatprep.subr.bf16.mxu0 0
    %946 = vmatpush1.bf16.msra.mxu0 0
    %947 = vmatprep.subr.bf16.mxu0 0
    %948 = vmatpush1.bf16.msra.mxu0 %v929
    %949 = vmatprep.subr.bf16.mxu0 0
    %950 = vmatpush1.bf16.msra.mxu0 %v928
    %951 = vmatprep.subr.bf16.mxu0 0
    %952 = vmatpush2.bf16.msra.mxu0 0
    %953 = vmatprep.subr.bf16.mxu0 0
    %954 = vmatpush2.bf16.msra.mxu0 0
    %955 = vmatprep.subr.bf16.mxu0 0
    %956 = vmatpush2.bf16.msra.mxu0 0
    %957 = vmatprep.subr.bf16.mxu0 0
    %958 = vmatpush2.bf16.msra.mxu0 0
    %959 = vmatprep.subr.bf16.mxu0 0
    %960 = vmatpush2.bf16.msra.mxu0 0
    %961 = vmatprep.subr.bf16.mxu0 0
    %962 = vmatpush2.bf16.msra.mxu0 0
    %963 = vmatprep.subr.bf16.mxu0 0
    %964 = vmatpush2.bf16.msra.mxu0 0
    %965 = vmatprep.subr.bf16.mxu0 0
    %966 = vmatpush2.bf16.msra.mxu0 0
    %967 = vmatprep.mubr.bf16.mxu0 0
    %968 = vmatmul.mubr.bf16.gmra.mxu0 %v933
    %v969 = vpop.f32.mrf.mxu0
    %v970 = vadd.f32 %v919, %v969
    %v971 = vpop.f32.mrf.mxu0
    %v972 = vpop.f32.mrf.mxu0
    %v973 = vadd.f32 %v919, %v972
    %v974 = vpop.f32.mrf.mxu0
    %975 = vdwg.mxu0
    %vm976 = vcmp.ge.f32.partialorder %v970, 0.0
    %vm977 = vcmp.ge.f32.partialorder %v973, 0.0
    %v978 = vmul.f32 %v970, 0.05
    %v979 = vmul.f32 %v973, 0.05
    %v980 = vsel %vm976, %v970, %v978
    %v981 = vsel %vm977, %v973, %v979
    %982 = vadd.xlane.f32.xlu0 %v980
    %v983 = vpop.xlane.xlu0 %982
    %984 = vadd.xlane.f32.xlu0 %v981
    %v985 = vpop.xlane.xlu0 %984
    %v986 = vmul.f32 %v983, 0.008333334
    %v987 = vmul.f32 %v985, 0.008333334
    %v988 = vsub.f32 %v980, %v986
    %v989 = vsub.f32 %v981, %v987
    %v990 = vmul.f32 %v988, %v988
    %v991 = vmul.f32 %v989, %v989
    %992 = vadd.xlane.f32.xlu0 %v990
    %v993 = vpop.xlane.xlu0 %992
    %994 = vadd.xlane.f32.xlu0 %v991
    %v995 = vpop.xlane.xlu0 %994
    %v996 = vmul.f32 %v986, 8.0
    %v997 = vmul.f32 %v987, 8.0
    %v998 = vmul.f32 %v996, %v986
    %v999 = vmul.f32 %v997, %v987
    %v1000 = vsub.f32 %v993, %v998
    %v1001 = vsub.f32 %v995, %v999
    %v1002 = vmul.f32 %v1000, 0.008333334
    %v1003 = vmul.f32 %v1001, 0.008333334
    %v1004 = vadd.f32 %v1002, 1e-05
    %v1005 = vadd.f32 %v1003, 1e-05
    %v1006 = vrsqrt.pop %v1004
    %v1007 = vrsqrt.pop %v1005
    %v1008 = vmul.f32 %v988, %v1006
    %v1009 = vmul.f32 %v989, %v1007
    %v1010 = vld [vmem:[%s914 + $0x1] sm:$0x1]
    %v1011 = vlaneseq
    %v1012 = vshrl.u32 %v1011, 7
    %v1013 = vsub.s32 0, %v1012
    %v1014 = vrot.slane %v1010, %v1013
    %v1015 = vmul.f32 %v1008, %v1014
    %v1016 = vmul.f32 %v1009, %v1014
    %v1017 = vadd.f32 %v903, %v1015
    %v1018 = vadd.f32 %v904, %v1016
    %v1019 = vld [vmem:[%s914 + $0x2] sm:$0x1]
    %v1020 = vlaneseq
    %v1021 = vshrl.u32 %v1020, 7
    %v1022 = vsub.s32 0, %v1021
    %v1023 = vrot.slane %v1019, %v1022
    %v1024 = vadd.f32 %v1017, %v1023
    %v1025 = vadd.f32 %v1018, %v1023
    %s1026 = scalar_lea.vmem %s1, 32
    %v1027 = vld [vmem:[%s1026] sm:$0xff]
    %v1028 = vld [vmem:[%s1026 + $0x8] sm:$0xff]
    %v1029 = vpack.c.bf16 %v1028, %v1027
    %s1030 = scalar_lea.vmem %s4, 32
    %v1031 = vld [vmem:[%s1030] sm:$0xf]
    %v1032 = vld [vmem:[%s1030 + $0x4] sm:$0xf]
    %v1033 = vld [vmem:[%s1030 + $0x8] sm:$0xf]
    %v1034 = vld [vmem:[%s1030 + $0xc] sm:$0xf]
    %s1035 = scalar_lea.vmem %s6, 8
    %v1036 = vld [vmem:[%s1035] sm:$0x1]
    %v1037 = vlaneseq
    %v1038 = vshrl.u32 %v1037, 7
    %v1039 = vsub.s32 0, %v1038
    %v1040 = vrot.slane %v1036, %v1039
    %v1045 = vunpack.c.l.b16 %v1031
    %v1046 = vunpack.c.l.b16 %v1032
    %v1047 = vunpack.c.l.b16 %v1033
    %v1048 = vunpack.c.l.b16 %v1034
    %v1049 = vpack.c.b16 %v1046, %v1045
    %v1050 = vpack.c.b16 %v1048, %v1047
    %v1054 = vsel %vm87, %v1029, 0
    %1056 = vmatprep.subr.bf16.mxu0 0
    %1057 = vmatpush1.bf16.msra.mxu0 0
    %1058 = vmatprep.subr.bf16.mxu0 0
    %1059 = vmatpush1.bf16.msra.mxu0 0
    %1060 = vmatprep.subr.bf16.mxu0 0
    %1061 = vmatpush1.bf16.msra.mxu0 0
    %1062 = vmatprep.subr.bf16.mxu0 0
    %1063 = vmatpush1.bf16.msra.mxu0 0
    %1064 = vmatprep.subr.bf16.mxu0 0
    %1065 = vmatpush1.bf16.msra.mxu0 0
    %1066 = vmatprep.subr.bf16.mxu0 0
    %1067 = vmatpush1.bf16.msra.mxu0 0
    %1068 = vmatprep.subr.bf16.mxu0 0
    %1069 = vmatpush1.bf16.msra.mxu0 %v1050
    %1070 = vmatprep.subr.bf16.mxu0 0
    %1071 = vmatpush1.bf16.msra.mxu0 %v1049
    %1072 = vmatprep.subr.bf16.mxu0 0
    %1073 = vmatpush2.bf16.msra.mxu0 0
    %1074 = vmatprep.subr.bf16.mxu0 0
    %1075 = vmatpush2.bf16.msra.mxu0 0
    %1076 = vmatprep.subr.bf16.mxu0 0
    %1077 = vmatpush2.bf16.msra.mxu0 0
    %1078 = vmatprep.subr.bf16.mxu0 0
    %1079 = vmatpush2.bf16.msra.mxu0 0
    %1080 = vmatprep.subr.bf16.mxu0 0
    %1081 = vmatpush2.bf16.msra.mxu0 0
    %1082 = vmatprep.subr.bf16.mxu0 0
    %1083 = vmatpush2.bf16.msra.mxu0 0
    %1084 = vmatprep.subr.bf16.mxu0 0
    %1085 = vmatpush2.bf16.msra.mxu0 0
    %1086 = vmatprep.subr.bf16.mxu0 0
    %1087 = vmatpush2.bf16.msra.mxu0 0
    %1088 = vmatprep.mubr.bf16.mxu0 0
    %1089 = vmatmul.mubr.bf16.gmra.mxu0 %v1054
    %v1090 = vpop.f32.mrf.mxu0
    %v1091 = vadd.f32 %v1040, %v1090
    %v1092 = vpop.f32.mrf.mxu0
    %v1093 = vpop.f32.mrf.mxu0
    %v1094 = vadd.f32 %v1040, %v1093
    %v1095 = vpop.f32.mrf.mxu0
    %1096 = vdwg.mxu0
    %vm1097 = vcmp.ge.f32.partialorder %v1091, 0.0
    %vm1098 = vcmp.ge.f32.partialorder %v1094, 0.0
    %v1099 = vmul.f32 %v1091, 0.05
    %v1100 = vmul.f32 %v1094, 0.05
    %v1101 = vsel %vm1097, %v1091, %v1099
    %v1102 = vsel %vm1098, %v1094, %v1100
    %1103 = vadd.xlane.f32.xlu0 %v1101
    %v1104 = vpop.xlane.xlu0 %1103
    %1105 = vadd.xlane.f32.xlu0 %v1102
    %v1106 = vpop.xlane.xlu0 %1105
    %v1107 = vmul.f32 %v1104, 0.008333334
    %v1108 = vmul.f32 %v1106, 0.008333334
    %v1109 = vsub.f32 %v1101, %v1107
    %v1110 = vsub.f32 %v1102, %v1108
    %v1111 = vmul.f32 %v1109, %v1109
    %v1112 = vmul.f32 %v1110, %v1110
    %1113 = vadd.xlane.f32.xlu0 %v1111
    %v1114 = vpop.xlane.xlu0 %1113
    %1115 = vadd.xlane.f32.xlu0 %v1112
    %v1116 = vpop.xlane.xlu0 %1115
    %v1117 = vmul.f32 %v1107, 8.0
    %v1118 = vmul.f32 %v1108, 8.0
    %v1119 = vmul.f32 %v1117, %v1107
    %v1120 = vmul.f32 %v1118, %v1108
    %v1121 = vsub.f32 %v1114, %v1119
    %v1122 = vsub.f32 %v1116, %v1120
    %v1123 = vmul.f32 %v1121, 0.008333334
    %v1124 = vmul.f32 %v1122, 0.008333334
    %v1125 = vadd.f32 %v1123, 1e-05
    %v1126 = vadd.f32 %v1124, 1e-05
    %v1127 = vrsqrt.pop %v1125
    %v1128 = vrsqrt.pop %v1126
    %v1129 = vmul.f32 %v1109, %v1127
    %v1130 = vmul.f32 %v1110, %v1128
    %v1131 = vld [vmem:[%s1035 + $0x1] sm:$0x1]
    %v1132 = vlaneseq
    %v1133 = vshrl.u32 %v1132, 7
    %v1134 = vsub.s32 0, %v1133
    %v1135 = vrot.slane %v1131, %v1134
    %v1136 = vmul.f32 %v1129, %v1135
    %v1137 = vmul.f32 %v1130, %v1135
    %v1138 = vadd.f32 %v1024, %v1136
    %v1139 = vadd.f32 %v1025, %v1137
    %v1140 = vld [vmem:[%s1035 + $0x2] sm:$0x1]
    %v1141 = vlaneseq
    %v1142 = vshrl.u32 %v1141, 7
    %v1143 = vsub.s32 0, %v1142
    %v1144 = vrot.slane %v1140, %v1143
    %v1145 = vadd.f32 %v1138, %v1144
    %v1146 = vadd.f32 %v1139, %v1144
    %s1147 = scalar_lea.vmem %s1, 48
    %v1148 = vld [vmem:[%s1147] sm:$0xff]
    %v1149 = vld [vmem:[%s1147 + $0x8] sm:$0xff]
    %v1150 = vpack.c.bf16 %v1149, %v1148
    %s1151 = scalar_lea.vmem %s4, 48
    %v1152 = vld [vmem:[%s1151] sm:$0xf]
    %v1153 = vld [vmem:[%s1151 + $0x4] sm:$0xf]
    %v1154 = vld [vmem:[%s1151 + $0x8] sm:$0xf]
    %v1155 = vld [vmem:[%s1151 + $0xc] sm:$0xf]
    %s1156 = scalar_lea.vmem %s6, 12
    %v1157 = vld [vmem:[%s1156] sm:$0x1]
    %v1158 = vlaneseq
    %v1159 = vshrl.u32 %v1158, 7
    %v1160 = vsub.s32 0, %v1159
    %v1161 = vrot.slane %v1157, %v1160
    %v1166 = vunpack.c.l.b16 %v1152
    %v1167 = vunpack.c.l.b16 %v1153
    %v1168 = vunpack.c.l.b16 %v1154
    %v1169 = vunpack.c.l.b16 %v1155
    %v1170 = vpack.c.b16 %v1167, %v1166
    %v1171 = vpack.c.b16 %v1169, %v1168
    %v1175 = vsel %vm87, %v1150, 0
    %1177 = vmatprep.subr.bf16.mxu0 0
    %1178 = vmatpush1.bf16.msra.mxu0 0
    %1179 = vmatprep.subr.bf16.mxu0 0
    %1180 = vmatpush1.bf16.msra.mxu0 0
    %1181 = vmatprep.subr.bf16.mxu0 0
    %1182 = vmatpush1.bf16.msra.mxu0 0
    %1183 = vmatprep.subr.bf16.mxu0 0
    %1184 = vmatpush1.bf16.msra.mxu0 0
    %1185 = vmatprep.subr.bf16.mxu0 0
    %1186 = vmatpush1.bf16.msra.mxu0 0
    %1187 = vmatprep.subr.bf16.mxu0 0
    %1188 = vmatpush1.bf16.msra.mxu0 0
    %1189 = vmatprep.subr.bf16.mxu0 0
    %1190 = vmatpush1.bf16.msra.mxu0 %v1171
    %1191 = vmatprep.subr.bf16.mxu0 0
    %1192 = vmatpush1.bf16.msra.mxu0 %v1170
    %1193 = vmatprep.subr.bf16.mxu0 0
    %1194 = vmatpush2.bf16.msra.mxu0 0
    %1195 = vmatprep.subr.bf16.mxu0 0
    %1196 = vmatpush2.bf16.msra.mxu0 0
    %1197 = vmatprep.subr.bf16.mxu0 0
    %1198 = vmatpush2.bf16.msra.mxu0 0
    %1199 = vmatprep.subr.bf16.mxu0 0
    %1200 = vmatpush2.bf16.msra.mxu0 0
    %1201 = vmatprep.subr.bf16.mxu0 0
    %1202 = vmatpush2.bf16.msra.mxu0 0
    %1203 = vmatprep.subr.bf16.mxu0 0
    %1204 = vmatpush2.bf16.msra.mxu0 0
    %1205 = vmatprep.subr.bf16.mxu0 0
    %1206 = vmatpush2.bf16.msra.mxu0 0
    %1207 = vmatprep.subr.bf16.mxu0 0
    %1208 = vmatpush2.bf16.msra.mxu0 0
    %1209 = vmatprep.mubr.bf16.mxu0 0
    %1210 = vmatmul.mubr.bf16.gmra.mxu0 %v1175
    %v1211 = vpop.f32.mrf.mxu0
    %v1212 = vadd.f32 %v1161, %v1211
    %v1213 = vpop.f32.mrf.mxu0
    %v1214 = vpop.f32.mrf.mxu0
    %v1215 = vadd.f32 %v1161, %v1214
    %v1216 = vpop.f32.mrf.mxu0
    %1217 = vdwg.mxu0
    %vm1218 = vcmp.ge.f32.partialorder %v1212, 0.0
    %vm1219 = vcmp.ge.f32.partialorder %v1215, 0.0
    %v1220 = vmul.f32 %v1212, 0.05
    %v1221 = vmul.f32 %v1215, 0.05
    %v1222 = vsel %vm1218, %v1212, %v1220
    %v1223 = vsel %vm1219, %v1215, %v1221
    %1224 = vadd.xlane.f32.xlu0 %v1222
    %v1225 = vpop.xlane.xlu0 %1224
    %1226 = vadd.xlane.f32.xlu0 %v1223
    %v1227 = vpop.xlane.xlu0 %1226
    %v1228 = vmul.f32 %v1225, 0.008333334
    %v1229 = vmul.f32 %v1227, 0.008333334
    %v1230 = vsub.f32 %v1222, %v1228
    %v1231 = vsub.f32 %v1223, %v1229
    %v1232 = vmul.f32 %v1230, %v1230
    %v1233 = vmul.f32 %v1231, %v1231
    %1234 = vadd.xlane.f32.xlu0 %v1232
    %v1235 = vpop.xlane.xlu0 %1234
    %1236 = vadd.xlane.f32.xlu0 %v1233
    %v1237 = vpop.xlane.xlu0 %1236
    %v1238 = vmul.f32 %v1228, 8.0
    %v1239 = vmul.f32 %v1229, 8.0
    %v1240 = vmul.f32 %v1238, %v1228
    %v1241 = vmul.f32 %v1239, %v1229
    %v1242 = vsub.f32 %v1235, %v1240
    %v1243 = vsub.f32 %v1237, %v1241
    %v1244 = vmul.f32 %v1242, 0.008333334
    %v1245 = vmul.f32 %v1243, 0.008333334
    %v1246 = vadd.f32 %v1244, 1e-05
    %v1247 = vadd.f32 %v1245, 1e-05
    %v1248 = vrsqrt.pop %v1246
    %v1249 = vrsqrt.pop %v1247
    %v1250 = vmul.f32 %v1230, %v1248
    %v1251 = vmul.f32 %v1231, %v1249
    %v1252 = vld [vmem:[%s1156 + $0x1] sm:$0x1]
    %v1253 = vlaneseq
    %v1254 = vshrl.u32 %v1253, 7
    %v1255 = vsub.s32 0, %v1254
    %v1256 = vrot.slane %v1252, %v1255
    %v1257 = vmul.f32 %v1250, %v1256
    %v1258 = vmul.f32 %v1251, %v1256
    %v1259 = vadd.f32 %v1145, %v1257
    %v1260 = vadd.f32 %v1146, %v1258
    %v1261 = vld [vmem:[%s1156 + $0x2] sm:$0x1]
    %v1262 = vlaneseq
    %v1263 = vshrl.u32 %v1262, 7
    %v1264 = vsub.s32 0, %v1263
    %v1265 = vrot.slane %v1261, %v1264
    %v1266 = vadd.f32 %v1259, %v1265
    %v1267 = vadd.f32 %v1260, %v1265
    %s1268 = scalar_lea.vmem %s1, 64
    %v1269 = vld [vmem:[%s1268] sm:$0xff]
    %v1270 = vld [vmem:[%s1268 + $0x8] sm:$0xff]
    %v1271 = vpack.c.bf16 %v1270, %v1269
    %s1272 = scalar_lea.vmem %s4, 64
    %v1273 = vld [vmem:[%s1272] sm:$0xf]
    %v1274 = vld [vmem:[%s1272 + $0x4] sm:$0xf]
    %v1275 = vld [vmem:[%s1272 + $0x8] sm:$0xf]
    %v1276 = vld [vmem:[%s1272 + $0xc] sm:$0xf]
    %s1277 = scalar_lea.vmem %s6, 16
    %v1278 = vld [vmem:[%s1277] sm:$0x1]
    %v1279 = vlaneseq
    %v1280 = vshrl.u32 %v1279, 7
    %v1281 = vsub.s32 0, %v1280
    %v1282 = vrot.slane %v1278, %v1281
    %v1287 = vunpack.c.l.b16 %v1273
    %v1288 = vunpack.c.l.b16 %v1274
    %v1289 = vunpack.c.l.b16 %v1275
    %v1290 = vunpack.c.l.b16 %v1276
    %v1291 = vpack.c.b16 %v1288, %v1287
    %v1292 = vpack.c.b16 %v1290, %v1289
    %v1296 = vsel %vm87, %v1271, 0
    %1298 = vmatprep.subr.bf16.mxu0 0
    %1299 = vmatpush1.bf16.msra.mxu0 0
    %1300 = vmatprep.subr.bf16.mxu0 0
    %1301 = vmatpush1.bf16.msra.mxu0 0
    %1302 = vmatprep.subr.bf16.mxu0 0
    %1303 = vmatpush1.bf16.msra.mxu0 0
    %1304 = vmatprep.subr.bf16.mxu0 0
    %1305 = vmatpush1.bf16.msra.mxu0 0
    %1306 = vmatprep.subr.bf16.mxu0 0
    %1307 = vmatpush1.bf16.msra.mxu0 0
    %1308 = vmatprep.subr.bf16.mxu0 0
    %1309 = vmatpush1.bf16.msra.mxu0 0
    %1310 = vmatprep.subr.bf16.mxu0 0
    %1311 = vmatpush1.bf16.msra.mxu0 %v1292
    %1312 = vmatprep.subr.bf16.mxu0 0
    %1313 = vmatpush1.bf16.msra.mxu0 %v1291
    %1314 = vmatprep.subr.bf16.mxu0 0
    %1315 = vmatpush2.bf16.msra.mxu0 0
    %1316 = vmatprep.subr.bf16.mxu0 0
    %1317 = vmatpush2.bf16.msra.mxu0 0
    %1318 = vmatprep.subr.bf16.mxu0 0
    %1319 = vmatpush2.bf16.msra.mxu0 0
    %1320 = vmatprep.subr.bf16.mxu0 0
    %1321 = vmatpush2.bf16.msra.mxu0 0
    %1322 = vmatprep.subr.bf16.mxu0 0
    %1323 = vmatpush2.bf16.msra.mxu0 0
    %1324 = vmatprep.subr.bf16.mxu0 0
    %1325 = vmatpush2.bf16.msra.mxu0 0
    %1326 = vmatprep.subr.bf16.mxu0 0
    %1327 = vmatpush2.bf16.msra.mxu0 0
    %1328 = vmatprep.subr.bf16.mxu0 0
    %1329 = vmatpush2.bf16.msra.mxu0 0
    %1330 = vmatprep.mubr.bf16.mxu0 0
    %1331 = vmatmul.mubr.bf16.gmra.mxu0 %v1296
    %v1332 = vpop.f32.mrf.mxu0
    %v1333 = vadd.f32 %v1282, %v1332
    %v1334 = vpop.f32.mrf.mxu0
    %v1335 = vpop.f32.mrf.mxu0
    %v1336 = vadd.f32 %v1282, %v1335
    %v1337 = vpop.f32.mrf.mxu0
    %1338 = vdwg.mxu0
    %vm1339 = vcmp.ge.f32.partialorder %v1333, 0.0
    %vm1340 = vcmp.ge.f32.partialorder %v1336, 0.0
    %v1341 = vmul.f32 %v1333, 0.05
    %v1342 = vmul.f32 %v1336, 0.05
    %v1343 = vsel %vm1339, %v1333, %v1341
    %v1344 = vsel %vm1340, %v1336, %v1342
    %1345 = vadd.xlane.f32.xlu0 %v1343
    %v1346 = vpop.xlane.xlu0 %1345
    %1347 = vadd.xlane.f32.xlu0 %v1344
    %v1348 = vpop.xlane.xlu0 %1347
    %v1349 = vmul.f32 %v1346, 0.008333334
    %v1350 = vmul.f32 %v1348, 0.008333334
    %v1351 = vsub.f32 %v1343, %v1349
    %v1352 = vsub.f32 %v1344, %v1350
    %v1353 = vmul.f32 %v1351, %v1351
    %v1354 = vmul.f32 %v1352, %v1352
    %1355 = vadd.xlane.f32.xlu0 %v1353
    %v1356 = vpop.xlane.xlu0 %1355
    %1357 = vadd.xlane.f32.xlu0 %v1354
    %v1358 = vpop.xlane.xlu0 %1357
    %v1359 = vmul.f32 %v1349, 8.0
    %v1360 = vmul.f32 %v1350, 8.0
    %v1361 = vmul.f32 %v1359, %v1349
    %v1362 = vmul.f32 %v1360, %v1350
    %v1363 = vsub.f32 %v1356, %v1361
    %v1364 = vsub.f32 %v1358, %v1362
    %v1365 = vmul.f32 %v1363, 0.008333334
    %v1366 = vmul.f32 %v1364, 0.008333334
    %v1367 = vadd.f32 %v1365, 1e-05
    %v1368 = vadd.f32 %v1366, 1e-05
    %v1369 = vrsqrt.pop %v1367
    %v1370 = vrsqrt.pop %v1368
    %v1371 = vmul.f32 %v1351, %v1369
    %v1372 = vmul.f32 %v1352, %v1370
    %v1373 = vld [vmem:[%s1277 + $0x1] sm:$0x1]
    %v1374 = vlaneseq
    %v1375 = vshrl.u32 %v1374, 7
    %v1376 = vsub.s32 0, %v1375
    %v1377 = vrot.slane %v1373, %v1376
    %v1378 = vmul.f32 %v1371, %v1377
    %v1379 = vmul.f32 %v1372, %v1377
    %v1380 = vadd.f32 %v1266, %v1378
    %v1381 = vadd.f32 %v1267, %v1379
    %v1382 = vld [vmem:[%s1277 + $0x2] sm:$0x1]
    %v1383 = vlaneseq
    %v1384 = vshrl.u32 %v1383, 7
    %v1385 = vsub.s32 0, %v1384
    %v1386 = vrot.slane %v1382, %v1385
    %v1387 = vadd.f32 %v1380, %v1386
    %v1388 = vadd.f32 %v1381, %v1386
    %s1389 = scalar_lea.vmem %s1, 80
    %v1390 = vld [vmem:[%s1389] sm:$0xff]
    %v1391 = vld [vmem:[%s1389 + $0x8] sm:$0xff]
    %v1392 = vpack.c.bf16 %v1391, %v1390
    %s1393 = scalar_lea.vmem %s4, 80
    %v1394 = vld [vmem:[%s1393] sm:$0xf]
    %v1395 = vld [vmem:[%s1393 + $0x4] sm:$0xf]
    %v1396 = vld [vmem:[%s1393 + $0x8] sm:$0xf]
    %v1397 = vld [vmem:[%s1393 + $0xc] sm:$0xf]
    %s1398 = scalar_lea.vmem %s6, 20
    %v1399 = vld [vmem:[%s1398] sm:$0x1]
    %v1400 = vlaneseq
    %v1401 = vshrl.u32 %v1400, 7
    %v1402 = vsub.s32 0, %v1401
    %v1403 = vrot.slane %v1399, %v1402
    %v1408 = vunpack.c.l.b16 %v1394
    %v1409 = vunpack.c.l.b16 %v1395
    %v1410 = vunpack.c.l.b16 %v1396
    %v1411 = vunpack.c.l.b16 %v1397
    %v1412 = vpack.c.b16 %v1409, %v1408
    %v1413 = vpack.c.b16 %v1411, %v1410
    %v1417 = vsel %vm87, %v1392, 0
    %1419 = vmatprep.subr.bf16.mxu0 0
    %1420 = vmatpush1.bf16.msra.mxu0 0
    %1421 = vmatprep.subr.bf16.mxu0 0
    %1422 = vmatpush1.bf16.msra.mxu0 0
    %1423 = vmatprep.subr.bf16.mxu0 0
    %1424 = vmatpush1.bf16.msra.mxu0 0
    %1425 = vmatprep.subr.bf16.mxu0 0
    %1426 = vmatpush1.bf16.msra.mxu0 0
    %1427 = vmatprep.subr.bf16.mxu0 0
    %1428 = vmatpush1.bf16.msra.mxu0 0
    %1429 = vmatprep.subr.bf16.mxu0 0
    %1430 = vmatpush1.bf16.msra.mxu0 0
    %1431 = vmatprep.subr.bf16.mxu0 0
    %1432 = vmatpush1.bf16.msra.mxu0 %v1413
    %1433 = vmatprep.subr.bf16.mxu0 0
    %1434 = vmatpush1.bf16.msra.mxu0 %v1412
    %1435 = vmatprep.subr.bf16.mxu0 0
    %1436 = vmatpush2.bf16.msra.mxu0 0
    %1437 = vmatprep.subr.bf16.mxu0 0
    %1438 = vmatpush2.bf16.msra.mxu0 0
    %1439 = vmatprep.subr.bf16.mxu0 0
    %1440 = vmatpush2.bf16.msra.mxu0 0
    %1441 = vmatprep.subr.bf16.mxu0 0
    %1442 = vmatpush2.bf16.msra.mxu0 0
    %1443 = vmatprep.subr.bf16.mxu0 0
    %1444 = vmatpush2.bf16.msra.mxu0 0
    %1445 = vmatprep.subr.bf16.mxu0 0
    %1446 = vmatpush2.bf16.msra.mxu0 0
    %1447 = vmatprep.subr.bf16.mxu0 0
    %1448 = vmatpush2.bf16.msra.mxu0 0
    %1449 = vmatprep.subr.bf16.mxu0 0
    %1450 = vmatpush2.bf16.msra.mxu0 0
    %1451 = vmatprep.mubr.bf16.mxu0 0
    %1452 = vmatmul.mubr.bf16.gmra.mxu0 %v1417
    %v1453 = vpop.f32.mrf.mxu0
    %v1454 = vadd.f32 %v1403, %v1453
    %v1455 = vpop.f32.mrf.mxu0
    %v1456 = vpop.f32.mrf.mxu0
    %v1457 = vadd.f32 %v1403, %v1456
    %v1458 = vpop.f32.mrf.mxu0
    %1459 = vdwg.mxu0
    %vm1460 = vcmp.ge.f32.partialorder %v1454, 0.0
    %vm1461 = vcmp.ge.f32.partialorder %v1457, 0.0
    %v1462 = vmul.f32 %v1454, 0.05
    %v1463 = vmul.f32 %v1457, 0.05
    %v1464 = vsel %vm1460, %v1454, %v1462
    %v1465 = vsel %vm1461, %v1457, %v1463
    %1466 = vadd.xlane.f32.xlu0 %v1464
    %v1467 = vpop.xlane.xlu0 %1466
    %1468 = vadd.xlane.f32.xlu0 %v1465
    %v1469 = vpop.xlane.xlu0 %1468
    %v1470 = vmul.f32 %v1467, 0.008333334
    %v1471 = vmul.f32 %v1469, 0.008333334
    %v1472 = vsub.f32 %v1464, %v1470
    %v1473 = vsub.f32 %v1465, %v1471
    %v1474 = vmul.f32 %v1472, %v1472
    %v1475 = vmul.f32 %v1473, %v1473
    %1476 = vadd.xlane.f32.xlu0 %v1474
    %v1477 = vpop.xlane.xlu0 %1476
    %1478 = vadd.xlane.f32.xlu0 %v1475
    %v1479 = vpop.xlane.xlu0 %1478
    %v1480 = vmul.f32 %v1470, 8.0
    %v1481 = vmul.f32 %v1471, 8.0
    %v1482 = vmul.f32 %v1480, %v1470
    %v1483 = vmul.f32 %v1481, %v1471
    %v1484 = vsub.f32 %v1477, %v1482
    %v1485 = vsub.f32 %v1479, %v1483
    %v1486 = vmul.f32 %v1484, 0.008333334
    %v1487 = vmul.f32 %v1485, 0.008333334
    %v1488 = vadd.f32 %v1486, 1e-05
    %v1489 = vadd.f32 %v1487, 1e-05
    %v1490 = vrsqrt.pop %v1488
    %v1491 = vrsqrt.pop %v1489
    %v1492 = vmul.f32 %v1472, %v1490
    %v1493 = vmul.f32 %v1473, %v1491
    %v1494 = vld [vmem:[%s1398 + $0x1] sm:$0x1]
    %v1495 = vlaneseq
    %v1496 = vshrl.u32 %v1495, 7
    %v1497 = vsub.s32 0, %v1496
    %v1498 = vrot.slane %v1494, %v1497
    %v1499 = vmul.f32 %v1492, %v1498
    %v1500 = vmul.f32 %v1493, %v1498
    %v1501 = vadd.f32 %v1387, %v1499
    %v1502 = vadd.f32 %v1388, %v1500
    %v1503 = vld [vmem:[%s1398 + $0x2] sm:$0x1]
    %v1504 = vlaneseq
    %v1505 = vshrl.u32 %v1504, 7
    %v1506 = vsub.s32 0, %v1505
    %v1507 = vrot.slane %v1503, %v1506
    %v1508 = vadd.f32 %v1501, %v1507
    %v1509 = vadd.f32 %v1502, %v1507
    %v1510 = vld [vmem:[%s7] sm:$0xff]
    %v1511 = vld [vmem:[%s7 + $0x8] sm:$0xff]
    %v1512 = vld [vmem:[%s7 + $0x10] sm:$0xff]
    %v1513 = vld [vmem:[%s7 + $0x18] sm:$0xff]
    %v1514 = vld [vmem:[%s7 + $0x20] sm:$0xff]
    %v1515 = vld [vmem:[%s7 + $0x28] sm:$0xff]
    %v1516 = vld [vmem:[%s7 + $0x30] sm:$0xff]
    %v1517 = vld [vmem:[%s7 + $0x38] sm:$0xff]
    %v1518 = vld [vmem:[%s7 + $0x40] sm:$0xff]
    %v1519 = vld [vmem:[%s7 + $0x48] sm:$0xff]
    %v1520 = vld [vmem:[%s7 + $0x50] sm:$0xff]
    %v1521 = vld [vmem:[%s7 + $0x58] sm:$0xff]
    %v1522 = vld [vmem:[%s7 + $0x60] sm:$0xff]
    %v1523 = vld [vmem:[%s7 + $0x68] sm:$0xff]
    %v1524 = vld [vmem:[%s7 + $0x70] sm:$0xff]
    %v1525 = vld [vmem:[%s7 + $0x78] sm:$0xff]
    %v1526 = vld [vmem:[#allocation2] sm:$0xff]
    %v1527 = vld [vmem:[#allocation2 + $0x8] sm:$0xff]
    %v1528 = vld [vmem:[%s8] sm:$0xff]
    %v1529 = vld [vmem:[%s8 + $0x8] sm:$0xff]
    %v1530 = vld [vmem:[%s8 + $0x10] sm:$0xff]
    %v1531 = vld [vmem:[%s8 + $0x18] sm:$0xff]
    %v1532 = vld [vmem:[%s8 + $0x20] sm:$0xff]
    %v1533 = vld [vmem:[%s8 + $0x28] sm:$0xff]
    %v1534 = vld [vmem:[%s8 + $0x30] sm:$0xff]
    %v1535 = vld [vmem:[%s8 + $0x38] sm:$0xff]
    %v1536 = vld [vmem:[%s8 + $0x40] sm:$0xff]
    %v1537 = vld [vmem:[%s8 + $0x48] sm:$0xff]
    %v1538 = vld [vmem:[%s8 + $0x50] sm:$0xff]
    %v1539 = vld [vmem:[%s8 + $0x58] sm:$0xff]
    %v1540 = vld [vmem:[%s8 + $0x60] sm:$0xff]
    %v1541 = vld [vmem:[%s8 + $0x68] sm:$0xff]
    %v1542 = vld [vmem:[%s8 + $0x70] sm:$0xff]
    %vm1543 = vcmask 982016
    %v1545 = vsel %vm1543, %v1526, 0
    %v1548 = vsel %vm1543, %v1527, 0
    %1550 = vmatprep.subr.mxu0 0.0
    %1551 = vmatpush1.msra.mxu0 0.0
    %1552 = vmatprep.subr.mxu0 0.0
    %1553 = vmatpush1.msra.mxu0 %v1542
    %1554 = vmatprep.subr.mxu0 0.0
    %1555 = vmatpush1.msra.mxu0 %v1541
    %1556 = vmatprep.subr.mxu0 0.0
    %1557 = vmatpush1.msra.mxu0 %v1540
    %1558 = vmatprep.subr.mxu0 0.0
    %1559 = vmatpush1.msra.mxu0 %v1539
    %1560 = vmatprep.subr.mxu0 0.0
    %1561 = vmatpush1.msra.mxu0 %v1538
    %1562 = vmatprep.subr.mxu0 0.0
    %1563 = vmatpush1.msra.mxu0 %v1537
    %1564 = vmatprep.subr.mxu0 0.0
    %1565 = vmatpush1.msra.mxu0 %v1536
    %1566 = vmatprep.subr.mxu0 0.0
    %1567 = vmatpush1.msra.mxu0 %v1535
    %1568 = vmatprep.subr.mxu0 0.0
    %1569 = vmatpush1.msra.mxu0 %v1534
    %1570 = vmatprep.subr.mxu0 0.0
    %1571 = vmatpush1.msra.mxu0 %v1533
    %1572 = vmatprep.subr.mxu0 0.0
    %1573 = vmatpush1.msra.mxu0 %v1532
    %1574 = vmatprep.subr.mxu0 0.0
    %1575 = vmatpush1.msra.mxu0 %v1531
    %1576 = vmatprep.subr.mxu0 0.0
    %1577 = vmatpush1.msra.mxu0 %v1530
    %1578 = vmatprep.subr.mxu0 0.0
    %1579 = vmatpush1.msra.mxu0 %v1529
    %1580 = vmatprep.subr.mxu0 0.0
    %1581 = vmatpush1.msra.mxu0 %v1528
    %1582 = vmatprep.subr.mxu0 0.0
    %1583 = vmatpush2.msra.mxu0 0.0
    %1584 = vmatprep.subr.mxu0 0.0
    %1585 = vmatpush2.msra.mxu0 0.0
    %1586 = vmatprep.subr.mxu0 0.0
    %1587 = vmatpush2.msra.mxu0 0.0
    %1588 = vmatprep.subr.mxu0 0.0
    %1589 = vmatpush2.msra.mxu0 0.0
    %1590 = vmatprep.subr.mxu0 0.0
    %1591 = vmatpush2.msra.mxu0 0.0
    %1592 = vmatprep.subr.mxu0 0.0
    %1593 = vmatpush2.msra.mxu0 0.0
    %1594 = vmatprep.subr.mxu0 0.0
    %1595 = vmatpush2.msra.mxu0 0.0
    %1596 = vmatprep.subr.mxu0 0.0
    %1597 = vmatpush2.msra.mxu0 0.0
    %1598 = vmatprep.subr.mxu0 0.0
    %1599 = vmatpush2.msra.mxu0 0.0
    %1600 = vmatprep.subr.mxu0 0.0
    %1601 = vmatpush2.msra.mxu0 0.0
    %1602 = vmatprep.subr.mxu0 0.0
    %1603 = vmatpush2.msra.mxu0 0.0
    %1604 = vmatprep.subr.mxu0 0.0
    %1605 = vmatpush2.msra.mxu0 0.0
    %1606 = vmatprep.subr.mxu0 0.0
    %1607 = vmatpush2.msra.mxu0 0.0
    %1608 = vmatprep.subr.mxu0 0.0
    %1609 = vmatpush2.msra.mxu0 0.0
    %1610 = vmatprep.subr.mxu0 0.0
    %1611 = vmatpush2.msra.mxu0 0.0
    %1612 = vmatprep.subr.mxu0 0.0
    %1613 = vmatpush2.msra.mxu0 0.0
    %1614 = vmatprep.mubr.f32.mxu0 0.0
    %1615 = vmatmul.mubr.f32.gmra.mxu0 %v1545
    %v1616 = vpop.f32.mrf.mxu0
    %v1617 = vadd.f32 0.0, %v1616
    %v1618 = vpop.f32.mrf.mxu0
    %1619 = vmatprep.mubr.f32.mxu0 0.0
    %1620 = vmatmul.mubr.f32.gmra.mxu0 %v1548
    %v1621 = vpop.f32.mrf.mxu0
    %v1622 = vadd.f32 0.0, %v1621
    %v1623 = vpop.f32.mrf.mxu0
    %1624 = vdwg.mxu0
    %1625 = vmatprep.subr.mxu0 0.0
    %1626 = vmatpush1.msra.mxu0 %v1525
    %1627 = vmatprep.subr.mxu0 0.0
    %1628 = vmatpush1.msra.mxu0 %v1524
    %1629 = vmatprep.subr.mxu0 0.0
    %1630 = vmatpush1.msra.mxu0 %v1523
    %1631 = vmatprep.subr.mxu0 0.0
    %1632 = vmatpush1.msra.mxu0 %v1522
    %1633 = vmatprep.subr.mxu0 0.0
    %1634 = vmatpush1.msra.mxu0 %v1521
    %1635 = vmatprep.subr.mxu0 0.0
    %1636 = vmatpush1.msra.mxu0 %v1520
    %1637 = vmatprep.subr.mxu0 0.0
    %1638 = vmatpush1.msra.mxu0 %v1519
    %1639 = vmatprep.subr.mxu0 0.0
    %1640 = vmatpush1.msra.mxu0 %v1518
    %1641 = vmatprep.subr.mxu0 0.0
    %1642 = vmatpush1.msra.mxu0 %v1517
    %1643 = vmatprep.subr.mxu0 0.0
    %1644 = vmatpush1.msra.mxu0 %v1516
    %1645 = vmatprep.subr.mxu0 0.0
    %1646 = vmatpush1.msra.mxu0 %v1515
    %1647 = vmatprep.subr.mxu0 0.0
    %1648 = vmatpush1.msra.mxu0 %v1514
    %1649 = vmatprep.subr.mxu0 0.0
    %1650 = vmatpush1.msra.mxu0 %v1513
    %1651 = vmatprep.subr.mxu0 0.0
    %1652 = vmatpush1.msra.mxu0 %v1512
    %1653 = vmatprep.subr.mxu0 0.0
    %1654 = vmatpush1.msra.mxu0 %v1511
    %1655 = vmatprep.subr.mxu0 0.0
    %1656 = vmatpush1.msra.mxu0 %v1510
    %1657 = vmatprep.subr.mxu0 0.0
    %1658 = vmatpush2.msra.mxu0 0.0
    %1659 = vmatprep.subr.mxu0 0.0
    %1660 = vmatpush2.msra.mxu0 0.0
    %1661 = vmatprep.subr.mxu0 0.0
    %1662 = vmatpush2.msra.mxu0 0.0
    %1663 = vmatprep.subr.mxu0 0.0
    %1664 = vmatpush2.msra.mxu0 0.0
    %1665 = vmatprep.subr.mxu0 0.0
    %1666 = vmatpush2.msra.mxu0 0.0
    %1667 = vmatprep.subr.mxu0 0.0
    %1668 = vmatpush2.msra.mxu0 0.0
    %1669 = vmatprep.subr.mxu0 0.0
    %1670 = vmatpush2.msra.mxu0 0.0
    %1671 = vmatprep.subr.mxu0 0.0
    %1672 = vmatpush2.msra.mxu0 0.0
    %1673 = vmatprep.subr.mxu0 0.0
    %1674 = vmatpush2.msra.mxu0 0.0
    %1675 = vmatprep.subr.mxu0 0.0
    %1676 = vmatpush2.msra.mxu0 0.0
    %1677 = vmatprep.subr.mxu0 0.0
    %1678 = vmatpush2.msra.mxu0 0.0
    %1679 = vmatprep.subr.mxu0 0.0
    %1680 = vmatpush2.msra.mxu0 0.0
    %1681 = vmatprep.subr.mxu0 0.0
    %1682 = vmatpush2.msra.mxu0 0.0
    %1683 = vmatprep.subr.mxu0 0.0
    %1684 = vmatpush2.msra.mxu0 0.0
    %1685 = vmatprep.subr.mxu0 0.0
    %1686 = vmatpush2.msra.mxu0 0.0
    %1687 = vmatprep.subr.mxu0 0.0
    %1688 = vmatpush2.msra.mxu0 0.0
    %1689 = vmatprep.mubr.f32.mxu0 0.0
    %1690 = vmatmul.mubr.f32.gmra.mxu0 %v1508
    %v1691 = vpop.f32.mrf.mxu0
    %v1692 = vadd.f32 %v1617, %v1691
    %v1693 = vpop.f32.mrf.mxu0
    %1694 = vmatprep.mubr.f32.mxu0 0.0
    %1695 = vmatmul.mubr.f32.gmra.mxu0 %v1509
    %v1696 = vpop.f32.mrf.mxu0
    %v1697 = vadd.f32 %v1622, %v1696
    %v1698 = vpop.f32.mrf.mxu0
    %1699 = vdwg.mxu0
    %v1700 = vld [vmem:[%s9] sm:$0xff]
    %v1701 = vld [vmem:[%s9 + $0x8] sm:$0xff]
    %v1702 = vld [vmem:[%s9 + $0x10] sm:$0xff]
    %v1703 = vld [vmem:[%s9 + $0x18] sm:$0xff]
    %v1704 = vld [vmem:[%s9 + $0x20] sm:$0xff]
    %v1705 = vld [vmem:[%s9 + $0x28] sm:$0xff]
    %v1706 = vld [vmem:[%s9 + $0x30] sm:$0xff]
    %v1707 = vld [vmem:[%s9 + $0x38] sm:$0xff]
    %v1708 = vld [vmem:[%s9 + $0x40] sm:$0xff]
    %v1709 = vld [vmem:[%s9 + $0x48] sm:$0xff]
    %v1710 = vld [vmem:[%s9 + $0x50] sm:$0xff]
    %v1711 = vld [vmem:[%s9 + $0x58] sm:$0xff]
    %v1712 = vld [vmem:[%s9 + $0x60] sm:$0xff]
    %v1713 = vld [vmem:[%s9 + $0x68] sm:$0xff]
    %v1714 = vld [vmem:[%s9 + $0x70] sm:$0xff]
    %v1715 = vld [vmem:[%s9 + $0x78] sm:$0xff]
    %1716 = vmatprep.subr.mxu0 0.0
    %1717 = vmatpush1.msra.mxu0 %v1715
    %1718 = vmatprep.subr.mxu0 0.0
    %1719 = vmatpush1.msra.mxu0 %v1714
    %1720 = vmatprep.subr.mxu0 0.0
    %1721 = vmatpush1.msra.mxu0 %v1713
    %1722 = vmatprep.subr.mxu0 0.0
    %1723 = vmatpush1.msra.mxu0 %v1712
    %1724 = vmatprep.subr.mxu0 0.0
    %1725 = vmatpush1.msra.mxu0 %v1711
    %1726 = vmatprep.subr.mxu0 0.0
    %1727 = vmatpush1.msra.mxu0 %v1710
    %1728 = vmatprep.subr.mxu0 0.0
    %1729 = vmatpush1.msra.mxu0 %v1709
    %1730 = vmatprep.subr.mxu0 0.0
    %1731 = vmatpush1.msra.mxu0 %v1708
    %1732 = vmatprep.subr.mxu0 0.0
    %1733 = vmatpush1.msra.mxu0 %v1707
    %1734 = vmatprep.subr.mxu0 0.0
    %1735 = vmatpush1.msra.mxu0 %v1706
    %1736 = vmatprep.subr.mxu0 0.0
    %1737 = vmatpush1.msra.mxu0 %v1705
    %1738 = vmatprep.subr.mxu0 0.0
    %1739 = vmatpush1.msra.mxu0 %v1704
    %1740 = vmatprep.subr.mxu0 0.0
    %1741 = vmatpush1.msra.mxu0 %v1703
    %1742 = vmatprep.subr.mxu0 0.0
    %1743 = vmatpush1.msra.mxu0 %v1702
    %1744 = vmatprep.subr.mxu0 0.0
    %1745 = vmatpush1.msra.mxu0 %v1701
    %1746 = vmatprep.subr.mxu0 0.0
    %1747 = vmatpush1.msra.mxu0 %v1700
    %1748 = vmatprep.subr.mxu0 0.0
    %1749 = vmatpush2.msra.mxu0 0.0
    %1750 = vmatprep.subr.mxu0 0.0
    %1751 = vmatpush2.msra.mxu0 0.0
    %1752 = vmatprep.subr.mxu0 0.0
    %1753 = vmatpush2.msra.mxu0 0.0
    %1754 = vmatprep.subr.mxu0 0.0
    %1755 = vmatpush2.msra.mxu0 0.0
    %1756 = vmatprep.subr.mxu0 0.0
    %1757 = vmatpush2.msra.mxu0 0.0
    %1758 = vmatprep.subr.mxu0 0.0
    %1759 = vmatpush2.msra.mxu0 0.0
    %1760 = vmatprep.subr.mxu0 0.0
    %1761 = vmatpush2.msra.mxu0 0.0
    %1762 = vmatprep.subr.mxu0 0.0
    %1763 = vmatpush2.msra.mxu0 0.0
    %1764 = vmatprep.subr.mxu0 0.0
    %1765 = vmatpush2.msra.mxu0 0.0
    %1766 = vmatprep.subr.mxu0 0.0
    %1767 = vmatpush2.msra.mxu0 0.0
    %1768 = vmatprep.subr.mxu0 0.0
    %1769 = vmatpush2.msra.mxu0 0.0
    %1770 = vmatprep.subr.mxu0 0.0
    %1771 = vmatpush2.msra.mxu0 0.0
    %1772 = vmatprep.subr.mxu0 0.0
    %1773 = vmatpush2.msra.mxu0 0.0
    %1774 = vmatprep.subr.mxu0 0.0
    %1775 = vmatpush2.msra.mxu0 0.0
    %1776 = vmatprep.subr.mxu0 0.0
    %1777 = vmatpush2.msra.mxu0 0.0
    %1778 = vmatprep.subr.mxu0 0.0
    %1779 = vmatpush2.msra.mxu0 0.0
    %1780 = vmatprep.mubr.f32.mxu0 0.0
    %1781 = vmatmul.mubr.f32.gmra.mxu0 %v785
    %v1782 = vpop.f32.mrf.mxu0
    %v1783 = vadd.f32 0.0, %v1782
    %v1784 = vpop.f32.mrf.mxu0
    %1785 = vmatprep.mubr.f32.mxu0 0.0
    %1786 = vmatmul.mubr.f32.gmra.mxu0 %v786
    %v1787 = vpop.f32.mrf.mxu0
    %v1788 = vadd.f32 0.0, %v1787
    %v1789 = vpop.f32.mrf.mxu0
    %1790 = vdwg.mxu0
    %v1791 = vadd.f32 %v1692, %v1783
    %v1792 = vadd.f32 %v1697, %v1788
    %v1793 = vld [vmem:[%s10] sm:$0x1]
    %v1795 = vlaneseq
    %v1796 = vshrl.u32 %v1795, 7
    %v1797 = vsub.s32 0, %v1796
    %v1798 = vrot.slane %v1793, %v1797
    %v1800 = vadd.f32 %v1791, %v1798
    %v1801 = vadd.f32 %v1792, %v1798
    %v1802 = vxor.u32 %v1800, 2147483648
    %v1803 = vxor.u32 %v1801, 2147483648
    %v1804 = vmul.f32 %v1802, 1.442695
    %v1805 = vpow.pop %v1804
    %v1806 = vmul.f32 %v1803, 1.442695
    %v1807 = vpow.pop %v1806
    %v1808 = vadd.f32 %v1805, 1.0
    %v1809 = vadd.f32 %v1807, 1.0
    %v1810 = vrcp.pop %v1808
    %v1811 = vmul.f32 1.0, %v1810
    %v1812 = vrcp.pop %v1809
    %v1813 = vmul.f32 1.0, %v1812
    %v1814 = vtanh.pop %v1800
    %v1815 = vtanh.pop %v1801
    %1818 = vrot.lane.b32.xlu0 %v1814, 96
    %v1819 = vpop.permute.xlu0 %1818
    %1820 = vrot.lane.b32.xlu0 %v1815, 96
    %v1821 = vpop.permute.xlu0 %1820
    %v1824 = vmul.f32 %v1811, %v1819
    %v1825 = vmul.f32 %v1813, %v1821
    %v1826 = vtanh.pop %v1824
    %v1827 = vtanh.pop %v1825
    %1830 = vrot.lane.b32.xlu0 %v1826, 64
    %v1831 = vpop.permute.xlu0 %1830
    %1832 = vrot.lane.b32.xlu0 %v1827, 64
    %v1833 = vpop.permute.xlu0 %1832
    %v1836 = vmul.f32 %v1811, %v1831
    %v1837 = vmul.f32 %v1813, %v1833
    %v1838 = vld [vmem:[%s11] sm:$0xff]
    %v1839 = vld [vmem:[%s11 + $0x8] sm:$0xff]
    %v1840 = vld [vmem:[%s11 + $0x10] sm:$0xff]
    %v1841 = vld [vmem:[%s11 + $0x18] sm:$0xff]
    %v1842 = vld [vmem:[%s12] sm:$0x1]
    %v1844 = vlaneseq
    %v1845 = vshrl.u32 %v1844, 7
    %v1846 = vsub.s32 0, %v1845
    %v1847 = vrot.slane %v1842, %v1846
    %1851 = vrot.lane.b32.xlu0 %v1836, 64
    %v1852 = vpop.permute.xlu0 %1851
    %1853 = vrot.lane.b32.xlu0 %v1837, 64
    %v1854 = vpop.permute.xlu0 %1853
    %v1855 = vsel %vm87, %v1852, 0
    %v1857 = vsel %vm87, %v1854, 0
    %1859 = vmatprep.subr.mxu0 0.0
    %1860 = vmatpush1.msra.mxu0 0.0
    %1861 = vmatprep.subr.mxu0 0.0
    %1862 = vmatpush1.msra.mxu0 0.0
    %1863 = vmatprep.subr.mxu0 0.0
    %1864 = vmatpush1.msra.mxu0 0.0
    %1865 = vmatprep.subr.mxu0 0.0
    %1866 = vmatpush1.msra.mxu0 0.0
    %1867 = vmatprep.subr.mxu0 0.0
    %1868 = vmatpush1.msra.mxu0 0.0
    %1869 = vmatprep.subr.mxu0 0.0
    %1870 = vmatpush1.msra.mxu0 0.0
    %1871 = vmatprep.subr.mxu0 0.0
    %1872 = vmatpush1.msra.mxu0 0.0
    %1873 = vmatprep.subr.mxu0 0.0
    %1874 = vmatpush1.msra.mxu0 0.0
    %1875 = vmatprep.subr.mxu0 0.0
    %1876 = vmatpush1.msra.mxu0 0.0
    %1877 = vmatprep.subr.mxu0 0.0
    %1878 = vmatpush1.msra.mxu0 0.0
    %1879 = vmatprep.subr.mxu0 0.0
    %1880 = vmatpush1.msra.mxu0 0.0
    %1881 = vmatprep.subr.mxu0 0.0
    %1882 = vmatpush1.msra.mxu0 0.0
    %1883 = vmatprep.subr.mxu0 0.0
    %1884 = vmatpush1.msra.mxu0 %v1841
    %1885 = vmatprep.subr.mxu0 0.0
    %1886 = vmatpush1.msra.mxu0 %v1840
    %1887 = vmatprep.subr.mxu0 0.0
    %1888 = vmatpush1.msra.mxu0 %v1839
    %1889 = vmatprep.subr.mxu0 0.0
    %1890 = vmatpush1.msra.mxu0 %v1838
    %1891 = vmatprep.subr.mxu0 0.0
    %1892 = vmatpush2.msra.mxu0 0.0
    %1893 = vmatprep.subr.mxu0 0.0
    %1894 = vmatpush2.msra.mxu0 0.0
    %1895 = vmatprep.subr.mxu0 0.0
    %1896 = vmatpush2.msra.mxu0 0.0
    %1897 = vmatprep.subr.mxu0 0.0
    %1898 = vmatpush2.msra.mxu0 0.0
    %1899 = vmatprep.subr.mxu0 0.0
    %1900 = vmatpush2.msra.mxu0 0.0
    %1901 = vmatprep.subr.mxu0 0.0
    %1902 = vmatpush2.msra.mxu0 0.0
    %1903 = vmatprep.subr.mxu0 0.0
    %1904 = vmatpush2.msra.mxu0 0.0
    %1905 = vmatprep.subr.mxu0 0.0
    %1906 = vmatpush2.msra.mxu0 0.0
    %1907 = vmatprep.subr.mxu0 0.0
    %1908 = vmatpush2.msra.mxu0 0.0
    %1909 = vmatprep.subr.mxu0 0.0
    %1910 = vmatpush2.msra.mxu0 0.0
    %1911 = vmatprep.subr.mxu0 0.0
    %1912 = vmatpush2.msra.mxu0 0.0
    %1913 = vmatprep.subr.mxu0 0.0
    %1914 = vmatpush2.msra.mxu0 0.0
    %1915 = vmatprep.subr.mxu0 0.0
    %1916 = vmatpush2.msra.mxu0 0.0
    %1917 = vmatprep.subr.mxu0 0.0
    %1918 = vmatpush2.msra.mxu0 0.0
    %1919 = vmatprep.subr.mxu0 0.0
    %1920 = vmatpush2.msra.mxu0 0.0
    %1921 = vmatprep.subr.mxu0 0.0
    %1922 = vmatpush2.msra.mxu0 0.0
    %1923 = vmatprep.mubr.f32.mxu0 0.0
    %1924 = vmatmul.mubr.f32.gmra.mxu0 %v1855
    %v1925 = vpop.f32.mrf.mxu0
    %v1926 = vadd.f32 %v1847, %v1925
    %v1927 = vpop.f32.mrf.mxu0
    %1928 = vmatprep.mubr.f32.mxu0 0.0
    %1929 = vmatmul.mubr.f32.gmra.mxu0 %v1857
    %v1930 = vpop.f32.mrf.mxu0
    %v1931 = vadd.f32 %v1847, %v1930
    %v1932 = vpop.f32.mrf.mxu0
    %1933 = vdwg.mxu0
    %v1934 = vxor.u32 %v1926, 2147483648
    %v1935 = vxor.u32 %v1931, 2147483648
    %v1936 = vmul.f32 %v1934, 1.442695
    %v1937 = vpow.pop %v1936
    %v1938 = vmul.f32 %v1935, 1.442695
    %v1939 = vpow.pop %v1938
    %v1940 = vadd.f32 %v1937, 1.0
    %v1941 = vadd.f32 %v1939, 1.0
    %v1942 = vrcp.pop %v1940
    %v1943 = vmul.f32 1.0, %v1942
    %v1944 = vrcp.pop %v1941
    %v1945 = vmul.f32 1.0, %v1944
    %v1946 = vtanh.pop %v1926
    %v1947 = vtanh.pop %v1931
    %1950 = vrot.lane.b32.xlu0 %v1946, 96
    %v1951 = vpop.permute.xlu0 %1950
    %1952 = vrot.lane.b32.xlu0 %v1947, 96
    %v1953 = vpop.permute.xlu0 %1952
    %v1956 = vmul.f32 %v1943, %v1951
    %v1957 = vmul.f32 %v1945, %v1953
    %v1958 = vtanh.pop %v1956
    %v1959 = vtanh.pop %v1957
    %1962 = vrot.lane.b32.xlu0 %v1958, 64
    %v1963 = vpop.permute.xlu0 %1962
    %1964 = vrot.lane.b32.xlu0 %v1959, 64
    %v1965 = vpop.permute.xlu0 %1964
    %v1968 = vmul.f32 %v1943, %v1963
    %v1969 = vmul.f32 %v1945, %v1965
    %v1970 = vld [vmem:[%s13] sm:$0x1]
    %v1972 = vlaneseq
    %v1973 = vshrl.u32 %v1972, 7
    %v1974 = vsub.s32 0, %v1973
    %v1975 = vrot.slane %v1970, %v1974
    %1976 = vrot.lane.b32.xlu0 %v1975, 64
    %v1977 = vpop.permute.xlu0 %1976
    %v1979 = vmul.f32 %v1968, %v1977
    %v1980 = vmul.f32 %v1969, %v1977
    %s1981 = smul.u32 0, 16
    %v1982 = vlaneseq
    %v1983 = vshrl.u32 %v1982, 7
    %v1984 = vadd.s32 %v1983, 8
    %v1985 = vstv %s1981
    %v1986 = vadd.s32 %v1985, %v1983
    %v1987 = vadd.s32 %v1985, %v1984
    %vm1988 = vcmp.lt.s32.totalorder %v1986, 16
    %vm1989 = vcmp.lt.s32.totalorder %v1987, 16
    %v1990 = vsel %vm1988, 1, 0
    %v1991 = vsel %vm1989, 1, 0
    %vm1992 = vcmp.eq.s32.totalorder %v1990, 1
    %vm1993 = vcmp.eq.s32.totalorder %v1991, 1
    %v1994 = vsel %vm1992, %v1979, 0.0
    %v1995 = vsel %vm1993, %v1980, 0.0
    %1998 = vrot.lane.b32.xlu0 %v1994, 64
    %v1999 = vpop.permute.xlu0 %1998
    %2000 = vrot.lane.b32.xlu0 %v1995, 64
    %v2001 = vpop.permute.xlu0 %2000
    %v2004 = vsel %vm87, %v1999, 0.0
    %v2005 = vsel %vm87, %v2001, 0.0
    %v2006 = vadd.f32 %v2004, %v2005
    %2007 = vadd.xlane.f32.xlu0 %v2006
    %v2008 = vpop.xlane.xlu0 %2007
    %v2009 = vrot.slane %v2008, 4
    %v2010 = vadd.f32 %v2008, %v2009
    %v2011 = vrot.slane %v2010, 2
    %v2012 = vadd.f32 %v2010, %v2011
    %v2013 = vrot.slane %v2012, 1
    %v2014 = vadd.f32 %v2012, %v2013
    %s2015 = vtos %v2014
    %v2016 = vstv %s2015
    %vm2017 = vcmask 0
    %2018 = vst.msk [vmem:[#allocation5] sm:$0x1] %vm2017, %v2016
    // Predicated region
    $region62: #{tpu_custom_call.1} parent=1 // pred_check
      _
    $region63: #{tpu_custom_call.1} parent=1 // pred_check_branch
      %2020 = sbr.rel (0) target = $region65
    $region64: #{tpu_custom_call.1} parent=1 // pred_region
      %s2022 = ssub.s32 16, 16
      %2023 = vsyncadd [#allocation4], %s2022
      %s2025 = sshll.u32 [#allocation5], 4
      %s2026 = int_to_ptr.vmem [resolvable:$true] %s2025
      %2028 = dma.vmem_to_hbm [thread:$0]  %s2026, 16, %s14, [#allocation4]
    $region65: #{tpu_custom_call.1} parent=1 // pred_fallthru
      _
    // Predicated region
    $region66: #{tpu_custom_call.1} parent=1 // pred_check
      _
    $region67: #{tpu_custom_call.1} parent=1 // pred_check_branch
      %2030 = sbr.rel (0) target = $region69
    $region68: #{tpu_custom_call.1} parent=1 // pred_region
      %2031 = dma.done [#allocation4], 16
    $region69: #{tpu_custom_call.1} parent=1 // pred_fallthru
      _
    %2032 = vsyncpa [#allocation3], 1
    %2033 = vsyncpa [#allocation4], 1

</llo_original>
